<compile_context>
chip_gen: v6e
topology: v6e:2x2x1
jax: 0.10.0
libtpu: 0.0.40
codegen_flags: <defaults>
</compile_context>

<pallas_src>
import functools

import jax
import jax.numpy as jnp
from jax import lax
from jax.experimental import pallas as pl
from jax.experimental.pallas import tpu as pltpu

EPS = 1e-4  # BatchNorm eps from the module (nn.BatchNorm2d(..., eps=0.0001))


def _mish(x):
    # mish(x) = x * tanh(softplus(x)).
    # For x <= 20 (PyTorch softplus threshold): with t = 1 + exp(x),
    #   tanh(log(t)) = (t^2 - 1) / (t^2 + 1)
    # -> 1 EUP exp + 1 EUP approx-reciprocal instead of exp + log1p + tanh.
    # For x > 20: softplus(x) = x and tanh(x) == 1 to f32 precision, so mish = x.
    t = 1.0 + jnp.exp(jnp.minimum(x, 20.0))
    t2 = t * t
    y = x * (t2 - 1.0) * pl.reciprocal(t2 + 1.0, approx=True)
    return jnp.where(x > 20.0, x, y)


def dark_block_kernel(x_ref, w1_ref, w2_ref, b1_ref, b2_ref, o_ref,
                      pad_ref, col_ref, *, H, W, Ci, Cp, dil):
    """One batch element per grid step.

    x_ref   : (1, H, W, Cp)            input tile (NHWC), compute dtype
    w1_ref  : (Cp, Ci)                 conv1 weight^T, BN1 scale folded in
    w2_ref  : (9*Ci, Cp)               conv2 weight, im2col tap-major, BN2 scale folded in
    b1_ref  : (1, Ci)  f32             folded BN1 shift
    b2_ref  : (1, Cp)  f32             folded BN2 shift
    o_ref   : (1, H, W, Cp) f32        output tile
    pad_ref : (H+2d, W+2d, Ci)         zero-padded activation scratch (compute dtype)
    col_ref : (H*W, 9*Ci)              im2col scratch (compute dtype)
    """
    x = x_ref[0].reshape(H * W, Cp)

    # ---- conv1 (1x1) == channel matmul; BN1 scale already folded into w1 ----
    y1 = jnp.dot(x, w1_ref[...], preferred_element_type=jnp.float32)  # [H*W, Ci]
    y1 = _mish(y1 + b1_ref[...])

    # ---- zero only the halo border (interior fully overwritten below) -------
    Wp = W + 2 * dil
    pad_ref[0:dil, :, :] = jnp.zeros((dil, Wp, Ci), pad_ref.dtype)
    pad_ref[dil + H:dil + H + dil, :, :] = jnp.zeros((dil, Wp, Ci), pad_ref.dtype)
    pad_ref[dil:dil + H, 0:dil, :] = jnp.zeros((H, dil, Ci), pad_ref.dtype)
    pad_ref[dil:dil + H, dil + W:dil + W + dil, :] = jnp.zeros((H, dil, Ci), pad_ref.dtype)
    pad_ref[dil:dil + H, dil:dil + W, :] = y1.reshape(H, W, Ci).astype(pad_ref.dtype)

    # ---- im2col: gather the 9 dilated taps into one [H*W, 9*Ci] operand -----
    for kh in range(3):
        for kw in range(3):
            j = (kh * 3 + kw) * Ci
            patch = pad_ref[kh * dil:kh * dil + H, kw * dil:kw * dil + W, :]
            col_ref[:, j:j + Ci] = patch.reshape(H * W, Ci)

    # ---- conv2 as ONE MXU matmul with K = 9*Ci; BN2 scale folded into w2 ----
    acc = jnp.dot(col_ref[...], w2_ref[...],
                  preferred_element_type=jnp.float32)                # [H*W, Cp]

    # ---- BN2 shift + Mish + residual (all f32) ------------------------------
    y2 = _mish(acc + b2_ref[...])
    o_ref[0] = (y2 + x.astype(jnp.float32)).reshape(H, W, Cp)


def dark_block_pallas(x_nchw, params, dilation=1, compute_dtype=jnp.float32):
    """x_nchw: (N, planes, H, W) float32. Returns (N, planes, H, W) float32.

    compute_dtype: dtype of the matmul operands (activations + weights).
    Use jnp.bfloat16 on v6e/v7x for the bf16 MXU path; accumulation, BN shifts,
    Mish and the residual add stay in float32.
    """
    (w1, w2, g1, b1, m1, v1, g2, b2, m2, v2) = params
    x = jnp.transpose(x_nchw, (0, 2, 3, 1)).astype(compute_dtype)  # -> NHWC
    N, H, W, Cp = x.shape
    Ci = w1.shape[0]  # conv1 weight is (inplanes, planes, 1, 1) in OIHW
    d = dilation

    # Fold inference-mode BN into the conv weights (scale) + a shift vector.
    inv1 = g1 / jnp.sqrt(v1 + EPS)                      # [Ci]
    inv2 = g2 / jnp.sqrt(v2 + EPS)                      # [Cp]

    # conv1^T with BN1 scale folded per output column: [Cp, Ci]
    w1t = (jnp.transpose(w1[:, :, 0, 0], (1, 0)) * inv1[None, :]).astype(compute_dtype)
    # conv2 rearranged tap-major for im2col, BN2 scale folded per output column:
    # OIHW (Cp, Ci, 3, 3) -> (kh, kw, Ci, Cp) -> [9*Ci, Cp]
    w2t = (jnp.transpose(w2, (2, 3, 1, 0)).reshape(9 * Ci, Cp)
           * inv2[None, :]).astype(compute_dtype)

    sh1 = (b1 - m1 * inv1).reshape(1, Ci).astype(jnp.float32)
    sh2 = (b2 - m2 * inv2).reshape(1, Cp).astype(jnp.float32)

    kernel = functools.partial(dark_block_kernel, H=H, W=W, Ci=Ci, Cp=Cp, dil=d)

    out_nhwc = pl.pallas_call(
        kernel,
        out_shape=jax.ShapeDtypeStruct((N, H, W, Cp), jnp.float32),
        grid_spec=pltpu.PrefetchScalarGridSpec(
            num_scalar_prefetch=0,
            grid=(N,),
            in_specs=[
                pl.BlockSpec((1, H, W, Cp), lambda n: (n, 0, 0, 0)),
                pl.BlockSpec((Cp, Ci), lambda n: (0, 0)),
                pl.BlockSpec((9 * Ci, Cp), lambda n: (0, 0)),
                pl.BlockSpec((1, Ci), lambda n: (0, 0)),
                pl.BlockSpec((1, Cp), lambda n: (0, 0)),
            ],
            out_specs=pl.BlockSpec((1, H, W, Cp), lambda n: (n, 0, 0, 0)),
            scratch_shapes=[
                pltpu.VMEM((H + 2 * d, W + 2 * d, Ci), compute_dtype),
                pltpu.VMEM((H * W, 9 * Ci), compute_dtype),
            ],
        ),
        # Batch elements are independent -> parallel axis (sharded across the
        # two TensorCores on v7x; no effect on single-TC v5e/v6e).
        compiler_params=pltpu.CompilerParams(dimension_semantics=("parallel",)),
    )(x, w1t, w2t, sh1, sh2)

    return jnp.transpose(out_nhwc, (0, 3, 1, 2))  # back to NCHW


def dark_block_ref(x_nchw, params, dilation=1):
    """Pure-JAX reference (inference-mode BN), for correctness checking."""
    (w1, w2, g1, b1, m1, v1, g2, b2, m2, v2) = params
    x = jnp.transpose(x_nchw, (0, 2, 3, 1))
    dn = ("NHWC", "HWIO", "NHWC")

    def mish(v):
        return v * jnp.tanh(jax.nn.softplus(v))

    y = lax.conv_general_dilated(x, jnp.transpose(w1, (2, 3, 1, 0)), (1, 1),
                                 "VALID", dimension_numbers=dn)
    y = (y - m1) / jnp.sqrt(v1 + EPS) * g1 + b1
    y = mish(y)
    y = lax.conv_general_dilated(y, jnp.transpose(w2, (2, 3, 1, 0)), (1, 1),
                                 [(dilation, dilation), (dilation, dilation)],
                                 rhs_dilation=(dilation, dilation),
                                 dimension_numbers=dn)
    y = (y - m2) / jnp.sqrt(v2 + EPS) * g2 + b2
    y = mish(y)
    y = y + x
    return jnp.transpose(y, (0, 3, 1, 2))


def init_params(key, inplanes, planes):
    ks = jax.random.split(key, 10)
    s1 = 1.0 / float(planes) ** 0.5
    s2 = 1.0 / (3.0 * float(inplanes) ** 0.5)
    w1 = jax.random.normal(ks[0], (inplanes, planes, 1, 1), jnp.float32) * s1
    w2 = jax.random.normal(ks[1], (planes, inplanes, 3, 3), jnp.float32) * s2
    g1 = 1.0 + 0.1 * jax.random.normal(ks[2], (inplanes,), jnp.float32)
    b1 = 0.1 * jax.random.normal(ks[3], (inplanes,), jnp.float32)
    m1 = 0.1 * jax.random.normal(ks[4], (inplanes,), jnp.float32)
    v1 = jax.random.uniform(ks[5], (inplanes,), jnp.float32, 0.5, 1.5)
    g2 = 1.0 + 0.1 * jax.random.normal(ks[6], (planes,), jnp.float32)
    b2 = 0.1 * jax.random.normal(ks[7], (planes,), jnp.float32)
    m2 = 0.1 * jax.random.normal(ks[8], (planes,), jnp.float32)
    v2 = jax.random.uniform(ks[9], (planes,), jnp.float32, 0.5, 1.5)
    return (w1, w2, g1, b1, m1, v1, g2, b2, m2, v2)


if __name__ == "__main__":
    key = jax.random.PRNGKey(0)

    # (N, inplanes, planes, H, W, dilation)
    configs = [
        (2, 128, 64, 16, 16, 1),   # lane-dense channel counts (realistic block)
        (2, 8, 4, 16, 16, 2),      # tiny channels + dilation=2
    ]

    first_case = None
    for (N, inplanes, planes, Hs, Ws, dil) in configs:
        kx, kp, key = jax.random.split(key, 3)
        x = jax.random.normal(kx, (N, planes, Hs, Ws), jnp.float32)
        params = init_params(kp, inplanes, planes)
        if first_case is None:
            first_case = (x, params, dil)

        ref = jax.block_until_ready(dark_block_ref(x, params, dil))
        out = jax.block_until_ready(dark_block_pallas(x, params, dil))

        assert out.shape == (N, planes, Hs, Ws)
        # Tolerance accounts for the approx-reciprocal EUP path inside Mish.
        assert jnp.allclose(out, ref, atol=2e-2, rtol=2e-2), (
            float(jnp.max(jnp.abs(out - ref))))

    # bf16 matmul-operand path (f32 accumulation / BN / Mish), looser tolerance.
    x, params, dil = first_case
    ref = jax.block_until_ready(dark_block_ref(x, params, dil))
    out_bf16 = jax.block_until_ready(
        dark_block_pallas(x, params, dil, compute_dtype=jnp.bfloat16))
    assert jnp.allclose(out_bf16, ref, atol=1e-1, rtol=1e-1), (
        float(jnp.max(jnp.abs(out_bf16 - ref))))

    print("KERNEL_OK")
</pallas_src>

<mosaic_0001>
module attributes {stable_mosaic.version = 11 : i64} {
  func.func @dark_block_kernel(%arg0: i32, %arg1: memref<1x16x16x64xf32, #tpu.memory_space<vmem>>, %arg2: memref<64x128xf32, #tpu.memory_space<vmem>>, %arg3: memref<1152x64xf32, #tpu.memory_space<vmem>>, %arg4: memref<1x128xf32, #tpu.memory_space<vmem>>, %arg5: memref<1x64xf32, #tpu.memory_space<vmem>>, %arg6: memref<1x16x16x64xf32, #tpu.memory_space<vmem>>, %arg7: memref<18x18x128xf32, #tpu.memory_space<vmem>>, %arg8: memref<256x1152xf32, #tpu.memory_space<vmem>>) attributes {dimension_semantics = [#tpu.dimension_semantics<parallel>], iteration_bounds = array<i64: 2>, scalar_prefetch = 0 : i64, scratch_operands = 2 : i64, tpu.core_type = #tpu.core_type<tc>, window_params = [{transform_indices = @transform_0, window_bounds = array<i64: 1, 16, 16, 64>}, {pipeline_mode = #tpu.pipeline_mode<synchronous>, transform_indices = @transform_1, window_bounds = array<i64: 64, 128>}, {pipeline_mode = #tpu.pipeline_mode<synchronous>, transform_indices = @transform_2, window_bounds = array<i64: 1152, 64>}, {pipeline_mode = #tpu.pipeline_mode<synchronous>, transform_indices = @transform_3, window_bounds = array<i64: 1, 128>}, {pipeline_mode = #tpu.pipeline_mode<synchronous>, transform_indices = @transform_4, window_bounds = array<i64: 1, 64>}, {transform_indices = @transform_5, window_bounds = array<i64: 1, 16, 16, 64>}]} {
    %c0 = arith.constant 0 : index
    %c0_0 = arith.constant 0 : index
    %c0_1 = arith.constant 0 : index
    %c0_2 = arith.constant 0 : index
    %0 = vector.load %arg1[%c0, %c0_0, %c0_1, %c0_2] : memref<1x16x16x64xf32, #tpu.memory_space<vmem>>, vector<1x16x16x64xf32>
    %1 = vector.shape_cast %0 : vector<1x16x16x64xf32> to vector<16x16x64xf32>
    %2 = vector.shape_cast %1 : vector<16x16x64xf32> to vector<256x64xf32>
    %c0_3 = arith.constant 0 : index
    %c0_4 = arith.constant 0 : index
    %3 = vector.load %arg2[%c0_3, %c0_4] : memref<64x128xf32, #tpu.memory_space<vmem>>, vector<64x128xf32>
    %cst = arith.constant dense<0.000000e+00> : vector<256x128xf32>
    %4 = tpu.matmul %2, %3, %cst {dimension_numbers = #tpu.dot_dimension_numbers<[1], [0], [0], [1], [0, 0, 1, 1], [], []>} : vector<256x64xf32>, vector<64x128xf32>, vector<256x128xf32> -> vector<256x128xf32>
    %c0_5 = arith.constant 0 : index
    %c0_6 = arith.constant 0 : index
    %5 = vector.load %arg4[%c0_5, %c0_6] : memref<1x128xf32, #tpu.memory_space<vmem>>, vector<1x128xf32>
    %6 = vector.broadcast %5 : vector<1x128xf32> to vector<256x128xf32>
    %7 = arith.addf %4, %6 : vector<256x128xf32>
    %cst_7 = arith.constant 2.000000e+01 : f32
    %8 = vector.broadcast %cst_7 : f32 to vector<256x128xf32>
    %9 = arith.minimumf %7, %8 : vector<256x128xf32>
    %10 = math.exp %9 : vector<256x128xf32>
    %cst_8 = arith.constant 1.000000e+00 : f32
    %11 = vector.broadcast %cst_8 : f32 to vector<256x128xf32>
    %12 = arith.addf %11, %10 : vector<256x128xf32>
    %13 = arith.mulf %12, %12 : vector<256x128xf32>
    %cst_9 = arith.constant 1.000000e+00 : f32
    %14 = vector.broadcast %cst_9 : f32 to vector<256x128xf32>
    %15 = arith.subf %13, %14 : vector<256x128xf32>
    %16 = arith.mulf %7, %15 : vector<256x128xf32>
    %cst_10 = arith.constant 1.000000e+00 : f32
    %17 = vector.broadcast %cst_10 : f32 to vector<256x128xf32>
    %18 = arith.addf %13, %17 : vector<256x128xf32>
    %19 = tpu.reciprocal %18 {approx = true} : vector<256x128xf32> -> vector<256x128xf32>
    %20 = arith.mulf %16, %19 : vector<256x128xf32>
    %cst_11 = arith.constant 2.000000e+01 : f32
    %21 = vector.broadcast %cst_11 : f32 to vector<256x128xf32>
    %22 = arith.cmpf ogt, %7, %21 : vector<256x128xf32>
    %23 = arith.select %22, %7, %20 : vector<256x128xi1>, vector<256x128xf32>
    %cst_12 = arith.constant 0.000000e+00 : f32
    %24 = vector.broadcast %cst_12 : f32 to vector<1x18x128xf32>
    %c0_13 = arith.constant 0 : index
    %c0_14 = arith.constant 0 : index
    %c0_15 = arith.constant 0 : index
    %25 = vector.load %arg7[%c0_13, %c0_14, %c0_15] : memref<18x18x128xf32, #tpu.memory_space<vmem>>, vector<1x18x128xf32>
    tpu.vector_store %arg7[%c0_13, %c0_14, %c0_15], %24 {strides = array<i32>} : memref<18x18x128xf32, #tpu.memory_space<vmem>>, vector<1x18x128xf32>,
    %cst_16 = arith.constant 0.000000e+00 : f32
    %26 = vector.broadcast %cst_16 : f32 to vector<1x18x128xf32>
    %c17 = arith.constant 17 : index
    %c0_17 = arith.constant 0 : index
    %c0_18 = arith.constant 0 : index
    %27 = vector.load %arg7[%c17, %c0_17, %c0_18] : memref<18x18x128xf32, #tpu.memory_space<vmem>>, vector<1x18x128xf32>
    tpu.vector_store %arg7[%c17, %c0_17, %c0_18], %26 {strides = array<i32>} : memref<18x18x128xf32, #tpu.memory_space<vmem>>, vector<1x18x128xf32>,
    %cst_19 = arith.constant 0.000000e+00 : f32
    %28 = vector.broadcast %cst_19 : f32 to vector<16x1x128xf32>
    %c1 = arith.constant 1 : index
    %c0_20 = arith.constant 0 : index
    %c0_21 = arith.constant 0 : index
    %29 = vector.load %arg7[%c1, %c0_20, %c0_21] : memref<18x18x128xf32, #tpu.memory_space<vmem>>, vector<16x1x128xf32>
    tpu.vector_store %arg7[%c1, %c0_20, %c0_21], %28 {strides = array<i32>} : memref<18x18x128xf32, #tpu.memory_space<vmem>>, vector<16x1x128xf32>,
    %cst_22 = arith.constant 0.000000e+00 : f32
    %30 = vector.broadcast %cst_22 : f32 to vector<16x1x128xf32>
    %c1_23 = arith.constant 1 : index
    %c17_24 = arith.constant 17 : index
    %c0_25 = arith.constant 0 : index
    %31 = vector.load %arg7[%c1_23, %c17_24, %c0_25] : memref<18x18x128xf32, #tpu.memory_space<vmem>>, vector<16x1x128xf32>
    tpu.vector_store %arg7[%c1_23, %c17_24, %c0_25], %30 {strides = array<i32>} : memref<18x18x128xf32, #tpu.memory_space<vmem>>, vector<16x1x128xf32>,
    %32 = vector.shape_cast %23 : vector<256x128xf32> to vector<16x16x128xf32>
    %c1_26 = arith.constant 1 : index
    %c1_27 = arith.constant 1 : index
    %c0_28 = arith.constant 0 : index
    %33 = vector.load %arg7[%c1_26, %c1_27, %c0_28] : memref<18x18x128xf32, #tpu.memory_space<vmem>>, vector<16x16x128xf32>
    tpu.vector_store %arg7[%c1_26, %c1_27, %c0_28], %32 {strides = array<i32>} : memref<18x18x128xf32, #tpu.memory_space<vmem>>, vector<16x16x128xf32>,
    %c0_29 = arith.constant 0 : index
    %c0_30 = arith.constant 0 : index
    %c0_31 = arith.constant 0 : index
    %34 = vector.load %arg7[%c0_29, %c0_30, %c0_31] : memref<18x18x128xf32, #tpu.memory_space<vmem>>, vector<16x16x128xf32>
    %35 = vector.shape_cast %34 : vector<16x16x128xf32> to vector<256x128xf32>
    %c0_32 = arith.constant 0 : index
    %c0_33 = arith.constant 0 : index
    %36 = vector.load %arg8[%c0_32, %c0_33] : memref<256x1152xf32, #tpu.memory_space<vmem>>, vector<256x128xf32>
    tpu.vector_store %arg8[%c0_32, %c0_33], %35 {strides = array<i32>} : memref<256x1152xf32, #tpu.memory_space<vmem>>, vector<256x128xf32>,
    %c0_34 = arith.constant 0 : index
    %c1_35 = arith.constant 1 : index
    %c0_36 = arith.constant 0 : index
    %37 = vector.load %arg7[%c0_34, %c1_35, %c0_36] : memref<18x18x128xf32, #tpu.memory_space<vmem>>, vector<16x16x128xf32>
    %38 = vector.shape_cast %37 : vector<16x16x128xf32> to vector<256x128xf32>
    %c0_37 = arith.constant 0 : index
    %c128 = arith.constant 128 : index
    %39 = vector.load %arg8[%c0_37, %c128] : memref<256x1152xf32, #tpu.memory_space<vmem>>, vector<256x128xf32>
    tpu.vector_store %arg8[%c0_37, %c128], %38 {strides = array<i32>} : memref<256x1152xf32, #tpu.memory_space<vmem>>, vector<256x128xf32>,
    %c0_38 = arith.constant 0 : index
    %c2 = arith.constant 2 : index
    %c0_39 = arith.constant 0 : index
    %40 = vector.load %arg7[%c0_38, %c2, %c0_39] : memref<18x18x128xf32, #tpu.memory_space<vmem>>, vector<16x16x128xf32>
    %41 = vector.shape_cast %40 : vector<16x16x128xf32> to vector<256x128xf32>
    %c0_40 = arith.constant 0 : index
    %c256 = arith.constant 256 : index
    %42 = vector.load %arg8[%c0_40, %c256] : memref<256x1152xf32, #tpu.memory_space<vmem>>, vector<256x128xf32>
    tpu.vector_store %arg8[%c0_40, %c256], %41 {strides = array<i32>} : memref<256x1152xf32, #tpu.memory_space<vmem>>, vector<256x128xf32>,
    %c1_41 = arith.constant 1 : index
    %c0_42 = arith.constant 0 : index
    %c0_43 = arith.constant 0 : index
    %43 = vector.load %arg7[%c1_41, %c0_42, %c0_43] : memref<18x18x128xf32, #tpu.memory_space<vmem>>, vector<16x16x128xf32>
    %44 = vector.shape_cast %43 : vector<16x16x128xf32> to vector<256x128xf32>
    %c0_44 = arith.constant 0 : index
    %c384 = arith.constant 384 : index
    %45 = vector.load %arg8[%c0_44, %c384] : memref<256x1152xf32, #tpu.memory_space<vmem>>, vector<256x128xf32>
    tpu.vector_store %arg8[%c0_44, %c384], %44 {strides = array<i32>} : memref<256x1152xf32, #tpu.memory_space<vmem>>, vector<256x128xf32>,
    %c1_45 = arith.constant 1 : index
    %c1_46 = arith.constant 1 : index
    %c0_47 = arith.constant 0 : index
    %46 = vector.load %arg7[%c1_45, %c1_46, %c0_47] : memref<18x18x128xf32, #tpu.memory_space<vmem>>, vector<16x16x128xf32>
    %47 = vector.shape_cast %46 : vector<16x16x128xf32> to vector<256x128xf32>
    %c0_48 = arith.constant 0 : index
    %c512 = arith.constant 512 : index
    %48 = vector.load %arg8[%c0_48, %c512] : memref<256x1152xf32, #tpu.memory_space<vmem>>, vector<256x128xf32>
    tpu.vector_store %arg8[%c0_48, %c512], %47 {strides = array<i32>} : memref<256x1152xf32, #tpu.memory_space<vmem>>, vector<256x128xf32>,
    %c1_49 = arith.constant 1 : index
    %c2_50 = arith.constant 2 : index
    %c0_51 = arith.constant 0 : index
    %49 = vector.load %arg7[%c1_49, %c2_50, %c0_51] : memref<18x18x128xf32, #tpu.memory_space<vmem>>, vector<16x16x128xf32>
    %50 = vector.shape_cast %49 : vector<16x16x128xf32> to vector<256x128xf32>
    %c0_52 = arith.constant 0 : index
    %c640 = arith.constant 640 : index
    %51 = vector.load %arg8[%c0_52, %c640] : memref<256x1152xf32, #tpu.memory_space<vmem>>, vector<256x128xf32>
    tpu.vector_store %arg8[%c0_52, %c640], %50 {strides = array<i32>} : memref<256x1152xf32, #tpu.memory_space<vmem>>, vector<256x128xf32>,
    %c2_53 = arith.constant 2 : index
    %c0_54 = arith.constant 0 : index
    %c0_55 = arith.constant 0 : index
    %52 = vector.load %arg7[%c2_53, %c0_54, %c0_55] : memref<18x18x128xf32, #tpu.memory_space<vmem>>, vector<16x16x128xf32>
    %53 = vector.shape_cast %52 : vector<16x16x128xf32> to vector<256x128xf32>
    %c0_56 = arith.constant 0 : index
    %c768 = arith.constant 768 : index
    %54 = vector.load %arg8[%c0_56, %c768] : memref<256x1152xf32, #tpu.memory_space<vmem>>, vector<256x128xf32>
    tpu.vector_store %arg8[%c0_56, %c768], %53 {strides = array<i32>} : memref<256x1152xf32, #tpu.memory_space<vmem>>, vector<256x128xf32>,
    %c2_57 = arith.constant 2 : index
    %c1_58 = arith.constant 1 : index
    %c0_59 = arith.constant 0 : index
    %55 = vector.load %arg7[%c2_57, %c1_58, %c0_59] : memref<18x18x128xf32, #tpu.memory_space<vmem>>, vector<16x16x128xf32>
    %56 = vector.shape_cast %55 : vector<16x16x128xf32> to vector<256x128xf32>
    %c0_60 = arith.constant 0 : index
    %c896 = arith.constant 896 : index
    %57 = vector.load %arg8[%c0_60, %c896] : memref<256x1152xf32, #tpu.memory_space<vmem>>, vector<256x128xf32>
    tpu.vector_store %arg8[%c0_60, %c896], %56 {strides = array<i32>} : memref<256x1152xf32, #tpu.memory_space<vmem>>, vector<256x128xf32>,
    %c2_61 = arith.constant 2 : index
    %c2_62 = arith.constant 2 : index
    %c0_63 = arith.constant 0 : index
    %58 = vector.load %arg7[%c2_61, %c2_62, %c0_63] : memref<18x18x128xf32, #tpu.memory_space<vmem>>, vector<16x16x128xf32>
    %59 = vector.shape_cast %58 : vector<16x16x128xf32> to vector<256x128xf32>
    %c0_64 = arith.constant 0 : index
    %c1024 = arith.constant 1024 : index
    %60 = vector.load %arg8[%c0_64, %c1024] : memref<256x1152xf32, #tpu.memory_space<vmem>>, vector<256x128xf32>
    tpu.vector_store %arg8[%c0_64, %c1024], %59 {strides = array<i32>} : memref<256x1152xf32, #tpu.memory_space<vmem>>, vector<256x128xf32>,
    %c0_65 = arith.constant 0 : index
    %c0_66 = arith.constant 0 : index
    %61 = vector.load %arg8[%c0_65, %c0_66] : memref<256x1152xf32, #tpu.memory_space<vmem>>, vector<256x1152xf32>
    %c0_67 = arith.constant 0 : index
    %c0_68 = arith.constant 0 : index
    %62 = vector.load %arg3[%c0_67, %c0_68] : memref<1152x64xf32, #tpu.memory_space<vmem>>, vector<1152x64xf32>
    %cst_69 = arith.constant dense<0.000000e+00> : vector<256x64xf32>
    %63 = tpu.matmul %61, %62, %cst_69 {dimension_numbers = #tpu.dot_dimension_numbers<[1], [0], [0], [1], [0, 0, 1, 1], [], []>} : vector<256x1152xf32>, vector<1152x64xf32>, vector<256x64xf32> -> vector<256x64xf32>
    %c0_70 = arith.constant 0 : index
    %c0_71 = arith.constant 0 : index
    %64 = vector.load %arg5[%c0_70, %c0_71] : memref<1x64xf32, #tpu.memory_space<vmem>>, vector<1x64xf32>
    %65 = vector.broadcast %64 : vector<1x64xf32> to vector<256x64xf32>
    %66 = arith.addf %63, %65 : vector<256x64xf32>
    %cst_72 = arith.constant 2.000000e+01 : f32
    %67 = vector.broadcast %cst_72 : f32 to vector<256x64xf32>
    %68 = arith.minimumf %66, %67 : vector<256x64xf32>
    %69 = math.exp %68 : vector<256x64xf32>
    %cst_73 = arith.constant 1.000000e+00 : f32
    %70 = vector.broadcast %cst_73 : f32 to vector<256x64xf32>
    %71 = arith.addf %70, %69 : vector<256x64xf32>
    %72 = arith.mulf %71, %71 : vector<256x64xf32>
    %cst_74 = arith.constant 1.000000e+00 : f32
    %73 = vector.broadcast %cst_74 : f32 to vector<256x64xf32>
    %74 = arith.subf %72, %73 : vector<256x64xf32>
    %75 = arith.mulf %66, %74 : vector<256x64xf32>
    %cst_75 = arith.constant 1.000000e+00 : f32
    %76 = vector.broadcast %cst_75 : f32 to vector<256x64xf32>
    %77 = arith.addf %72, %76 : vector<256x64xf32>
    %78 = tpu.reciprocal %77 {approx = true} : vector<256x64xf32> -> vector<256x64xf32>
    %79 = arith.mulf %75, %78 : vector<256x64xf32>
    %cst_76 = arith.constant 2.000000e+01 : f32
    %80 = vector.broadcast %cst_76 : f32 to vector<256x64xf32>
    %81 = arith.cmpf ogt, %66, %80 : vector<256x64xf32>
    %82 = arith.select %81, %66, %79 : vector<256x64xi1>, vector<256x64xf32>
    %83 = arith.addf %82, %2 : vector<256x64xf32>
    %84 = vector.shape_cast %83 : vector<256x64xf32> to vector<16x16x64xf32>
    %c0_77 = arith.constant 0 : index
    %c0_78 = arith.constant 0 : index
    %c0_79 = arith.constant 0 : index
    %c0_80 = arith.constant 0 : index
    %85 = vector.load %arg6[%c0_77, %c0_78, %c0_79, %c0_80] : memref<1x16x16x64xf32, #tpu.memory_space<vmem>>, vector<1x16x16x64xf32>
    %86 = vector.shape_cast %85 : vector<1x16x16x64xf32> to vector<16x16x64xf32>
    %87 = vector.shape_cast %84 : vector<16x16x64xf32> to vector<1x16x16x64xf32>
    tpu.vector_store %arg6[%c0_77, %c0_78, %c0_79, %c0_80], %87 {strides = array<i32>} : memref<1x16x16x64xf32, #tpu.memory_space<vmem>>, vector<1x16x16x64xf32>,
    return
  }
  func.func @transform_0(%arg0: i32) -> (i32, i32, i32, i32) {
    %c0_i32 = arith.constant 0 : i32
    %c0_i32_0 = arith.constant 0 : i32
    %c0_i32_1 = arith.constant 0 : i32
    %c0_i32_2 = arith.constant 0 : i32
    return %arg0, %c0_i32, %c0_i32_0, %c0_i32_1 : i32, i32, i32, i32
  }
  func.func @transform_1(%arg0: i32) -> (i32, i32) {
    %c0_i32 = arith.constant 0 : i32
    %c0_i32_0 = arith.constant 0 : i32
    %c0_i32_1 = arith.constant 0 : i32
    return %c0_i32, %c0_i32_0 : i32, i32
  }
  func.func @transform_2(%arg0: i32) -> (i32, i32) {
    %c0_i32 = arith.constant 0 : i32
    %c0_i32_0 = arith.constant 0 : i32
    %c0_i32_1 = arith.constant 0 : i32
    return %c0_i32, %c0_i32_0 : i32, i32
  }
  func.func @transform_3(%arg0: i32) -> (i32, i32) {
    %c0_i32 = arith.constant 0 : i32
    %c0_i32_0 = arith.constant 0 : i32
    %c0_i32_1 = arith.constant 0 : i32
    return %c0_i32, %c0_i32_0 : i32, i32
  }
  func.func @transform_4(%arg0: i32) -> (i32, i32) {
    %c0_i32 = arith.constant 0 : i32
    %c0_i32_0 = arith.constant 0 : i32
    %c0_i32_1 = arith.constant 0 : i32
    return %c0_i32, %c0_i32_0 : i32, i32
  }
  func.func @transform_5(%arg0: i32) -> (i32, i32, i32, i32) {
    %c0_i32 = arith.constant 0 : i32
    %c0_i32_0 = arith.constant 0 : i32
    %c0_i32_1 = arith.constant 0 : i32
    %c0_i32_2 = arith.constant 0 : i32
    return %arg0, %c0_i32, %c0_i32_0, %c0_i32_1 : i32, i32, i32, i32
  }
}

</mosaic_0001>

<llo_original>
// kernel: tpu_custom_call.1
$region0: #{tpu_custom_call.1}
  #allocation0 [shape = 'u32[]', space=smem, size = 0x4, offset = 0x4, fixed_abs, tag = 'smem constant byte address 0x4 - core index']
  #allocation1 [shape = 'u32[144,128]{1,0:T(1,128)}', space=vmem, size = 0x12000, scoped, tag = 'internal scratch']
  #allocation2 [shape = 'f32[18,18,128]{2,1,0:T(8,128)}', space=vmem, size = 0x36000, scoped, tag = 'scratch operand']
  #allocation3 [shape = 'f32[256,1152]{1,0:T(8,128)}', space=vmem, size = 0x120000, scoped, tag = 'scratch operand']
  %s0 = inlined_call_operand.vmem [shape: f32[2,16,16,64], index: 0, kind: input, shape index: {}]
  %s1 = inlined_call_operand.vmem [shape: f32[64,128], index: 1, kind: input, shape index: {}]
  %s2 = inlined_call_operand.vmem [shape: f32[1152,64], index: 2, kind: input, shape index: {}]
  %s3 = inlined_call_operand.vmem [shape: f32[1,128], index: 3, kind: input, shape index: {}]
  %s4 = inlined_call_operand.vmem [shape: f32[1,64], index: 4, kind: input, shape index: {}]
  %s5 = inlined_call_operand.hbm [shape: f32[2,16,16,64], index: 5, kind: output, shape index: {}]
  %s6 = sld [smem:[#allocation0]]
  $region53: #{tpu_custom_call.1} parent=0
    _
  %s8 = ssub.s32 1, %s6
  %s9 = scalar_select 0, %s8, %s6
  $region1: #{tpu_custom_call.1} parent=0
    #allocation4 [shape = 'u8[262144]{0}', space=vmem, size = 0x40000, scoped, tag = 'output window, operand 0']
    #allocation5 [shape = 's32[2]{0}', space=sflag, size = 0x8, scoped, tag = 'scoped memory for tpu_custom_call.1']
    %10 = vsyncpa [#allocation5], 0
    %s11 = scalar_lea.sflag [#allocation5], 1
    %12 = vsyncpa %s11, 0
    loop: start=0, step=1, limit=4
    $region2: #{tpu_custom_call.1} parent=1 // loop_pre_header
      _
    $region3: #{tpu_custom_call.1} parent=1 // loop_header
      %s14 = sphi 0, %s18
      %p15 = scmp.ge.s32.totalorder %s14, 4
      %s24 = sphi 0, %s26
      %s27 = sphi 0, %s24
      %s28 = sphi 0, %s27
      %s44 = sphi 0, %s28
      %s48 = sphi 0, %s48
      %s50 = sphi 0, %s48
      %s51 = sphi 0, %s50
      %s65 = sphi 0, %s51
      %s69 = sphi 0, %s69
      %s71 = sphi 0, %s69
      %s72 = sphi 0, %s71
      %s86 = sphi 0, %s72
      %s90 = sphi 0, %s90
      %s92 = sphi 0, %s90
      %s93 = sphi 0, %s92
      %s107 = sphi 0, %s93
      %s111 = sphi 0, %s111
      %s113 = sphi 0, %s111
      %s114 = sphi 0, %s113
      %s128 = sphi 0, %s114
      %s134 = sphi 0, %s136
      %s137 = sphi 0, %s134
      %s138 = sphi 0, %s137
      %s154 = sphi 0, %s138
    $region4: #{tpu_custom_call.1} parent=1 // loop_header_branch
      %17 = sbr.rel (%p15) target = $region8
    $region5: #{tpu_custom_call.1} parent=1 // loop_body
      %s19 = ssub.s32 %s14, 1
      %s20 = ssub.s32 %s14, 2
      %s21 = sadd.s32 %s14, 1
      %s22 = ssub.s32 %s14, %s21
      %p23 = scmp.eq.s32.totalorder %s22, 0
      %s25 = sadd.s32 %s24, 1
      %s26 = scalar_select %p23, %s24, %s25
      %p29 = pneg %p23
      %p30 = scmp.eq.s32.totalorder %s14, 1
      %p31 = por %p29, %p30
      %p32 = scmp.ne.s32.totalorder %s24, %s27
      %p33 = scmp.eq.s32.totalorder %s14, 0
      %p34 = por %p32, %p33
      %p35 = scmp.ne.s32.totalorder %s24, %s27
      %p36 = scmp.eq.s32.totalorder %s19, 1
      %p37 = por %p35, %p36
      %p38 = scmp.ne.s32.totalorder %s27, %s28
      %p39 = scmp.eq.s32.totalorder %s19, 0
      %p40 = por %p38, %p39
      %p41 = scmp.ne.s32.totalorder %s27, %s28
      %p42 = scmp.eq.s32.totalorder %s20, 1
      %p43 = por %p41, %p42
      %p45 = scmp.ne.s32.totalorder %s28, %s44
      %p46 = scmp.eq.s32.totalorder %s20, 0
      %p47 = por %p45, %p46
      %s49 = sadd.s32 %s48, 1
      %p52 = scmp.eq.s32.totalorder %s14, 1
      %p53 = scmp.ne.s32.totalorder %s48, %s50
      %p54 = scmp.eq.s32.totalorder %s14, 0
      %p55 = por %p53, %p54
      %p56 = scmp.ne.s32.totalorder %s48, %s50
      %p57 = scmp.eq.s32.totalorder %s19, 1
      %p58 = por %p56, %p57
      %p59 = scmp.ne.s32.totalorder %s50, %s51
      %p60 = scmp.eq.s32.totalorder %s19, 0
      %p61 = por %p59, %p60
      %p62 = scmp.ne.s32.totalorder %s50, %s51
      %p63 = scmp.eq.s32.totalorder %s20, 1
      %p64 = por %p62, %p63
      %p66 = scmp.ne.s32.totalorder %s51, %s65
      %p67 = scmp.eq.s32.totalorder %s20, 0
      %p68 = por %p66, %p67
      %s70 = sadd.s32 %s69, 1
      %p73 = scmp.eq.s32.totalorder %s14, 1
      %p74 = scmp.ne.s32.totalorder %s69, %s71
      %p75 = scmp.eq.s32.totalorder %s14, 0
      %p76 = por %p74, %p75
      %p77 = scmp.ne.s32.totalorder %s69, %s71
      %p78 = scmp.eq.s32.totalorder %s19, 1
      %p79 = por %p77, %p78
      %p80 = scmp.ne.s32.totalorder %s71, %s72
      %p81 = scmp.eq.s32.totalorder %s19, 0
      %p82 = por %p80, %p81
      %p83 = scmp.ne.s32.totalorder %s71, %s72
      %p84 = scmp.eq.s32.totalorder %s20, 1
      %p85 = por %p83, %p84
      %p87 = scmp.ne.s32.totalorder %s72, %s86
      %p88 = scmp.eq.s32.totalorder %s20, 0
      %p89 = por %p87, %p88
      %s91 = sadd.s32 %s90, 1
      %p94 = scmp.eq.s32.totalorder %s14, 1
      %p95 = scmp.ne.s32.totalorder %s90, %s92
      %p96 = scmp.eq.s32.totalorder %s14, 0
      %p97 = por %p95, %p96
      %p98 = scmp.ne.s32.totalorder %s90, %s92
      %p99 = scmp.eq.s32.totalorder %s19, 1
      %p100 = por %p98, %p99
      %p101 = scmp.ne.s32.totalorder %s92, %s93
      %p102 = scmp.eq.s32.totalorder %s19, 0
      %p103 = por %p101, %p102
      %p104 = scmp.ne.s32.totalorder %s92, %s93
      %p105 = scmp.eq.s32.totalorder %s20, 1
      %p106 = por %p104, %p105
      %p108 = scmp.ne.s32.totalorder %s93, %s107
      %p109 = scmp.eq.s32.totalorder %s20, 0
      %p110 = por %p108, %p109
      %s112 = sadd.s32 %s111, 1
      %p115 = scmp.eq.s32.totalorder %s14, 1
      %p116 = scmp.ne.s32.totalorder %s111, %s113
      %p117 = scmp.eq.s32.totalorder %s14, 0
      %p118 = por %p116, %p117
      %p119 = scmp.ne.s32.totalorder %s111, %s113
      %p120 = scmp.eq.s32.totalorder %s19, 1
      %p121 = por %p119, %p120
      %p122 = scmp.ne.s32.totalorder %s113, %s114
      %p123 = scmp.eq.s32.totalorder %s19, 0
      %p124 = por %p122, %p123
      %p125 = scmp.ne.s32.totalorder %s113, %s114
      %p126 = scmp.eq.s32.totalorder %s20, 1
      %p127 = por %p125, %p126
      %p129 = scmp.ne.s32.totalorder %s114, %s128
      %p130 = scmp.eq.s32.totalorder %s20, 0
      %p131 = por %p129, %p130
      %s132 = ssub.s32 %s14, %s21
      %p133 = scmp.eq.s32.totalorder %s132, 0
      %s135 = sadd.s32 %s134, 1
      %s136 = scalar_select %p133, %s134, %s135
      %p139 = pneg %p133
      %p140 = scmp.eq.s32.totalorder %s14, 1
      %p141 = por %p139, %p140
      %p142 = scmp.ne.s32.totalorder %s134, %s137
      %p143 = scmp.eq.s32.totalorder %s14, 0
      %p144 = por %p142, %p143
      %p145 = scmp.ne.s32.totalorder %s134, %s137
      %p146 = scmp.eq.s32.totalorder %s19, 1
      %p147 = por %p145, %p146
      %p148 = scmp.ne.s32.totalorder %s137, %s138
      %p149 = scmp.eq.s32.totalorder %s19, 0
      %p150 = por %p148, %p149
      %p151 = scmp.ne.s32.totalorder %s137, %s138
      %p152 = scmp.eq.s32.totalorder %s20, 1
      %p153 = por %p151, %p152
      %p155 = scmp.ne.s32.totalorder %s138, %s154
      %p156 = scmp.eq.s32.totalorder %s20, 0
      %p157 = por %p155, %p156
      %p158 = scmp.le.s32.totalorder 1, %s14
      %p159 = scmp.lt.s32.totalorder %s14, 3
      %p160 = pnand %p158, %p159
      %p161 = pneg %p160
      // Predicated region
      $region9: #{tpu_custom_call.1} parent=5 // pred_check
        _
      $region10: #{tpu_custom_call.1} parent=5 // pred_check_branch
        %163 = sbr.rel (%p160) target = $region12
      $region11: #{tpu_custom_call.1} parent=5 // pred_region
        %s164 = ssub.s32 %s14, 1
        // Predicated region
        $region13: #{tpu_custom_call.1} parent=11 // pred_check
          %p165 = pneg %p61
        $region14: #{tpu_custom_call.1} parent=11 // pred_check_branch
          %167 = sbr.rel (%p165) target = $region16
        $region15: #{tpu_custom_call.1} parent=11 // pred_region
          _
        $region16: #{tpu_custom_call.1} parent=11 // pred_fallthru
          _
        // Predicated region
        $region17: #{tpu_custom_call.1} parent=11 // pred_check
          %p168 = pneg %p82
        $region18: #{tpu_custom_call.1} parent=11 // pred_check_branch
          %170 = sbr.rel (%p168) target = $region20
        $region19: #{tpu_custom_call.1} parent=11 // pred_region
          _
        $region20: #{tpu_custom_call.1} parent=11 // pred_fallthru
          _
        // Predicated region
        $region21: #{tpu_custom_call.1} parent=11 // pred_check
          %p171 = pneg %p103
        $region22: #{tpu_custom_call.1} parent=11 // pred_check_branch
          %173 = sbr.rel (%p171) target = $region24
        $region23: #{tpu_custom_call.1} parent=11 // pred_region
          _
        $region24: #{tpu_custom_call.1} parent=11 // pred_fallthru
          _
        // Predicated region
        $region25: #{tpu_custom_call.1} parent=11 // pred_check
          %p174 = pneg %p124
        $region26: #{tpu_custom_call.1} parent=11 // pred_check_branch
          %176 = sbr.rel (%p174) target = $region28
        $region27: #{tpu_custom_call.1} parent=11 // pred_region
          _
        $region28: #{tpu_custom_call.1} parent=11 // pred_fallthru
          _
      $region12: #{tpu_custom_call.1} parent=5 // pred_fallthru
        _
      %p177 = scmp.lt.s32.totalorder %s14, 2
      // Predicated region
      $region29: #{tpu_custom_call.1} parent=5 // pred_check
        %p178 = pneg %p177
      $region30: #{tpu_custom_call.1} parent=5 // pred_check_branch
        %180 = sbr.rel (%p178) target = $region32
      $region31: #{tpu_custom_call.1} parent=5 // pred_region
        // Predicated region
        $region33: #{tpu_custom_call.1} parent=31 // pred_check
          %p181 = pneg %p34
        $region34: #{tpu_custom_call.1} parent=31 // pred_check_branch
          %183 = sbr.rel (%p181) target = $region36
        $region35: #{tpu_custom_call.1} parent=31 // pred_region
          %p184 = scmp.lt.s32.totalorder %s14, 1
          %s185 = scalar_select %p184, %s14, 1
          %s186 = smul.addr %s185, 32
          %s187 = smul.addr %s186, 8
          %s188 = scalar_lea.vmem %s0, %s187
        $region36: #{tpu_custom_call.1} parent=31 // pred_fallthru
          _
      $region32: #{tpu_custom_call.1} parent=5 // pred_fallthru
        _
      %p189 = scmp.le.s32.totalorder 1, %s14
      %p190 = scmp.lt.s32.totalorder %s14, 3
      %p191 = pnand %p189, %p190
      %p192 = pneg %p191
      // Predicated region
      $region37: #{tpu_custom_call.1} parent=5 // pred_check
        _
      $region38: #{tpu_custom_call.1} parent=5 // pred_check_branch
        %194 = sbr.rel (%p191) target = $region40
      $region39: #{tpu_custom_call.1} parent=5 // pred_region
        %s195 = ssub.s32 %s14, 1
        %p196 = scmp.lt.s32.totalorder %s19, 1
        %s197 = scalar_select %p196, %s19, 1
        %s198 = smul.addr %s197, 32
        %s199 = smul.addr %s198, 8
        %s200 = scalar_lea.vmem %s0, %s199
        %p201 = pneg %p40
        %p202 = pneg %p37
        %p203 = pneg %p61
        %p204 = pneg %p58
        %p205 = pneg %p82
        %p206 = pneg %p79
        %p207 = pneg %p103
        %p208 = pneg %p100
        %p209 = pneg %p124
        %p210 = pneg %p121
        %p211 = pneg %p150
        %p212 = pneg %p147
        %s213 = sand.u32 %s137, 1
        %s214 = scalar_lea.sflag [#allocation5], %s213
        %s215 = sand.u32 %s137, 1
        %s216 = smul.addr %s215, 256
        %s217 = scalar_lea.vmem [#allocation4], %s216
        %p218 = scmp.lt.s32.totalorder %s19, 1
        %s219 = scalar_select %p218, %s19, 1
        %s220 = smul.addr %s219, 32
        %s221 = smul.addr %s220, 8
        %s222 = scalar_lea.vmem %s0, %s221
        %v223 = vld [vmem:[%s222] sm:$0xff]
        %v224 = vld [vmem:[%s222 + $0x8] sm:$0xff]
        %v225 = vld [vmem:[%s222 + $0x10] sm:$0xff]
        %v226 = vld [vmem:[%s222 + $0x18] sm:$0xff]
        %v227 = vld [vmem:[%s222 + $0x20] sm:$0xff]
        %v228 = vld [vmem:[%s222 + $0x28] sm:$0xff]
        %v229 = vld [vmem:[%s222 + $0x30] sm:$0xff]
        %v230 = vld [vmem:[%s222 + $0x38] sm:$0xff]
        %v231 = vld [vmem:[%s222 + $0x40] sm:$0xff]
        %v232 = vld [vmem:[%s222 + $0x48] sm:$0xff]
        %v233 = vld [vmem:[%s222 + $0x50] sm:$0xff]
        %v234 = vld [vmem:[%s222 + $0x58] sm:$0xff]
        %v235 = vld [vmem:[%s222 + $0x60] sm:$0xff]
        %v236 = vld [vmem:[%s222 + $0x68] sm:$0xff]
        %v237 = vld [vmem:[%s222 + $0x70] sm:$0xff]
        %v238 = vld [vmem:[%s222 + $0x78] sm:$0xff]
        %v239 = vld [vmem:[%s222 + $0x80] sm:$0xff]
        %v240 = vld [vmem:[%s222 + $0x88] sm:$0xff]
        %v241 = vld [vmem:[%s222 + $0x90] sm:$0xff]
        %v242 = vld [vmem:[%s222 + $0x98] sm:$0xff]
        %v243 = vld [vmem:[%s222 + $0xa0] sm:$0xff]
        %v244 = vld [vmem:[%s222 + $0xa8] sm:$0xff]
        %v245 = vld [vmem:[%s222 + $0xb0] sm:$0xff]
        %v246 = vld [vmem:[%s222 + $0xb8] sm:$0xff]
        %v247 = vld [vmem:[%s222 + $0xc0] sm:$0xff]
        %v248 = vld [vmem:[%s222 + $0xc8] sm:$0xff]
        %v249 = vld [vmem:[%s222 + $0xd0] sm:$0xff]
        %v250 = vld [vmem:[%s222 + $0xd8] sm:$0xff]
        %v251 = vld [vmem:[%s222 + $0xe0] sm:$0xff]
        %v252 = vld [vmem:[%s222 + $0xe8] sm:$0xff]
        %v253 = vld [vmem:[%s222 + $0xf0] sm:$0xff]
        %v254 = vld [vmem:[%s222 + $0xf8] sm:$0xff]
        %v255 = vld [vmem:[%s1] sm:$0xff]
        %v256 = vld [vmem:[%s1 + $0x8] sm:$0xff]
        %v257 = vld [vmem:[%s1 + $0x10] sm:$0xff]
        %v258 = vld [vmem:[%s1 + $0x18] sm:$0xff]
        %v259 = vld [vmem:[%s1 + $0x20] sm:$0xff]
        %v260 = vld [vmem:[%s1 + $0x28] sm:$0xff]
        %v261 = vld [vmem:[%s1 + $0x30] sm:$0xff]
        %v262 = vld [vmem:[%s1 + $0x38] sm:$0xff]
        %v263 = vld [vmem:[%s3] sm:$0x1]
        %v265 = vlaneseq
        %v266 = vshrl.u32 %v265, 7
        %v267 = vsub.s32 0, %v266
        %v268 = vrot.slane %v263, %v267
        %vm270 = vcmask 523264
        %v272 = vsel %vm270, %v223, 0
        %v275 = vsel %vm270, %v224, 0
        %v278 = vsel %vm270, %v225, 0
        %v281 = vsel %vm270, %v226, 0
        %v284 = vsel %vm270, %v227, 0
        %v287 = vsel %vm270, %v228, 0
        %v290 = vsel %vm270, %v229, 0
        %v293 = vsel %vm270, %v230, 0
        %v296 = vsel %vm270, %v231, 0
        %v299 = vsel %vm270, %v232, 0
        %v302 = vsel %vm270, %v233, 0
        %v305 = vsel %vm270, %v234, 0
        %v308 = vsel %vm270, %v235, 0
        %v311 = vsel %vm270, %v236, 0
        %v314 = vsel %vm270, %v237, 0
        %v317 = vsel %vm270, %v238, 0
        %v320 = vsel %vm270, %v239, 0
        %v323 = vsel %vm270, %v240, 0
        %v326 = vsel %vm270, %v241, 0
        %v329 = vsel %vm270, %v242, 0
        %v332 = vsel %vm270, %v243, 0
        %v335 = vsel %vm270, %v244, 0
        %v338 = vsel %vm270, %v245, 0
        %v341 = vsel %vm270, %v246, 0
        %v344 = vsel %vm270, %v247, 0
        %v347 = vsel %vm270, %v248, 0
        %v350 = vsel %vm270, %v249, 0
        %v353 = vsel %vm270, %v250, 0
        %v356 = vsel %vm270, %v251, 0
        %v359 = vsel %vm270, %v252, 0
        %v362 = vsel %vm270, %v253, 0
        %v365 = vsel %vm270, %v254, 0
        %367 = vmatprep.subr.mxu0 0.0
        %368 = vmatpush1.msra.mxu0 0.0
        %369 = vmatprep.subr.mxu0 0.0
        %370 = vmatpush1.msra.mxu0 0.0
        %371 = vmatprep.subr.mxu0 0.0
        %372 = vmatpush1.msra.mxu0 0.0
        %373 = vmatprep.subr.mxu0 0.0
        %374 = vmatpush1.msra.mxu0 0.0
        %375 = vmatprep.subr.mxu0 0.0
        %376 = vmatpush1.msra.mxu0 0.0
        %377 = vmatprep.subr.mxu0 0.0
        %378 = vmatpush1.msra.mxu0 0.0
        %379 = vmatprep.subr.mxu0 0.0
        %380 = vmatpush1.msra.mxu0 0.0
        %381 = vmatprep.subr.mxu0 0.0
        %382 = vmatpush1.msra.mxu0 0.0
        %383 = vmatprep.subr.mxu0 0.0
        %384 = vmatpush1.msra.mxu0 %v262
        %385 = vmatprep.subr.mxu0 0.0
        %386 = vmatpush1.msra.mxu0 %v261
        %387 = vmatprep.subr.mxu0 0.0
        %388 = vmatpush1.msra.mxu0 %v260
        %389 = vmatprep.subr.mxu0 0.0
        %390 = vmatpush1.msra.mxu0 %v259
        %391 = vmatprep.subr.mxu0 0.0
        %392 = vmatpush1.msra.mxu0 %v258
        %393 = vmatprep.subr.mxu0 0.0
        %394 = vmatpush1.msra.mxu0 %v257
        %395 = vmatprep.subr.mxu0 0.0
        %396 = vmatpush1.msra.mxu0 %v256
        %397 = vmatprep.subr.mxu0 0.0
        %398 = vmatpush1.msra.mxu0 %v255
        %399 = vmatprep.subr.mxu0 0.0
        %400 = vmatpush2.msra.mxu0 0.0
        %401 = vmatprep.subr.mxu0 0.0
        %402 = vmatpush2.msra.mxu0 0.0
        %403 = vmatprep.subr.mxu0 0.0
        %404 = vmatpush2.msra.mxu0 0.0
        %405 = vmatprep.subr.mxu0 0.0
        %406 = vmatpush2.msra.mxu0 0.0
        %407 = vmatprep.subr.mxu0 0.0
        %408 = vmatpush2.msra.mxu0 0.0
        %409 = vmatprep.subr.mxu0 0.0
        %410 = vmatpush2.msra.mxu0 0.0
        %411 = vmatprep.subr.mxu0 0.0
        %412 = vmatpush2.msra.mxu0 0.0
        %413 = vmatprep.subr.mxu0 0.0
        %414 = vmatpush2.msra.mxu0 0.0
        %415 = vmatprep.subr.mxu0 0.0
        %416 = vmatpush2.msra.mxu0 0.0
        %417 = vmatprep.subr.mxu0 0.0
        %418 = vmatpush2.msra.mxu0 0.0
        %419 = vmatprep.subr.mxu0 0.0
        %420 = vmatpush2.msra.mxu0 0.0
        %421 = vmatprep.subr.mxu0 0.0
        %422 = vmatpush2.msra.mxu0 0.0
        %423 = vmatprep.subr.mxu0 0.0
        %424 = vmatpush2.msra.mxu0 0.0
        %425 = vmatprep.subr.mxu0 0.0
        %426 = vmatpush2.msra.mxu0 0.0
        %427 = vmatprep.subr.mxu0 0.0
        %428 = vmatpush2.msra.mxu0 0.0
        %429 = vmatprep.subr.mxu0 0.0
        %430 = vmatpush2.msra.mxu0 0.0
        %431 = vmatprep.mubr.f32.mxu0 0.0
        %432 = vmatmul.mubr.f32.gmra.mxu0 %v272
        %v433 = vpop.f32.mrf.mxu0
        %v434 = vadd.f32 %v268, %v433
        %v435 = vpop.f32.mrf.mxu0
        %436 = vmatprep.mubr.f32.mxu0 0.0
        %437 = vmatmul.mubr.f32.gmra.mxu0 %v275
        %v438 = vpop.f32.mrf.mxu0
        %v439 = vadd.f32 %v268, %v438
        %v440 = vpop.f32.mrf.mxu0
        %441 = vmatprep.mubr.f32.mxu0 0.0
        %442 = vmatmul.mubr.f32.gmra.mxu0 %v278
        %v443 = vpop.f32.mrf.mxu0
        %v444 = vadd.f32 %v268, %v443
        %v445 = vpop.f32.mrf.mxu0
        %446 = vmatprep.mubr.f32.mxu0 0.0
        %447 = vmatmul.mubr.f32.gmra.mxu0 %v281
        %v448 = vpop.f32.mrf.mxu0
        %v449 = vadd.f32 %v268, %v448
        %v450 = vpop.f32.mrf.mxu0
        %451 = vmatprep.mubr.f32.mxu0 0.0
        %452 = vmatmul.mubr.f32.gmra.mxu0 %v284
        %v453 = vpop.f32.mrf.mxu0
        %v454 = vadd.f32 %v268, %v453
        %v455 = vpop.f32.mrf.mxu0
        %456 = vmatprep.mubr.f32.mxu0 0.0
        %457 = vmatmul.mubr.f32.gmra.mxu0 %v287
        %v458 = vpop.f32.mrf.mxu0
        %v459 = vadd.f32 %v268, %v458
        %v460 = vpop.f32.mrf.mxu0
        %461 = vmatprep.mubr.f32.mxu0 0.0
        %462 = vmatmul.mubr.f32.gmra.mxu0 %v290
        %v463 = vpop.f32.mrf.mxu0
        %v464 = vadd.f32 %v268, %v463
        %v465 = vpop.f32.mrf.mxu0
        %466 = vmatprep.mubr.f32.mxu0 0.0
        %467 = vmatmul.mubr.f32.gmra.mxu0 %v293
        %v468 = vpop.f32.mrf.mxu0
        %v469 = vadd.f32 %v268, %v468
        %v470 = vpop.f32.mrf.mxu0
        %471 = vmatprep.mubr.f32.mxu0 0.0
        %472 = vmatmul.mubr.f32.gmra.mxu0 %v296
        %v473 = vpop.f32.mrf.mxu0
        %v474 = vadd.f32 %v268, %v473
        %v475 = vpop.f32.mrf.mxu0
        %476 = vmatprep.mubr.f32.mxu0 0.0
        %477 = vmatmul.mubr.f32.gmra.mxu0 %v299
        %v478 = vpop.f32.mrf.mxu0
        %v479 = vadd.f32 %v268, %v478
        %v480 = vpop.f32.mrf.mxu0
        %481 = vmatprep.mubr.f32.mxu0 0.0
        %482 = vmatmul.mubr.f32.gmra.mxu0 %v302
        %v483 = vpop.f32.mrf.mxu0
        %v484 = vadd.f32 %v268, %v483
        %v485 = vpop.f32.mrf.mxu0
        %486 = vmatprep.mubr.f32.mxu0 0.0
        %487 = vmatmul.mubr.f32.gmra.mxu0 %v305
        %v488 = vpop.f32.mrf.mxu0
        %v489 = vadd.f32 %v268, %v488
        %v490 = vpop.f32.mrf.mxu0
        %491 = vmatprep.mubr.f32.mxu0 0.0
        %492 = vmatmul.mubr.f32.gmra.mxu0 %v308
        %v493 = vpop.f32.mrf.mxu0
        %v494 = vadd.f32 %v268, %v493
        %v495 = vpop.f32.mrf.mxu0
        %496 = vmatprep.mubr.f32.mxu0 0.0
        %497 = vmatmul.mubr.f32.gmra.mxu0 %v311
        %v498 = vpop.f32.mrf.mxu0
        %v499 = vadd.f32 %v268, %v498
        %v500 = vpop.f32.mrf.mxu0
        %501 = vmatprep.mubr.f32.mxu0 0.0
        %502 = vmatmul.mubr.f32.gmra.mxu0 %v314
        %v503 = vpop.f32.mrf.mxu0
        %v504 = vadd.f32 %v268, %v503
        %v505 = vpop.f32.mrf.mxu0
        %506 = vmatprep.mubr.f32.mxu0 0.0
        %507 = vmatmul.mubr.f32.gmra.mxu0 %v317
        %v508 = vpop.f32.mrf.mxu0
        %v509 = vadd.f32 %v268, %v508
        %v510 = vpop.f32.mrf.mxu0
        %511 = vmatprep.mubr.f32.mxu0 0.0
        %512 = vmatmul.mubr.f32.gmra.mxu0 %v320
        %v513 = vpop.f32.mrf.mxu0
        %v514 = vadd.f32 %v268, %v513
        %v515 = vpop.f32.mrf.mxu0
        %516 = vmatprep.mubr.f32.mxu0 0.0
        %517 = vmatmul.mubr.f32.gmra.mxu0 %v323
        %v518 = vpop.f32.mrf.mxu0
        %v519 = vadd.f32 %v268, %v518
        %v520 = vpop.f32.mrf.mxu0
        %521 = vmatprep.mubr.f32.mxu0 0.0
        %522 = vmatmul.mubr.f32.gmra.mxu0 %v326
        %v523 = vpop.f32.mrf.mxu0
        %v524 = vadd.f32 %v268, %v523
        %v525 = vpop.f32.mrf.mxu0
        %526 = vmatprep.mubr.f32.mxu0 0.0
        %527 = vmatmul.mubr.f32.gmra.mxu0 %v329
        %v528 = vpop.f32.mrf.mxu0
        %v529 = vadd.f32 %v268, %v528
        %v530 = vpop.f32.mrf.mxu0
        %531 = vmatprep.mubr.f32.mxu0 0.0
        %532 = vmatmul.mubr.f32.gmra.mxu0 %v332
        %v533 = vpop.f32.mrf.mxu0
        %v534 = vadd.f32 %v268, %v533
        %v535 = vpop.f32.mrf.mxu0
        %536 = vmatprep.mubr.f32.mxu0 0.0
        %537 = vmatmul.mubr.f32.gmra.mxu0 %v335
        %v538 = vpop.f32.mrf.mxu0
        %v539 = vadd.f32 %v268, %v538
        %v540 = vpop.f32.mrf.mxu0
        %541 = vmatprep.mubr.f32.mxu0 0.0
        %542 = vmatmul.mubr.f32.gmra.mxu0 %v338
        %v543 = vpop.f32.mrf.mxu0
        %v544 = vadd.f32 %v268, %v543
        %v545 = vpop.f32.mrf.mxu0
        %546 = vmatprep.mubr.f32.mxu0 0.0
        %547 = vmatmul.mubr.f32.gmra.mxu0 %v341
        %v548 = vpop.f32.mrf.mxu0
        %v549 = vadd.f32 %v268, %v548
        %v550 = vpop.f32.mrf.mxu0
        %551 = vmatprep.mubr.f32.mxu0 0.0
        %552 = vmatmul.mubr.f32.gmra.mxu0 %v344
        %v553 = vpop.f32.mrf.mxu0
        %v554 = vadd.f32 %v268, %v553
        %v555 = vpop.f32.mrf.mxu0
        %556 = vmatprep.mubr.f32.mxu0 0.0
        %557 = vmatmul.mubr.f32.gmra.mxu0 %v347
        %v558 = vpop.f32.mrf.mxu0
        %v559 = vadd.f32 %v268, %v558
        %v560 = vpop.f32.mrf.mxu0
        %561 = vmatprep.mubr.f32.mxu0 0.0
        %562 = vmatmul.mubr.f32.gmra.mxu0 %v350
        %v563 = vpop.f32.mrf.mxu0
        %v564 = vadd.f32 %v268, %v563
        %v565 = vpop.f32.mrf.mxu0
        %566 = vmatprep.mubr.f32.mxu0 0.0
        %567 = vmatmul.mubr.f32.gmra.mxu0 %v353
        %v568 = vpop.f32.mrf.mxu0
        %v569 = vadd.f32 %v268, %v568
        %v570 = vpop.f32.mrf.mxu0
        %571 = vmatprep.mubr.f32.mxu0 0.0
        %572 = vmatmul.mubr.f32.gmra.mxu0 %v356
        %v573 = vpop.f32.mrf.mxu0
        %v574 = vadd.f32 %v268, %v573
        %v575 = vpop.f32.mrf.mxu0
        %576 = vmatprep.mubr.f32.mxu0 0.0
        %577 = vmatmul.mubr.f32.gmra.mxu0 %v359
        %v578 = vpop.f32.mrf.mxu0
        %v579 = vadd.f32 %v268, %v578
        %v580 = vpop.f32.mrf.mxu0
        %581 = vmatprep.mubr.f32.mxu0 0.0
        %582 = vmatmul.mubr.f32.gmra.mxu0 %v362
        %v583 = vpop.f32.mrf.mxu0
        %v584 = vadd.f32 %v268, %v583
        %v585 = vpop.f32.mrf.mxu0
        %586 = vmatprep.mubr.f32.mxu0 0.0
        %587 = vmatmul.mubr.f32.gmra.mxu0 %v365
        %v588 = vpop.f32.mrf.mxu0
        %v589 = vadd.f32 %v268, %v588
        %v590 = vpop.f32.mrf.mxu0
        %591 = vdwg.mxu0
        %v592 = vmin.f32 %v434, 20.0
        %v593 = vmin.f32 %v439, 20.0
        %v594 = vmin.f32 %v444, 20.0
        %v595 = vmin.f32 %v449, 20.0
        %v596 = vmin.f32 %v454, 20.0
        %v597 = vmin.f32 %v459, 20.0
        %v598 = vmin.f32 %v464, 20.0
        %v599 = vmin.f32 %v469, 20.0
        %v600 = vmin.f32 %v474, 20.0
        %v601 = vmin.f32 %v479, 20.0
        %v602 = vmin.f32 %v484, 20.0
        %v603 = vmin.f32 %v489, 20.0
        %v604 = vmin.f32 %v494, 20.0
        %v605 = vmin.f32 %v499, 20.0
        %v606 = vmin.f32 %v504, 20.0
        %v607 = vmin.f32 %v509, 20.0
        %v608 = vmin.f32 %v514, 20.0
        %v609 = vmin.f32 %v519, 20.0
        %v610 = vmin.f32 %v524, 20.0
        %v611 = vmin.f32 %v529, 20.0
        %v612 = vmin.f32 %v534, 20.0
        %v613 = vmin.f32 %v539, 20.0
        %v614 = vmin.f32 %v544, 20.0
        %v615 = vmin.f32 %v549, 20.0
        %v616 = vmin.f32 %v554, 20.0
        %v617 = vmin.f32 %v559, 20.0
        %v618 = vmin.f32 %v564, 20.0
        %v619 = vmin.f32 %v569, 20.0
        %v620 = vmin.f32 %v574, 20.0
        %v621 = vmin.f32 %v579, 20.0
        %v622 = vmin.f32 %v584, 20.0
        %v623 = vmin.f32 %v589, 20.0
        %v624 = vmul.f32 %v592, 1.442695
        %v625 = vpow.pop %v624
        %v626 = vmul.f32 %v593, 1.442695
        %v627 = vpow.pop %v626
        %v628 = vmul.f32 %v594, 1.442695
        %v629 = vpow.pop %v628
        %v630 = vmul.f32 %v595, 1.442695
        %v631 = vpow.pop %v630
        %v632 = vmul.f32 %v596, 1.442695
        %v633 = vpow.pop %v632
        %v634 = vmul.f32 %v597, 1.442695
        %v635 = vpow.pop %v634
        %v636 = vmul.f32 %v598, 1.442695
        %v637 = vpow.pop %v636
        %v638 = vmul.f32 %v599, 1.442695
        %v639 = vpow.pop %v638
        %v640 = vmul.f32 %v600, 1.442695
        %v641 = vpow.pop %v640
        %v642 = vmul.f32 %v601, 1.442695
        %v643 = vpow.pop %v642
        %v644 = vmul.f32 %v602, 1.442695
        %v645 = vpow.pop %v644
        %v646 = vmul.f32 %v603, 1.442695
        %v647 = vpow.pop %v646
        %v648 = vmul.f32 %v604, 1.442695
        %v649 = vpow.pop %v648
        %v650 = vmul.f32 %v605, 1.442695
        %v651 = vpow.pop %v650
        %v652 = vmul.f32 %v606, 1.442695
        %v653 = vpow.pop %v652
        %v654 = vmul.f32 %v607, 1.442695
        %v655 = vpow.pop %v654
        %v656 = vmul.f32 %v608, 1.442695
        %v657 = vpow.pop %v656
        %v658 = vmul.f32 %v609, 1.442695
        %v659 = vpow.pop %v658
        %v660 = vmul.f32 %v610, 1.442695
        %v661 = vpow.pop %v660
        %v662 = vmul.f32 %v611, 1.442695
        %v663 = vpow.pop %v662
        %v664 = vmul.f32 %v612, 1.442695
        %v665 = vpow.pop %v664
        %v666 = vmul.f32 %v613, 1.442695
        %v667 = vpow.pop %v666
        %v668 = vmul.f32 %v614, 1.442695
        %v669 = vpow.pop %v668
        %v670 = vmul.f32 %v615, 1.442695
        %v671 = vpow.pop %v670
        %v672 = vmul.f32 %v616, 1.442695
        %v673 = vpow.pop %v672
        %v674 = vmul.f32 %v617, 1.442695
        %v675 = vpow.pop %v674
        %v676 = vmul.f32 %v618, 1.442695
        %v677 = vpow.pop %v676
        %v678 = vmul.f32 %v619, 1.442695
        %v679 = vpow.pop %v678
        %v680 = vmul.f32 %v620, 1.442695
        %v681 = vpow.pop %v680
        %v682 = vmul.f32 %v621, 1.442695
        %v683 = vpow.pop %v682
        %v684 = vmul.f32 %v622, 1.442695
        %v685 = vpow.pop %v684
        %v686 = vmul.f32 %v623, 1.442695
        %v687 = vpow.pop %v686
        %v688 = vadd.f32 %v625, 1.0
        %v689 = vadd.f32 %v627, 1.0
        %v690 = vadd.f32 %v629, 1.0
        %v691 = vadd.f32 %v631, 1.0
        %v692 = vadd.f32 %v633, 1.0
        %v693 = vadd.f32 %v635, 1.0
        %v694 = vadd.f32 %v637, 1.0
        %v695 = vadd.f32 %v639, 1.0
        %v696 = vadd.f32 %v641, 1.0
        %v697 = vadd.f32 %v643, 1.0
        %v698 = vadd.f32 %v645, 1.0
        %v699 = vadd.f32 %v647, 1.0
        %v700 = vadd.f32 %v649, 1.0
        %v701 = vadd.f32 %v651, 1.0
        %v702 = vadd.f32 %v653, 1.0
        %v703 = vadd.f32 %v655, 1.0
        %v704 = vadd.f32 %v657, 1.0
        %v705 = vadd.f32 %v659, 1.0
        %v706 = vadd.f32 %v661, 1.0
        %v707 = vadd.f32 %v663, 1.0
        %v708 = vadd.f32 %v665, 1.0
        %v709 = vadd.f32 %v667, 1.0
        %v710 = vadd.f32 %v669, 1.0
        %v711 = vadd.f32 %v671, 1.0
        %v712 = vadd.f32 %v673, 1.0
        %v713 = vadd.f32 %v675, 1.0
        %v714 = vadd.f32 %v677, 1.0
        %v715 = vadd.f32 %v679, 1.0
        %v716 = vadd.f32 %v681, 1.0
        %v717 = vadd.f32 %v683, 1.0
        %v718 = vadd.f32 %v685, 1.0
        %v719 = vadd.f32 %v687, 1.0
        %v720 = vmul.f32 %v688, %v688
        %v721 = vmul.f32 %v689, %v689
        %v722 = vmul.f32 %v690, %v690
        %v723 = vmul.f32 %v691, %v691
        %v724 = vmul.f32 %v692, %v692
        %v725 = vmul.f32 %v693, %v693
        %v726 = vmul.f32 %v694, %v694
        %v727 = vmul.f32 %v695, %v695
        %v728 = vmul.f32 %v696, %v696
        %v729 = vmul.f32 %v697, %v697
        %v730 = vmul.f32 %v698, %v698
        %v731 = vmul.f32 %v699, %v699
        %v732 = vmul.f32 %v700, %v700
        %v733 = vmul.f32 %v701, %v701
        %v734 = vmul.f32 %v702, %v702
        %v735 = vmul.f32 %v703, %v703
        %v736 = vmul.f32 %v704, %v704
        %v737 = vmul.f32 %v705, %v705
        %v738 = vmul.f32 %v706, %v706
        %v739 = vmul.f32 %v707, %v707
        %v740 = vmul.f32 %v708, %v708
        %v741 = vmul.f32 %v709, %v709
        %v742 = vmul.f32 %v710, %v710
        %v743 = vmul.f32 %v711, %v711
        %v744 = vmul.f32 %v712, %v712
        %v745 = vmul.f32 %v713, %v713
        %v746 = vmul.f32 %v714, %v714
        %v747 = vmul.f32 %v715, %v715
        %v748 = vmul.f32 %v716, %v716
        %v749 = vmul.f32 %v717, %v717
        %v750 = vmul.f32 %v718, %v718
        %v751 = vmul.f32 %v719, %v719
        %v752 = vsub.f32 %v720, 1.0
        %v753 = vsub.f32 %v721, 1.0
        %v754 = vsub.f32 %v722, 1.0
        %v755 = vsub.f32 %v723, 1.0
        %v756 = vsub.f32 %v724, 1.0
        %v757 = vsub.f32 %v725, 1.0
        %v758 = vsub.f32 %v726, 1.0
        %v759 = vsub.f32 %v727, 1.0
        %v760 = vsub.f32 %v728, 1.0
        %v761 = vsub.f32 %v729, 1.0
        %v762 = vsub.f32 %v730, 1.0
        %v763 = vsub.f32 %v731, 1.0
        %v764 = vsub.f32 %v732, 1.0
        %v765 = vsub.f32 %v733, 1.0
        %v766 = vsub.f32 %v734, 1.0
        %v767 = vsub.f32 %v735, 1.0
        %v768 = vsub.f32 %v736, 1.0
        %v769 = vsub.f32 %v737, 1.0
        %v770 = vsub.f32 %v738, 1.0
        %v771 = vsub.f32 %v739, 1.0
        %v772 = vsub.f32 %v740, 1.0
        %v773 = vsub.f32 %v741, 1.0
        %v774 = vsub.f32 %v742, 1.0
        %v775 = vsub.f32 %v743, 1.0
        %v776 = vsub.f32 %v744, 1.0
        %v777 = vsub.f32 %v745, 1.0
        %v778 = vsub.f32 %v746, 1.0
        %v779 = vsub.f32 %v747, 1.0
        %v780 = vsub.f32 %v748, 1.0
        %v781 = vsub.f32 %v749, 1.0
        %v782 = vsub.f32 %v750, 1.0
        %v783 = vsub.f32 %v751, 1.0
        %v784 = vmul.f32 %v434, %v752
        %v785 = vmul.f32 %v439, %v753
        %v786 = vmul.f32 %v444, %v754
        %v787 = vmul.f32 %v449, %v755
        %v788 = vmul.f32 %v454, %v756
        %v789 = vmul.f32 %v459, %v757
        %v790 = vmul.f32 %v464, %v758
        %v791 = vmul.f32 %v469, %v759
        %v792 = vmul.f32 %v474, %v760
        %v793 = vmul.f32 %v479, %v761
        %v794 = vmul.f32 %v484, %v762
        %v795 = vmul.f32 %v489, %v763
        %v796 = vmul.f32 %v494, %v764
        %v797 = vmul.f32 %v499, %v765
        %v798 = vmul.f32 %v504, %v766
        %v799 = vmul.f32 %v509, %v767
        %v800 = vmul.f32 %v514, %v768
        %v801 = vmul.f32 %v519, %v769
        %v802 = vmul.f32 %v524, %v770
        %v803 = vmul.f32 %v529, %v771
        %v804 = vmul.f32 %v534, %v772
        %v805 = vmul.f32 %v539, %v773
        %v806 = vmul.f32 %v544, %v774
        %v807 = vmul.f32 %v549, %v775
        %v808 = vmul.f32 %v554, %v776
        %v809 = vmul.f32 %v559, %v777
        %v810 = vmul.f32 %v564, %v778
        %v811 = vmul.f32 %v569, %v779
        %v812 = vmul.f32 %v574, %v780
        %v813 = vmul.f32 %v579, %v781
        %v814 = vmul.f32 %v584, %v782
        %v815 = vmul.f32 %v589, %v783
        %v816 = vadd.f32 %v720, 1.0
        %v817 = vadd.f32 %v721, 1.0
        %v818 = vadd.f32 %v722, 1.0
        %v819 = vadd.f32 %v723, 1.0
        %v820 = vadd.f32 %v724, 1.0
        %v821 = vadd.f32 %v725, 1.0
        %v822 = vadd.f32 %v726, 1.0
        %v823 = vadd.f32 %v727, 1.0
        %v824 = vadd.f32 %v728, 1.0
        %v825 = vadd.f32 %v729, 1.0
        %v826 = vadd.f32 %v730, 1.0
        %v827 = vadd.f32 %v731, 1.0
        %v828 = vadd.f32 %v732, 1.0
        %v829 = vadd.f32 %v733, 1.0
        %v830 = vadd.f32 %v734, 1.0
        %v831 = vadd.f32 %v735, 1.0
        %v832 = vadd.f32 %v736, 1.0
        %v833 = vadd.f32 %v737, 1.0
        %v834 = vadd.f32 %v738, 1.0
        %v835 = vadd.f32 %v739, 1.0
        %v836 = vadd.f32 %v740, 1.0
        %v837 = vadd.f32 %v741, 1.0
        %v838 = vadd.f32 %v742, 1.0
        %v839 = vadd.f32 %v743, 1.0
        %v840 = vadd.f32 %v744, 1.0
        %v841 = vadd.f32 %v745, 1.0
        %v842 = vadd.f32 %v746, 1.0
        %v843 = vadd.f32 %v747, 1.0
        %v844 = vadd.f32 %v748, 1.0
        %v845 = vadd.f32 %v749, 1.0
        %v846 = vadd.f32 %v750, 1.0
        %v847 = vadd.f32 %v751, 1.0
        %v848 = vrcp.pop %v816
        %v849 = vrcp.pop %v817
        %v850 = vrcp.pop %v818
        %v851 = vrcp.pop %v819
        %v852 = vrcp.pop %v820
        %v853 = vrcp.pop %v821
        %v854 = vrcp.pop %v822
        %v855 = vrcp.pop %v823
        %v856 = vrcp.pop %v824
        %v857 = vrcp.pop %v825
        %v858 = vrcp.pop %v826
        %v859 = vrcp.pop %v827
        %v860 = vrcp.pop %v828
        %v861 = vrcp.pop %v829
        %v862 = vrcp.pop %v830
        %v863 = vrcp.pop %v831
        %v864 = vrcp.pop %v832
        %v865 = vrcp.pop %v833
        %v866 = vrcp.pop %v834
        %v867 = vrcp.pop %v835
        %v868 = vrcp.pop %v836
        %v869 = vrcp.pop %v837
        %v870 = vrcp.pop %v838
        %v871 = vrcp.pop %v839
        %v872 = vrcp.pop %v840
        %v873 = vrcp.pop %v841
        %v874 = vrcp.pop %v842
        %v875 = vrcp.pop %v843
        %v876 = vrcp.pop %v844
        %v877 = vrcp.pop %v845
        %v878 = vrcp.pop %v846
        %v879 = vrcp.pop %v847
        %v880 = vmul.f32 %v784, %v848
        %v881 = vmul.f32 %v785, %v849
        %v882 = vmul.f32 %v786, %v850
        %v883 = vmul.f32 %v787, %v851
        %v884 = vmul.f32 %v788, %v852
        %v885 = vmul.f32 %v789, %v853
        %v886 = vmul.f32 %v790, %v854
        %v887 = vmul.f32 %v791, %v855
        %v888 = vmul.f32 %v792, %v856
        %v889 = vmul.f32 %v793, %v857
        %v890 = vmul.f32 %v794, %v858
        %v891 = vmul.f32 %v795, %v859
        %v892 = vmul.f32 %v796, %v860
        %v893 = vmul.f32 %v797, %v861
        %v894 = vmul.f32 %v798, %v862
        %v895 = vmul.f32 %v799, %v863
        %v896 = vmul.f32 %v800, %v864
        %v897 = vmul.f32 %v801, %v865
        %v898 = vmul.f32 %v802, %v866
        %v899 = vmul.f32 %v803, %v867
        %v900 = vmul.f32 %v804, %v868
        %v901 = vmul.f32 %v805, %v869
        %v902 = vmul.f32 %v806, %v870
        %v903 = vmul.f32 %v807, %v871
        %v904 = vmul.f32 %v808, %v872
        %v905 = vmul.f32 %v809, %v873
        %v906 = vmul.f32 %v810, %v874
        %v907 = vmul.f32 %v811, %v875
        %v908 = vmul.f32 %v812, %v876
        %v909 = vmul.f32 %v813, %v877
        %v910 = vmul.f32 %v814, %v878
        %v911 = vmul.f32 %v815, %v879
        %vm912 = vcmp.gt.f32.partialorder %v434, 20.0
        %vm913 = vcmp.gt.f32.partialorder %v439, 20.0
        %vm914 = vcmp.gt.f32.partialorder %v444, 20.0
        %vm915 = vcmp.gt.f32.partialorder %v449, 20.0
        %vm916 = vcmp.gt.f32.partialorder %v454, 20.0
        %vm917 = vcmp.gt.f32.partialorder %v459, 20.0
        %vm918 = vcmp.gt.f32.partialorder %v464, 20.0
        %vm919 = vcmp.gt.f32.partialorder %v469, 20.0
        %vm920 = vcmp.gt.f32.partialorder %v474, 20.0
        %vm921 = vcmp.gt.f32.partialorder %v479, 20.0
        %vm922 = vcmp.gt.f32.partialorder %v484, 20.0
        %vm923 = vcmp.gt.f32.partialorder %v489, 20.0
        %vm924 = vcmp.gt.f32.partialorder %v494, 20.0
        %vm925 = vcmp.gt.f32.partialorder %v499, 20.0
        %vm926 = vcmp.gt.f32.partialorder %v504, 20.0
        %vm927 = vcmp.gt.f32.partialorder %v509, 20.0
        %vm928 = vcmp.gt.f32.partialorder %v514, 20.0
        %vm929 = vcmp.gt.f32.partialorder %v519, 20.0
        %vm930 = vcmp.gt.f32.partialorder %v524, 20.0
        %vm931 = vcmp.gt.f32.partialorder %v529, 20.0
        %vm932 = vcmp.gt.f32.partialorder %v534, 20.0
        %vm933 = vcmp.gt.f32.partialorder %v539, 20.0
        %vm934 = vcmp.gt.f32.partialorder %v544, 20.0
        %vm935 = vcmp.gt.f32.partialorder %v549, 20.0
        %vm936 = vcmp.gt.f32.partialorder %v554, 20.0
        %vm937 = vcmp.gt.f32.partialorder %v559, 20.0
        %vm938 = vcmp.gt.f32.partialorder %v564, 20.0
        %vm939 = vcmp.gt.f32.partialorder %v569, 20.0
        %vm940 = vcmp.gt.f32.partialorder %v574, 20.0
        %vm941 = vcmp.gt.f32.partialorder %v579, 20.0
        %vm942 = vcmp.gt.f32.partialorder %v584, 20.0
        %vm943 = vcmp.gt.f32.partialorder %v589, 20.0
        %v944 = vsel %vm912, %v434, %v880
        %v945 = vsel %vm913, %v439, %v881
        %v946 = vsel %vm914, %v444, %v882
        %v947 = vsel %vm915, %v449, %v883
        %v948 = vsel %vm916, %v454, %v884
        %v949 = vsel %vm917, %v459, %v885
        %v950 = vsel %vm918, %v464, %v886
        %v951 = vsel %vm919, %v469, %v887
        %v952 = vsel %vm920, %v474, %v888
        %v953 = vsel %vm921, %v479, %v889
        %v954 = vsel %vm922, %v484, %v890
        %v955 = vsel %vm923, %v489, %v891
        %v956 = vsel %vm924, %v494, %v892
        %v957 = vsel %vm925, %v499, %v893
        %v958 = vsel %vm926, %v504, %v894
        %v959 = vsel %vm927, %v509, %v895
        %v960 = vsel %vm928, %v514, %v896
        %v961 = vsel %vm929, %v519, %v897
        %v962 = vsel %vm930, %v524, %v898
        %v963 = vsel %vm931, %v529, %v899
        %v964 = vsel %vm932, %v534, %v900
        %v965 = vsel %vm933, %v539, %v901
        %v966 = vsel %vm934, %v544, %v902
        %v967 = vsel %vm935, %v549, %v903
        %v968 = vsel %vm936, %v554, %v904
        %v969 = vsel %vm937, %v559, %v905
        %v970 = vsel %vm938, %v564, %v906
        %v971 = vsel %vm939, %v569, %v907
        %v972 = vsel %vm940, %v574, %v908
        %v973 = vsel %vm941, %v579, %v909
        %v974 = vsel %vm942, %v584, %v910
        %v975 = vsel %vm943, %v589, %v911
        %976 = vst [vmem:[#allocation2] sm:$0xff] 0.0
        %977 = vst [vmem:[#allocation2 + $0x8] sm:$0xff] 0.0
        %978 = vst [vmem:[#allocation2 + $0x10] sm:$0x3] 0.0
        %s979 = scalar_lea.vmem [#allocation2], 408
        %980 = vst [vmem:[%s979] sm:$0xff] 0.0
        %981 = vst [vmem:[%s979 + $0x8] sm:$0xff] 0.0
        %982 = vst [vmem:[%s979 + $0x10] sm:$0x3] 0.0
        %s983 = scalar_lea.vmem [#allocation2], 24
        %984 = vst [vmem:[%s983] sm:$0x1] 0.0
        %985 = vst [vmem:[%s983 + $0x18] sm:$0x1] 0.0
        %986 = vst [vmem:[%s983 + $0x30] sm:$0x1] 0.0
        %987 = vst [vmem:[%s983 + $0x48] sm:$0x1] 0.0
        %988 = vst [vmem:[%s983 + $0x60] sm:$0x1] 0.0
        %989 = vst [vmem:[%s983 + $0x78] sm:$0x1] 0.0
        %990 = vst [vmem:[%s983 + $0x90] sm:$0x1] 0.0
        %991 = vst [vmem:[%s983 + $0xa8] sm:$0x1] 0.0
        %992 = vst [vmem:[%s983 + $0xc0] sm:$0x1] 0.0
        %993 = vst [vmem:[%s983 + $0xd8] sm:$0x1] 0.0
        %994 = vst [vmem:[%s983 + $0xf0] sm:$0x1] 0.0
        %995 = vst [vmem:[%s983 + $0x108] sm:$0x1] 0.0
        %996 = vst [vmem:[%s983 + $0x120] sm:$0x1] 0.0
        %997 = vst [vmem:[%s983 + $0x138] sm:$0x1] 0.0
        %998 = vst [vmem:[%s983 + $0x150] sm:$0x1] 0.0
        %999 = vst [vmem:[%s983 + $0x168] sm:$0x1] 0.0
        %1000 = vst [vmem:[%s983 + $0x11] sm:$0x1] 0.0
        %1001 = vst [vmem:[%s983 + $0x29] sm:$0x1] 0.0
        %1002 = vst [vmem:[%s983 + $0x41] sm:$0x1] 0.0
        %1003 = vst [vmem:[%s983 + $0x59] sm:$0x1] 0.0
        %1004 = vst [vmem:[%s983 + $0x71] sm:$0x1] 0.0
        %1005 = vst [vmem:[%s983 + $0x89] sm:$0x1] 0.0
        %1006 = vst [vmem:[%s983 + $0xa1] sm:$0x1] 0.0
        %1007 = vst [vmem:[%s983 + $0xb9] sm:$0x1] 0.0
        %1008 = vst [vmem:[%s983 + $0xd1] sm:$0x1] 0.0
        %1009 = vst [vmem:[%s983 + $0xe9] sm:$0x1] 0.0
        %1010 = vst [vmem:[%s983 + $0x101] sm:$0x1] 0.0
        %1011 = vst [vmem:[%s983 + $0x119] sm:$0x1] 0.0
        %1012 = vst [vmem:[%s983 + $0x131] sm:$0x1] 0.0
        %1013 = vst [vmem:[%s983 + $0x149] sm:$0x1] 0.0
        %1014 = vst [vmem:[%s983 + $0x161] sm:$0x1] 0.0
        %1015 = vst [vmem:[%s983 + $0x179] sm:$0x1] 0.0
        %1016 = vst [vmem:[%s983 + $0x1] sm:$0xff] %v944
        %1017 = vst [vmem:[%s983 + $0x9] sm:$0xff] %v945
        %1018 = vst [vmem:[%s983 + $0x19] sm:$0xff] %v946
        %1019 = vst [vmem:[%s983 + $0x21] sm:$0xff] %v947
        %1020 = vst [vmem:[%s983 + $0x31] sm:$0xff] %v948
        %1021 = vst [vmem:[%s983 + $0x39] sm:$0xff] %v949
        %1022 = vst [vmem:[%s983 + $0x49] sm:$0xff] %v950
        %1023 = vst [vmem:[%s983 + $0x51] sm:$0xff] %v951
        %1024 = vst [vmem:[%s983 + $0x61] sm:$0xff] %v952
        %1025 = vst [vmem:[%s983 + $0x69] sm:$0xff] %v953
        %1026 = vst [vmem:[%s983 + $0x79] sm:$0xff] %v954
        %1027 = vst [vmem:[%s983 + $0x81] sm:$0xff] %v955
        %1028 = vst [vmem:[%s983 + $0x91] sm:$0xff] %v956
        %1029 = vst [vmem:[%s983 + $0x99] sm:$0xff] %v957
        %1030 = vst [vmem:[%s983 + $0xa9] sm:$0xff] %v958
        %1031 = vst [vmem:[%s983 + $0xb1] sm:$0xff] %v959
        %1032 = vst [vmem:[%s983 + $0xc1] sm:$0xff] %v960
        %1033 = vst [vmem:[%s983 + $0xc9] sm:$0xff] %v961
        %1034 = vst [vmem:[%s983 + $0xd9] sm:$0xff] %v962
        %1035 = vst [vmem:[%s983 + $0xe1] sm:$0xff] %v963
        %1036 = vst [vmem:[%s983 + $0xf1] sm:$0xff] %v964
        %1037 = vst [vmem:[%s983 + $0xf9] sm:$0xff] %v965
        %1038 = vst [vmem:[%s983 + $0x109] sm:$0xff] %v966
        %1039 = vst [vmem:[%s983 + $0x111] sm:$0xff] %v967
        %1040 = vst [vmem:[%s983 + $0x121] sm:$0xff] %v968
        %1041 = vst [vmem:[%s983 + $0x129] sm:$0xff] %v969
        %1042 = vst [vmem:[%s983 + $0x139] sm:$0xff] %v970
        %1043 = vst [vmem:[%s983 + $0x141] sm:$0xff] %v971
        %1044 = vst [vmem:[%s983 + $0x151] sm:$0xff] %v972
        %1045 = vst [vmem:[%s983 + $0x159] sm:$0xff] %v973
        %1046 = vst [vmem:[%s983 + $0x169] sm:$0xff] %v974
        %1047 = vst [vmem:[%s983 + $0x171] sm:$0xff] %v975
        %v1048 = vld [vmem:[#allocation2] sm:$0xff]
        %v1049 = vld [vmem:[#allocation2 + $0x8] sm:$0xff]
        %v1050 = vld [vmem:[#allocation2 + $0x18] sm:$0xff]
        %v1051 = vld [vmem:[#allocation2 + $0x20] sm:$0xff]
        %v1052 = vld [vmem:[#allocation2 + $0x30] sm:$0xff]
        %v1053 = vld [vmem:[#allocation2 + $0x38] sm:$0xff]
        %v1054 = vld [vmem:[#allocation2 + $0x48] sm:$0xff]
        %v1055 = vld [vmem:[#allocation2 + $0x50] sm:$0xff]
        %v1056 = vld [vmem:[#allocation2 + $0x60] sm:$0xff]
        %v1057 = vld [vmem:[#allocation2 + $0x68] sm:$0xff]
        %v1058 = vld [vmem:[#allocation2 + $0x78] sm:$0xff]
        %v1059 = vld [vmem:[#allocation2 + $0x80] sm:$0xff]
        %v1060 = vld [vmem:[#allocation2 + $0x90] sm:$0xff]
        %v1061 = vld [vmem:[#allocation2 + $0x98] sm:$0xff]
        %v1062 = vld [vmem:[#allocation2 + $0xa8] sm:$0xff]
        %v1063 = vld [vmem:[#allocation2 + $0xb0] sm:$0xff]
        %v1064 = vld [vmem:[#allocation2 + $0xc0] sm:$0xff]
        %v1065 = vld [vmem:[#allocation2 + $0xc8] sm:$0xff]
        %v1066 = vld [vmem:[#allocation2 + $0xd8] sm:$0xff]
        %v1067 = vld [vmem:[#allocation2 + $0xe0] sm:$0xff]
        %v1068 = vld [vmem:[#allocation2 + $0xf0] sm:$0xff]
        %v1069 = vld [vmem:[#allocation2 + $0xf8] sm:$0xff]
        %v1070 = vld [vmem:[#allocation2 + $0x108] sm:$0xff]
        %v1071 = vld [vmem:[#allocation2 + $0x110] sm:$0xff]
        %v1072 = vld [vmem:[#allocation2 + $0x120] sm:$0xff]
        %v1073 = vld [vmem:[#allocation2 + $0x128] sm:$0xff]
        %v1074 = vld [vmem:[#allocation2 + $0x138] sm:$0xff]
        %v1075 = vld [vmem:[#allocation2 + $0x140] sm:$0xff]
        %v1076 = vld [vmem:[#allocation2 + $0x150] sm:$0xff]
        %v1077 = vld [vmem:[#allocation2 + $0x158] sm:$0xff]
        %v1078 = vld [vmem:[#allocation2 + $0x168] sm:$0xff]
        %v1079 = vld [vmem:[#allocation2 + $0x170] sm:$0xff]
        %1080 = vst [vmem:[#allocation3] sm:$0xff] %v1048
        %1081 = vst [vmem:[#allocation3 + $0x48] sm:$0xff] %v1049
        %1082 = vst [vmem:[#allocation3 + $0x90] sm:$0xff] %v1050
        %1083 = vst [vmem:[#allocation3 + $0xd8] sm:$0xff] %v1051
        %1084 = vst [vmem:[#allocation3 + $0x120] sm:$0xff] %v1052
        %1085 = vst [vmem:[#allocation3 + $0x168] sm:$0xff] %v1053
        %1086 = vst [vmem:[#allocation3 + $0x1b0] sm:$0xff] %v1054
        %1087 = vst [vmem:[#allocation3 + $0x1f8] sm:$0xff] %v1055
        %1088 = vst [vmem:[#allocation3 + $0x240] sm:$0xff] %v1056
        %1089 = vst [vmem:[#allocation3 + $0x288] sm:$0xff] %v1057
        %1090 = vst [vmem:[#allocation3 + $0x2d0] sm:$0xff] %v1058
        %1091 = vst [vmem:[#allocation3 + $0x318] sm:$0xff] %v1059
        %1092 = vst [vmem:[#allocation3 + $0x360] sm:$0xff] %v1060
        %1093 = vst [vmem:[#allocation3 + $0x3a8] sm:$0xff] %v1061
        %1094 = vst [vmem:[#allocation3 + $0x3f0] sm:$0xff] %v1062
        %1095 = vst [vmem:[#allocation3 + $0x438] sm:$0xff] %v1063
        %1096 = vst [vmem:[#allocation3 + $0x480] sm:$0xff] %v1064
        %1097 = vst [vmem:[#allocation3 + $0x4c8] sm:$0xff] %v1065
        %1098 = vst [vmem:[#allocation3 + $0x510] sm:$0xff] %v1066
        %1099 = vst [vmem:[#allocation3 + $0x558] sm:$0xff] %v1067
        %1100 = vst [vmem:[#allocation3 + $0x5a0] sm:$0xff] %v1068
        %1101 = vst [vmem:[#allocation3 + $0x5e8] sm:$0xff] %v1069
        %1102 = vst [vmem:[#allocation3 + $0x630] sm:$0xff] %v1070
        %1103 = vst [vmem:[#allocation3 + $0x678] sm:$0xff] %v1071
        %1104 = vst [vmem:[#allocation3 + $0x6c0] sm:$0xff] %v1072
        %1105 = vst [vmem:[#allocation3 + $0x708] sm:$0xff] %v1073
        %1106 = vst [vmem:[#allocation3 + $0x750] sm:$0xff] %v1074
        %1107 = vst [vmem:[#allocation3 + $0x798] sm:$0xff] %v1075
        %1108 = vst [vmem:[#allocation3 + $0x7e0] sm:$0xff] %v1076
        %1109 = vst [vmem:[#allocation3 + $0x828] sm:$0xff] %v1077
        %1110 = vst [vmem:[#allocation3 + $0x870] sm:$0xff] %v1078
        %1111 = vst [vmem:[#allocation3 + $0x8b8] sm:$0xff] %v1079
        %v1112 = vld [vmem:[#allocation2 + $0x1] sm:$0xff]
        %v1113 = vld [vmem:[#allocation2 + $0x9] sm:$0xff]
        %v1114 = vld [vmem:[#allocation2 + $0x19] sm:$0xff]
        %v1115 = vld [vmem:[#allocation2 + $0x21] sm:$0xff]
        %v1116 = vld [vmem:[#allocation2 + $0x31] sm:$0xff]
        %v1117 = vld [vmem:[#allocation2 + $0x39] sm:$0xff]
        %v1118 = vld [vmem:[#allocation2 + $0x49] sm:$0xff]
        %v1119 = vld [vmem:[#allocation2 + $0x51] sm:$0xff]
        %v1120 = vld [vmem:[#allocation2 + $0x61] sm:$0xff]
        %v1121 = vld [vmem:[#allocation2 + $0x69] sm:$0xff]
        %v1122 = vld [vmem:[#allocation2 + $0x79] sm:$0xff]
        %v1123 = vld [vmem:[#allocation2 + $0x81] sm:$0xff]
        %v1124 = vld [vmem:[#allocation2 + $0x91] sm:$0xff]
        %v1125 = vld [vmem:[#allocation2 + $0x99] sm:$0xff]
        %v1126 = vld [vmem:[#allocation2 + $0xa9] sm:$0xff]
        %v1127 = vld [vmem:[#allocation2 + $0xb1] sm:$0xff]
        %v1128 = vld [vmem:[#allocation2 + $0xc1] sm:$0xff]
        %v1129 = vld [vmem:[#allocation2 + $0xc9] sm:$0xff]
        %v1130 = vld [vmem:[#allocation2 + $0xd9] sm:$0xff]
        %v1131 = vld [vmem:[#allocation2 + $0xe1] sm:$0xff]
        %v1132 = vld [vmem:[#allocation2 + $0xf1] sm:$0xff]
        %v1133 = vld [vmem:[#allocation2 + $0xf9] sm:$0xff]
        %v1134 = vld [vmem:[#allocation2 + $0x109] sm:$0xff]
        %v1135 = vld [vmem:[#allocation2 + $0x111] sm:$0xff]
        %v1136 = vld [vmem:[#allocation2 + $0x121] sm:$0xff]
        %v1137 = vld [vmem:[#allocation2 + $0x129] sm:$0xff]
        %v1138 = vld [vmem:[#allocation2 + $0x139] sm:$0xff]
        %v1139 = vld [vmem:[#allocation2 + $0x141] sm:$0xff]
        %v1140 = vld [vmem:[#allocation2 + $0x151] sm:$0xff]
        %v1141 = vld [vmem:[#allocation2 + $0x159] sm:$0xff]
        %v1142 = vld [vmem:[#allocation2 + $0x169] sm:$0xff]
        %v1143 = vld [vmem:[#allocation2 + $0x171] sm:$0xff]
        %1144 = vst [vmem:[#allocation3 + $0x8] sm:$0xff] %v1112
        %1145 = vst [vmem:[#allocation3 + $0x50] sm:$0xff] %v1113
        %1146 = vst [vmem:[#allocation3 + $0x98] sm:$0xff] %v1114
        %1147 = vst [vmem:[#allocation3 + $0xe0] sm:$0xff] %v1115
        %1148 = vst [vmem:[#allocation3 + $0x128] sm:$0xff] %v1116
        %1149 = vst [vmem:[#allocation3 + $0x170] sm:$0xff] %v1117
        %1150 = vst [vmem:[#allocation3 + $0x1b8] sm:$0xff] %v1118
        %1151 = vst [vmem:[#allocation3 + $0x200] sm:$0xff] %v1119
        %1152 = vst [vmem:[#allocation3 + $0x248] sm:$0xff] %v1120
        %1153 = vst [vmem:[#allocation3 + $0x290] sm:$0xff] %v1121
        %1154 = vst [vmem:[#allocation3 + $0x2d8] sm:$0xff] %v1122
        %1155 = vst [vmem:[#allocation3 + $0x320] sm:$0xff] %v1123
        %1156 = vst [vmem:[#allocation3 + $0x368] sm:$0xff] %v1124
        %1157 = vst [vmem:[#allocation3 + $0x3b0] sm:$0xff] %v1125
        %1158 = vst [vmem:[#allocation3 + $0x3f8] sm:$0xff] %v1126
        %1159 = vst [vmem:[#allocation3 + $0x440] sm:$0xff] %v1127
        %1160 = vst [vmem:[#allocation3 + $0x488] sm:$0xff] %v1128
        %1161 = vst [vmem:[#allocation3 + $0x4d0] sm:$0xff] %v1129
        %1162 = vst [vmem:[#allocation3 + $0x518] sm:$0xff] %v1130
        %1163 = vst [vmem:[#allocation3 + $0x560] sm:$0xff] %v1131
        %1164 = vst [vmem:[#allocation3 + $0x5a8] sm:$0xff] %v1132
        %1165 = vst [vmem:[#allocation3 + $0x5f0] sm:$0xff] %v1133
        %1166 = vst [vmem:[#allocation3 + $0x638] sm:$0xff] %v1134
        %1167 = vst [vmem:[#allocation3 + $0x680] sm:$0xff] %v1135
        %1168 = vst [vmem:[#allocation3 + $0x6c8] sm:$0xff] %v1136
        %1169 = vst [vmem:[#allocation3 + $0x710] sm:$0xff] %v1137
        %1170 = vst [vmem:[#allocation3 + $0x758] sm:$0xff] %v1138
        %1171 = vst [vmem:[#allocation3 + $0x7a0] sm:$0xff] %v1139
        %1172 = vst [vmem:[#allocation3 + $0x7e8] sm:$0xff] %v1140
        %1173 = vst [vmem:[#allocation3 + $0x830] sm:$0xff] %v1141
        %1174 = vst [vmem:[#allocation3 + $0x878] sm:$0xff] %v1142
        %1175 = vst [vmem:[#allocation3 + $0x8c0] sm:$0xff] %v1143
        %v1176 = vld [vmem:[#allocation2 + $0x2] sm:$0xff]
        %v1177 = vld [vmem:[#allocation2 + $0xa] sm:$0xff]
        %v1178 = vld [vmem:[#allocation2 + $0x1a] sm:$0xff]
        %v1179 = vld [vmem:[#allocation2 + $0x22] sm:$0xff]
        %v1180 = vld [vmem:[#allocation2 + $0x32] sm:$0xff]
        %v1181 = vld [vmem:[#allocation2 + $0x3a] sm:$0xff]
        %v1182 = vld [vmem:[#allocation2 + $0x4a] sm:$0xff]
        %v1183 = vld [vmem:[#allocation2 + $0x52] sm:$0xff]
        %v1184 = vld [vmem:[#allocation2 + $0x62] sm:$0xff]
        %v1185 = vld [vmem:[#allocation2 + $0x6a] sm:$0xff]
        %v1186 = vld [vmem:[#allocation2 + $0x7a] sm:$0xff]
        %v1187 = vld [vmem:[#allocation2 + $0x82] sm:$0xff]
        %v1188 = vld [vmem:[#allocation2 + $0x92] sm:$0xff]
        %v1189 = vld [vmem:[#allocation2 + $0x9a] sm:$0xff]
        %v1190 = vld [vmem:[#allocation2 + $0xaa] sm:$0xff]
        %v1191 = vld [vmem:[#allocation2 + $0xb2] sm:$0xff]
        %v1192 = vld [vmem:[#allocation2 + $0xc2] sm:$0xff]
        %v1193 = vld [vmem:[#allocation2 + $0xca] sm:$0xff]
        %v1194 = vld [vmem:[#allocation2 + $0xda] sm:$0xff]
        %v1195 = vld [vmem:[#allocation2 + $0xe2] sm:$0xff]
        %v1196 = vld [vmem:[#allocation2 + $0xf2] sm:$0xff]
        %v1197 = vld [vmem:[#allocation2 + $0xfa] sm:$0xff]
        %v1198 = vld [vmem:[#allocation2 + $0x10a] sm:$0xff]
        %v1199 = vld [vmem:[#allocation2 + $0x112] sm:$0xff]
        %v1200 = vld [vmem:[#allocation2 + $0x122] sm:$0xff]
        %v1201 = vld [vmem:[#allocation2 + $0x12a] sm:$0xff]
        %v1202 = vld [vmem:[#allocation2 + $0x13a] sm:$0xff]
        %v1203 = vld [vmem:[#allocation2 + $0x142] sm:$0xff]
        %v1204 = vld [vmem:[#allocation2 + $0x152] sm:$0xff]
        %v1205 = vld [vmem:[#allocation2 + $0x15a] sm:$0xff]
        %v1206 = vld [vmem:[#allocation2 + $0x16a] sm:$0xff]
        %v1207 = vld [vmem:[#allocation2 + $0x172] sm:$0xff]
        %1208 = vst [vmem:[#allocation3 + $0x10] sm:$0xff] %v1176
        %1209 = vst [vmem:[#allocation3 + $0x58] sm:$0xff] %v1177
        %1210 = vst [vmem:[#allocation3 + $0xa0] sm:$0xff] %v1178
        %1211 = vst [vmem:[#allocation3 + $0xe8] sm:$0xff] %v1179
        %1212 = vst [vmem:[#allocation3 + $0x130] sm:$0xff] %v1180
        %1213 = vst [vmem:[#allocation3 + $0x178] sm:$0xff] %v1181
        %1214 = vst [vmem:[#allocation3 + $0x1c0] sm:$0xff] %v1182
        %1215 = vst [vmem:[#allocation3 + $0x208] sm:$0xff] %v1183
        %1216 = vst [vmem:[#allocation3 + $0x250] sm:$0xff] %v1184
        %1217 = vst [vmem:[#allocation3 + $0x298] sm:$0xff] %v1185
        %1218 = vst [vmem:[#allocation3 + $0x2e0] sm:$0xff] %v1186
        %1219 = vst [vmem:[#allocation3 + $0x328] sm:$0xff] %v1187
        %1220 = vst [vmem:[#allocation3 + $0x370] sm:$0xff] %v1188
        %1221 = vst [vmem:[#allocation3 + $0x3b8] sm:$0xff] %v1189
        %1222 = vst [vmem:[#allocation3 + $0x400] sm:$0xff] %v1190
        %1223 = vst [vmem:[#allocation3 + $0x448] sm:$0xff] %v1191
        %1224 = vst [vmem:[#allocation3 + $0x490] sm:$0xff] %v1192
        %1225 = vst [vmem:[#allocation3 + $0x4d8] sm:$0xff] %v1193
        %1226 = vst [vmem:[#allocation3 + $0x520] sm:$0xff] %v1194
        %1227 = vst [vmem:[#allocation3 + $0x568] sm:$0xff] %v1195
        %1228 = vst [vmem:[#allocation3 + $0x5b0] sm:$0xff] %v1196
        %1229 = vst [vmem:[#allocation3 + $0x5f8] sm:$0xff] %v1197
        %1230 = vst [vmem:[#allocation3 + $0x640] sm:$0xff] %v1198
        %1231 = vst [vmem:[#allocation3 + $0x688] sm:$0xff] %v1199
        %1232 = vst [vmem:[#allocation3 + $0x6d0] sm:$0xff] %v1200
        %1233 = vst [vmem:[#allocation3 + $0x718] sm:$0xff] %v1201
        %1234 = vst [vmem:[#allocation3 + $0x760] sm:$0xff] %v1202
        %1235 = vst [vmem:[#allocation3 + $0x7a8] sm:$0xff] %v1203
        %1236 = vst [vmem:[#allocation3 + $0x7f0] sm:$0xff] %v1204
        %1237 = vst [vmem:[#allocation3 + $0x838] sm:$0xff] %v1205
        %1238 = vst [vmem:[#allocation3 + $0x880] sm:$0xff] %v1206
        %1239 = vst [vmem:[#allocation3 + $0x8c8] sm:$0xff] %v1207
        %v1240 = vld [vmem:[%s983] sm:$0xff]
        %v1241 = vld [vmem:[%s983 + $0x8] sm:$0xff]
        %v1242 = vld [vmem:[%s983 + $0x18] sm:$0xff]
        %v1243 = vld [vmem:[%s983 + $0x20] sm:$0xff]
        %v1244 = vld [vmem:[%s983 + $0x30] sm:$0xff]
        %v1245 = vld [vmem:[%s983 + $0x38] sm:$0xff]
        %v1246 = vld [vmem:[%s983 + $0x48] sm:$0xff]
        %v1247 = vld [vmem:[%s983 + $0x50] sm:$0xff]
        %v1248 = vld [vmem:[%s983 + $0x60] sm:$0xff]
        %v1249 = vld [vmem:[%s983 + $0x68] sm:$0xff]
        %v1250 = vld [vmem:[%s983 + $0x78] sm:$0xff]
        %v1251 = vld [vmem:[%s983 + $0x80] sm:$0xff]
        %v1252 = vld [vmem:[%s983 + $0x90] sm:$0xff]
        %v1253 = vld [vmem:[%s983 + $0x98] sm:$0xff]
        %v1254 = vld [vmem:[%s983 + $0xa8] sm:$0xff]
        %v1255 = vld [vmem:[%s983 + $0xb0] sm:$0xff]
        %v1256 = vld [vmem:[%s983 + $0xc0] sm:$0xff]
        %v1257 = vld [vmem:[%s983 + $0xc8] sm:$0xff]
        %v1258 = vld [vmem:[%s983 + $0xd8] sm:$0xff]
        %v1259 = vld [vmem:[%s983 + $0xe0] sm:$0xff]
        %v1260 = vld [vmem:[%s983 + $0xf0] sm:$0xff]
        %v1261 = vld [vmem:[%s983 + $0xf8] sm:$0xff]
        %v1262 = vld [vmem:[%s983 + $0x108] sm:$0xff]
        %v1263 = vld [vmem:[%s983 + $0x110] sm:$0xff]
        %v1264 = vld [vmem:[%s983 + $0x120] sm:$0xff]
        %v1265 = vld [vmem:[%s983 + $0x128] sm:$0xff]
        %v1266 = vld [vmem:[%s983 + $0x138] sm:$0xff]
        %v1267 = vld [vmem:[%s983 + $0x140] sm:$0xff]
        %v1268 = vld [vmem:[%s983 + $0x150] sm:$0xff]
        %v1269 = vld [vmem:[%s983 + $0x158] sm:$0xff]
        %v1270 = vld [vmem:[%s983 + $0x168] sm:$0xff]
        %v1271 = vld [vmem:[%s983 + $0x170] sm:$0xff]
        %1272 = vst [vmem:[#allocation3 + $0x18] sm:$0xff] %v1240
        %1273 = vst [vmem:[#allocation3 + $0x60] sm:$0xff] %v1241
        %1274 = vst [vmem:[#allocation3 + $0xa8] sm:$0xff] %v1242
        %1275 = vst [vmem:[#allocation3 + $0xf0] sm:$0xff] %v1243
        %1276 = vst [vmem:[#allocation3 + $0x138] sm:$0xff] %v1244
        %1277 = vst [vmem:[#allocation3 + $0x180] sm:$0xff] %v1245
        %1278 = vst [vmem:[#allocation3 + $0x1c8] sm:$0xff] %v1246
        %1279 = vst [vmem:[#allocation3 + $0x210] sm:$0xff] %v1247
        %1280 = vst [vmem:[#allocation3 + $0x258] sm:$0xff] %v1248
        %1281 = vst [vmem:[#allocation3 + $0x2a0] sm:$0xff] %v1249
        %1282 = vst [vmem:[#allocation3 + $0x2e8] sm:$0xff] %v1250
        %1283 = vst [vmem:[#allocation3 + $0x330] sm:$0xff] %v1251
        %1284 = vst [vmem:[#allocation3 + $0x378] sm:$0xff] %v1252
        %1285 = vst [vmem:[#allocation3 + $0x3c0] sm:$0xff] %v1253
        %1286 = vst [vmem:[#allocation3 + $0x408] sm:$0xff] %v1254
        %1287 = vst [vmem:[#allocation3 + $0x450] sm:$0xff] %v1255
        %1288 = vst [vmem:[#allocation3 + $0x498] sm:$0xff] %v1256
        %1289 = vst [vmem:[#allocation3 + $0x4e0] sm:$0xff] %v1257
        %1290 = vst [vmem:[#allocation3 + $0x528] sm:$0xff] %v1258
        %1291 = vst [vmem:[#allocation3 + $0x570] sm:$0xff] %v1259
        %1292 = vst [vmem:[#allocation3 + $0x5b8] sm:$0xff] %v1260
        %1293 = vst [vmem:[#allocation3 + $0x600] sm:$0xff] %v1261
        %1294 = vst [vmem:[#allocation3 + $0x648] sm:$0xff] %v1262
        %1295 = vst [vmem:[#allocation3 + $0x690] sm:$0xff] %v1263
        %1296 = vst [vmem:[#allocation3 + $0x6d8] sm:$0xff] %v1264
        %1297 = vst [vmem:[#allocation3 + $0x720] sm:$0xff] %v1265
        %1298 = vst [vmem:[#allocation3 + $0x768] sm:$0xff] %v1266
        %1299 = vst [vmem:[#allocation3 + $0x7b0] sm:$0xff] %v1267
        %1300 = vst [vmem:[#allocation3 + $0x7f8] sm:$0xff] %v1268
        %1301 = vst [vmem:[#allocation3 + $0x840] sm:$0xff] %v1269
        %1302 = vst [vmem:[#allocation3 + $0x888] sm:$0xff] %v1270
        %1303 = vst [vmem:[#allocation3 + $0x8d0] sm:$0xff] %v1271
        %v1304 = vld [vmem:[%s983 + $0x1] sm:$0xff]
        %v1305 = vld [vmem:[%s983 + $0x9] sm:$0xff]
        %v1306 = vld [vmem:[%s983 + $0x19] sm:$0xff]
        %v1307 = vld [vmem:[%s983 + $0x21] sm:$0xff]
        %v1308 = vld [vmem:[%s983 + $0x31] sm:$0xff]
        %v1309 = vld [vmem:[%s983 + $0x39] sm:$0xff]
        %v1310 = vld [vmem:[%s983 + $0x49] sm:$0xff]
        %v1311 = vld [vmem:[%s983 + $0x51] sm:$0xff]
        %v1312 = vld [vmem:[%s983 + $0x61] sm:$0xff]
        %v1313 = vld [vmem:[%s983 + $0x69] sm:$0xff]
        %v1314 = vld [vmem:[%s983 + $0x79] sm:$0xff]
        %v1315 = vld [vmem:[%s983 + $0x81] sm:$0xff]
        %v1316 = vld [vmem:[%s983 + $0x91] sm:$0xff]
        %v1317 = vld [vmem:[%s983 + $0x99] sm:$0xff]
        %v1318 = vld [vmem:[%s983 + $0xa9] sm:$0xff]
        %v1319 = vld [vmem:[%s983 + $0xb1] sm:$0xff]
        %v1320 = vld [vmem:[%s983 + $0xc1] sm:$0xff]
        %v1321 = vld [vmem:[%s983 + $0xc9] sm:$0xff]
        %v1322 = vld [vmem:[%s983 + $0xd9] sm:$0xff]
        %v1323 = vld [vmem:[%s983 + $0xe1] sm:$0xff]
        %v1324 = vld [vmem:[%s983 + $0xf1] sm:$0xff]
        %v1325 = vld [vmem:[%s983 + $0xf9] sm:$0xff]
        %v1326 = vld [vmem:[%s983 + $0x109] sm:$0xff]
        %v1327 = vld [vmem:[%s983 + $0x111] sm:$0xff]
        %v1328 = vld [vmem:[%s983 + $0x121] sm:$0xff]
        %v1329 = vld [vmem:[%s983 + $0x129] sm:$0xff]
        %v1330 = vld [vmem:[%s983 + $0x139] sm:$0xff]
        %v1331 = vld [vmem:[%s983 + $0x141] sm:$0xff]
        %v1332 = vld [vmem:[%s983 + $0x151] sm:$0xff]
        %v1333 = vld [vmem:[%s983 + $0x159] sm:$0xff]
        %v1334 = vld [vmem:[%s983 + $0x169] sm:$0xff]
        %v1335 = vld [vmem:[%s983 + $0x171] sm:$0xff]
        %1336 = vst [vmem:[#allocation3 + $0x20] sm:$0xff] %v1304
        %1337 = vst [vmem:[#allocation3 + $0x68] sm:$0xff] %v1305
        %1338 = vst [vmem:[#allocation3 + $0xb0] sm:$0xff] %v1306
        %1339 = vst [vmem:[#allocation3 + $0xf8] sm:$0xff] %v1307
        %1340 = vst [vmem:[#allocation3 + $0x140] sm:$0xff] %v1308
        %1341 = vst [vmem:[#allocation3 + $0x188] sm:$0xff] %v1309
        %1342 = vst [vmem:[#allocation3 + $0x1d0] sm:$0xff] %v1310
        %1343 = vst [vmem:[#allocation3 + $0x218] sm:$0xff] %v1311
        %1344 = vst [vmem:[#allocation3 + $0x260] sm:$0xff] %v1312
        %1345 = vst [vmem:[#allocation3 + $0x2a8] sm:$0xff] %v1313
        %1346 = vst [vmem:[#allocation3 + $0x2f0] sm:$0xff] %v1314
        %1347 = vst [vmem:[#allocation3 + $0x338] sm:$0xff] %v1315
        %1348 = vst [vmem:[#allocation3 + $0x380] sm:$0xff] %v1316
        %1349 = vst [vmem:[#allocation3 + $0x3c8] sm:$0xff] %v1317
        %1350 = vst [vmem:[#allocation3 + $0x410] sm:$0xff] %v1318
        %1351 = vst [vmem:[#allocation3 + $0x458] sm:$0xff] %v1319
        %1352 = vst [vmem:[#allocation3 + $0x4a0] sm:$0xff] %v1320
        %1353 = vst [vmem:[#allocation3 + $0x4e8] sm:$0xff] %v1321
        %1354 = vst [vmem:[#allocation3 + $0x530] sm:$0xff] %v1322
        %1355 = vst [vmem:[#allocation3 + $0x578] sm:$0xff] %v1323
        %1356 = vst [vmem:[#allocation3 + $0x5c0] sm:$0xff] %v1324
        %1357 = vst [vmem:[#allocation3 + $0x608] sm:$0xff] %v1325
        %1358 = vst [vmem:[#allocation3 + $0x650] sm:$0xff] %v1326
        %1359 = vst [vmem:[#allocation3 + $0x698] sm:$0xff] %v1327
        %1360 = vst [vmem:[#allocation3 + $0x6e0] sm:$0xff] %v1328
        %1361 = vst [vmem:[#allocation3 + $0x728] sm:$0xff] %v1329
        %1362 = vst [vmem:[#allocation3 + $0x770] sm:$0xff] %v1330
        %1363 = vst [vmem:[#allocation3 + $0x7b8] sm:$0xff] %v1331
        %1364 = vst [vmem:[#allocation3 + $0x800] sm:$0xff] %v1332
        %1365 = vst [vmem:[#allocation3 + $0x848] sm:$0xff] %v1333
        %1366 = vst [vmem:[#allocation3 + $0x890] sm:$0xff] %v1334
        %1367 = vst [vmem:[#allocation3 + $0x8d8] sm:$0xff] %v1335
        %v1368 = vld [vmem:[%s983 + $0x2] sm:$0xff]
        %v1369 = vld [vmem:[%s983 + $0xa] sm:$0xff]
        %v1370 = vld [vmem:[%s983 + $0x1a] sm:$0xff]
        %v1371 = vld [vmem:[%s983 + $0x22] sm:$0xff]
        %v1372 = vld [vmem:[%s983 + $0x32] sm:$0xff]
        %v1373 = vld [vmem:[%s983 + $0x3a] sm:$0xff]
        %v1374 = vld [vmem:[%s983 + $0x4a] sm:$0xff]
        %v1375 = vld [vmem:[%s983 + $0x52] sm:$0xff]
        %v1376 = vld [vmem:[%s983 + $0x62] sm:$0xff]
        %v1377 = vld [vmem:[%s983 + $0x6a] sm:$0xff]
        %v1378 = vld [vmem:[%s983 + $0x7a] sm:$0xff]
        %v1379 = vld [vmem:[%s983 + $0x82] sm:$0xff]
        %v1380 = vld [vmem:[%s983 + $0x92] sm:$0xff]
        %v1381 = vld [vmem:[%s983 + $0x9a] sm:$0xff]
        %v1382 = vld [vmem:[%s983 + $0xaa] sm:$0xff]
        %v1383 = vld [vmem:[%s983 + $0xb2] sm:$0xff]
        %v1384 = vld [vmem:[%s983 + $0xc2] sm:$0xff]
        %v1385 = vld [vmem:[%s983 + $0xca] sm:$0xff]
        %v1386 = vld [vmem:[%s983 + $0xda] sm:$0xff]
        %v1387 = vld [vmem:[%s983 + $0xe2] sm:$0xff]
        %v1388 = vld [vmem:[%s983 + $0xf2] sm:$0xff]
        %v1389 = vld [vmem:[%s983 + $0xfa] sm:$0xff]
        %v1390 = vld [vmem:[%s983 + $0x10a] sm:$0xff]
        %v1391 = vld [vmem:[%s983 + $0x112] sm:$0xff]
        %v1392 = vld [vmem:[%s983 + $0x122] sm:$0xff]
        %v1393 = vld [vmem:[%s983 + $0x12a] sm:$0xff]
        %v1394 = vld [vmem:[%s983 + $0x13a] sm:$0xff]
        %v1395 = vld [vmem:[%s983 + $0x142] sm:$0xff]
        %v1396 = vld [vmem:[%s983 + $0x152] sm:$0xff]
        %v1397 = vld [vmem:[%s983 + $0x15a] sm:$0xff]
        %v1398 = vld [vmem:[%s983 + $0x16a] sm:$0xff]
        %v1399 = vld [vmem:[%s983 + $0x172] sm:$0xff]
        %1400 = vst [vmem:[#allocation3 + $0x28] sm:$0xff] %v1368
        %1401 = vst [vmem:[#allocation3 + $0x70] sm:$0xff] %v1369
        %1402 = vst [vmem:[#allocation3 + $0xb8] sm:$0xff] %v1370
        %1403 = vst [vmem:[#allocation3 + $0x100] sm:$0xff] %v1371
        %1404 = vst [vmem:[#allocation3 + $0x148] sm:$0xff] %v1372
        %1405 = vst [vmem:[#allocation3 + $0x190] sm:$0xff] %v1373
        %1406 = vst [vmem:[#allocation3 + $0x1d8] sm:$0xff] %v1374
        %1407 = vst [vmem:[#allocation3 + $0x220] sm:$0xff] %v1375
        %1408 = vst [vmem:[#allocation3 + $0x268] sm:$0xff] %v1376
        %1409 = vst [vmem:[#allocation3 + $0x2b0] sm:$0xff] %v1377
        %1410 = vst [vmem:[#allocation3 + $0x2f8] sm:$0xff] %v1378
        %1411 = vst [vmem:[#allocation3 + $0x340] sm:$0xff] %v1379
        %1412 = vst [vmem:[#allocation3 + $0x388] sm:$0xff] %v1380
        %1413 = vst [vmem:[#allocation3 + $0x3d0] sm:$0xff] %v1381
        %1414 = vst [vmem:[#allocation3 + $0x418] sm:$0xff] %v1382
        %1415 = vst [vmem:[#allocation3 + $0x460] sm:$0xff] %v1383
        %1416 = vst [vmem:[#allocation3 + $0x4a8] sm:$0xff] %v1384
        %1417 = vst [vmem:[#allocation3 + $0x4f0] sm:$0xff] %v1385
        %1418 = vst [vmem:[#allocation3 + $0x538] sm:$0xff] %v1386
        %1419 = vst [vmem:[#allocation3 + $0x580] sm:$0xff] %v1387
        %1420 = vst [vmem:[#allocation3 + $0x5c8] sm:$0xff] %v1388
        %1421 = vst [vmem:[#allocation3 + $0x610] sm:$0xff] %v1389
        %1422 = vst [vmem:[#allocation3 + $0x658] sm:$0xff] %v1390
        %1423 = vst [vmem:[#allocation3 + $0x6a0] sm:$0xff] %v1391
        %1424 = vst [vmem:[#allocation3 + $0x6e8] sm:$0xff] %v1392
        %1425 = vst [vmem:[#allocation3 + $0x730] sm:$0xff] %v1393
        %1426 = vst [vmem:[#allocation3 + $0x778] sm:$0xff] %v1394
        %1427 = vst [vmem:[#allocation3 + $0x7c0] sm:$0xff] %v1395
        %1428 = vst [vmem:[#allocation3 + $0x808] sm:$0xff] %v1396
        %1429 = vst [vmem:[#allocation3 + $0x850] sm:$0xff] %v1397
        %1430 = vst [vmem:[#allocation3 + $0x898] sm:$0xff] %v1398
        %1431 = vst [vmem:[#allocation3 + $0x8e0] sm:$0xff] %v1399
        %s1432 = scalar_lea.vmem [#allocation2], 48
        %v1433 = vld [vmem:[%s1432] sm:$0xff]
        %v1434 = vld [vmem:[%s1432 + $0x8] sm:$0xff]
        %v1435 = vld [vmem:[%s1432 + $0x18] sm:$0xff]
        %v1436 = vld [vmem:[%s1432 + $0x20] sm:$0xff]
        %v1437 = vld [vmem:[%s1432 + $0x30] sm:$0xff]
        %v1438 = vld [vmem:[%s1432 + $0x38] sm:$0xff]
        %v1439 = vld [vmem:[%s1432 + $0x48] sm:$0xff]
        %v1440 = vld [vmem:[%s1432 + $0x50] sm:$0xff]
        %v1441 = vld [vmem:[%s1432 + $0x60] sm:$0xff]
        %v1442 = vld [vmem:[%s1432 + $0x68] sm:$0xff]
        %v1443 = vld [vmem:[%s1432 + $0x78] sm:$0xff]
        %v1444 = vld [vmem:[%s1432 + $0x80] sm:$0xff]
        %v1445 = vld [vmem:[%s1432 + $0x90] sm:$0xff]
        %v1446 = vld [vmem:[%s1432 + $0x98] sm:$0xff]
        %v1447 = vld [vmem:[%s1432 + $0xa8] sm:$0xff]
        %v1448 = vld [vmem:[%s1432 + $0xb0] sm:$0xff]
        %v1449 = vld [vmem:[%s1432 + $0xc0] sm:$0xff]
        %v1450 = vld [vmem:[%s1432 + $0xc8] sm:$0xff]
        %v1451 = vld [vmem:[%s1432 + $0xd8] sm:$0xff]
        %v1452 = vld [vmem:[%s1432 + $0xe0] sm:$0xff]
        %v1453 = vld [vmem:[%s1432 + $0xf0] sm:$0xff]
        %v1454 = vld [vmem:[%s1432 + $0xf8] sm:$0xff]
        %v1455 = vld [vmem:[%s1432 + $0x108] sm:$0xff]
        %v1456 = vld [vmem:[%s1432 + $0x110] sm:$0xff]
        %v1457 = vld [vmem:[%s1432 + $0x120] sm:$0xff]
        %v1458 = vld [vmem:[%s1432 + $0x128] sm:$0xff]
        %v1459 = vld [vmem:[%s1432 + $0x138] sm:$0xff]
        %v1460 = vld [vmem:[%s1432 + $0x140] sm:$0xff]
        %v1461 = vld [vmem:[%s1432 + $0x150] sm:$0xff]
        %v1462 = vld [vmem:[%s1432 + $0x158] sm:$0xff]
        %v1463 = vld [vmem:[%s1432 + $0x168] sm:$0xff]
        %v1464 = vld [vmem:[%s1432 + $0x170] sm:$0xff]
        %1465 = vst [vmem:[#allocation3 + $0x30] sm:$0xff] %v1433
        %1466 = vst [vmem:[#allocation3 + $0x78] sm:$0xff] %v1434
        %1467 = vst [vmem:[#allocation3 + $0xc0] sm:$0xff] %v1435
        %1468 = vst [vmem:[#allocation3 + $0x108] sm:$0xff] %v1436
        %1469 = vst [vmem:[#allocation3 + $0x150] sm:$0xff] %v1437
        %1470 = vst [vmem:[#allocation3 + $0x198] sm:$0xff] %v1438
        %1471 = vst [vmem:[#allocation3 + $0x1e0] sm:$0xff] %v1439
        %1472 = vst [vmem:[#allocation3 + $0x228] sm:$0xff] %v1440
        %1473 = vst [vmem:[#allocation3 + $0x270] sm:$0xff] %v1441
        %1474 = vst [vmem:[#allocation3 + $0x2b8] sm:$0xff] %v1442
        %1475 = vst [vmem:[#allocation3 + $0x300] sm:$0xff] %v1443
        %1476 = vst [vmem:[#allocation3 + $0x348] sm:$0xff] %v1444
        %1477 = vst [vmem:[#allocation3 + $0x390] sm:$0xff] %v1445
        %1478 = vst [vmem:[#allocation3 + $0x3d8] sm:$0xff] %v1446
        %1479 = vst [vmem:[#allocation3 + $0x420] sm:$0xff] %v1447
        %1480 = vst [vmem:[#allocation3 + $0x468] sm:$0xff] %v1448
        %1481 = vst [vmem:[#allocation3 + $0x4b0] sm:$0xff] %v1449
        %1482 = vst [vmem:[#allocation3 + $0x4f8] sm:$0xff] %v1450
        %1483 = vst [vmem:[#allocation3 + $0x540] sm:$0xff] %v1451
        %1484 = vst [vmem:[#allocation3 + $0x588] sm:$0xff] %v1452
        %1485 = vst [vmem:[#allocation3 + $0x5d0] sm:$0xff] %v1453
        %1486 = vst [vmem:[#allocation3 + $0x618] sm:$0xff] %v1454
        %1487 = vst [vmem:[#allocation3 + $0x660] sm:$0xff] %v1455
        %1488 = vst [vmem:[#allocation3 + $0x6a8] sm:$0xff] %v1456
        %1489 = vst [vmem:[#allocation3 + $0x6f0] sm:$0xff] %v1457
        %1490 = vst [vmem:[#allocation3 + $0x738] sm:$0xff] %v1458
        %1491 = vst [vmem:[#allocation3 + $0x780] sm:$0xff] %v1459
        %1492 = vst [vmem:[#allocation3 + $0x7c8] sm:$0xff] %v1460
        %1493 = vst [vmem:[#allocation3 + $0x810] sm:$0xff] %v1461
        %1494 = vst [vmem:[#allocation3 + $0x858] sm:$0xff] %v1462
        %1495 = vst [vmem:[#allocation3 + $0x8a0] sm:$0xff] %v1463
        %1496 = vst [vmem:[#allocation3 + $0x8e8] sm:$0xff] %v1464
        %v1497 = vld [vmem:[%s1432 + $0x1] sm:$0xff]
        %v1498 = vld [vmem:[%s1432 + $0x9] sm:$0xff]
        %v1499 = vld [vmem:[%s1432 + $0x19] sm:$0xff]
        %v1500 = vld [vmem:[%s1432 + $0x21] sm:$0xff]
        %v1501 = vld [vmem:[%s1432 + $0x31] sm:$0xff]
        %v1502 = vld [vmem:[%s1432 + $0x39] sm:$0xff]
        %v1503 = vld [vmem:[%s1432 + $0x49] sm:$0xff]
        %v1504 = vld [vmem:[%s1432 + $0x51] sm:$0xff]
        %v1505 = vld [vmem:[%s1432 + $0x61] sm:$0xff]
        %v1506 = vld [vmem:[%s1432 + $0x69] sm:$0xff]
        %v1507 = vld [vmem:[%s1432 + $0x79] sm:$0xff]
        %v1508 = vld [vmem:[%s1432 + $0x81] sm:$0xff]
        %v1509 = vld [vmem:[%s1432 + $0x91] sm:$0xff]
        %v1510 = vld [vmem:[%s1432 + $0x99] sm:$0xff]
        %v1511 = vld [vmem:[%s1432 + $0xa9] sm:$0xff]
        %v1512 = vld [vmem:[%s1432 + $0xb1] sm:$0xff]
        %v1513 = vld [vmem:[%s1432 + $0xc1] sm:$0xff]
        %v1514 = vld [vmem:[%s1432 + $0xc9] sm:$0xff]
        %v1515 = vld [vmem:[%s1432 + $0xd9] sm:$0xff]
        %v1516 = vld [vmem:[%s1432 + $0xe1] sm:$0xff]
        %v1517 = vld [vmem:[%s1432 + $0xf1] sm:$0xff]
        %v1518 = vld [vmem:[%s1432 + $0xf9] sm:$0xff]
        %v1519 = vld [vmem:[%s1432 + $0x109] sm:$0xff]
        %v1520 = vld [vmem:[%s1432 + $0x111] sm:$0xff]
        %v1521 = vld [vmem:[%s1432 + $0x121] sm:$0xff]
        %v1522 = vld [vmem:[%s1432 + $0x129] sm:$0xff]
        %v1523 = vld [vmem:[%s1432 + $0x139] sm:$0xff]
        %v1524 = vld [vmem:[%s1432 + $0x141] sm:$0xff]
        %v1525 = vld [vmem:[%s1432 + $0x151] sm:$0xff]
        %v1526 = vld [vmem:[%s1432 + $0x159] sm:$0xff]
        %v1527 = vld [vmem:[%s1432 + $0x169] sm:$0xff]
        %v1528 = vld [vmem:[%s1432 + $0x171] sm:$0xff]
        %1529 = vst [vmem:[#allocation3 + $0x38] sm:$0xff] %v1497
        %1530 = vst [vmem:[#allocation3 + $0x80] sm:$0xff] %v1498
        %1531 = vst [vmem:[#allocation3 + $0xc8] sm:$0xff] %v1499
        %1532 = vst [vmem:[#allocation3 + $0x110] sm:$0xff] %v1500
        %1533 = vst [vmem:[#allocation3 + $0x158] sm:$0xff] %v1501
        %1534 = vst [vmem:[#allocation3 + $0x1a0] sm:$0xff] %v1502
        %1535 = vst [vmem:[#allocation3 + $0x1e8] sm:$0xff] %v1503
        %1536 = vst [vmem:[#allocation3 + $0x230] sm:$0xff] %v1504
        %1537 = vst [vmem:[#allocation3 + $0x278] sm:$0xff] %v1505
        %1538 = vst [vmem:[#allocation3 + $0x2c0] sm:$0xff] %v1506
        %1539 = vst [vmem:[#allocation3 + $0x308] sm:$0xff] %v1507
        %1540 = vst [vmem:[#allocation3 + $0x350] sm:$0xff] %v1508
        %1541 = vst [vmem:[#allocation3 + $0x398] sm:$0xff] %v1509
        %1542 = vst [vmem:[#allocation3 + $0x3e0] sm:$0xff] %v1510
        %1543 = vst [vmem:[#allocation3 + $0x428] sm:$0xff] %v1511
        %1544 = vst [vmem:[#allocation3 + $0x470] sm:$0xff] %v1512
        %1545 = vst [vmem:[#allocation3 + $0x4b8] sm:$0xff] %v1513
        %1546 = vst [vmem:[#allocation3 + $0x500] sm:$0xff] %v1514
        %1547 = vst [vmem:[#allocation3 + $0x548] sm:$0xff] %v1515
        %1548 = vst [vmem:[#allocation3 + $0x590] sm:$0xff] %v1516
        %1549 = vst [vmem:[#allocation3 + $0x5d8] sm:$0xff] %v1517
        %1550 = vst [vmem:[#allocation3 + $0x620] sm:$0xff] %v1518
        %1551 = vst [vmem:[#allocation3 + $0x668] sm:$0xff] %v1519
        %1552 = vst [vmem:[#allocation3 + $0x6b0] sm:$0xff] %v1520
        %1553 = vst [vmem:[#allocation3 + $0x6f8] sm:$0xff] %v1521
        %1554 = vst [vmem:[#allocation3 + $0x740] sm:$0xff] %v1522
        %1555 = vst [vmem:[#allocation3 + $0x788] sm:$0xff] %v1523
        %1556 = vst [vmem:[#allocation3 + $0x7d0] sm:$0xff] %v1524
        %1557 = vst [vmem:[#allocation3 + $0x818] sm:$0xff] %v1525
        %1558 = vst [vmem:[#allocation3 + $0x860] sm:$0xff] %v1526
        %1559 = vst [vmem:[#allocation3 + $0x8a8] sm:$0xff] %v1527
        %1560 = vst [vmem:[#allocation3 + $0x8f0] sm:$0xff] %v1528
        %v1561 = vld [vmem:[%s1432 + $0x2] sm:$0xff]
        %v1562 = vld [vmem:[%s1432 + $0xa] sm:$0xff]
        %v1563 = vld [vmem:[%s1432 + $0x1a] sm:$0xff]
        %v1564 = vld [vmem:[%s1432 + $0x22] sm:$0xff]
        %v1565 = vld [vmem:[%s1432 + $0x32] sm:$0xff]
        %v1566 = vld [vmem:[%s1432 + $0x3a] sm:$0xff]
        %v1567 = vld [vmem:[%s1432 + $0x4a] sm:$0xff]
        %v1568 = vld [vmem:[%s1432 + $0x52] sm:$0xff]
        %v1569 = vld [vmem:[%s1432 + $0x62] sm:$0xff]
        %v1570 = vld [vmem:[%s1432 + $0x6a] sm:$0xff]
        %v1571 = vld [vmem:[%s1432 + $0x7a] sm:$0xff]
        %v1572 = vld [vmem:[%s1432 + $0x82] sm:$0xff]
        %v1573 = vld [vmem:[%s1432 + $0x92] sm:$0xff]
        %v1574 = vld [vmem:[%s1432 + $0x9a] sm:$0xff]
        %v1575 = vld [vmem:[%s1432 + $0xaa] sm:$0xff]
        %v1576 = vld [vmem:[%s1432 + $0xb2] sm:$0xff]
        %v1577 = vld [vmem:[%s1432 + $0xc2] sm:$0xff]
        %v1578 = vld [vmem:[%s1432 + $0xca] sm:$0xff]
        %v1579 = vld [vmem:[%s1432 + $0xda] sm:$0xff]
        %v1580 = vld [vmem:[%s1432 + $0xe2] sm:$0xff]
        %v1581 = vld [vmem:[%s1432 + $0xf2] sm:$0xff]
        %v1582 = vld [vmem:[%s1432 + $0xfa] sm:$0xff]
        %v1583 = vld [vmem:[%s1432 + $0x10a] sm:$0xff]
        %v1584 = vld [vmem:[%s1432 + $0x112] sm:$0xff]
        %v1585 = vld [vmem:[%s1432 + $0x122] sm:$0xff]
        %v1586 = vld [vmem:[%s1432 + $0x12a] sm:$0xff]
        %v1587 = vld [vmem:[%s1432 + $0x13a] sm:$0xff]
        %v1588 = vld [vmem:[%s1432 + $0x142] sm:$0xff]
        %v1589 = vld [vmem:[%s1432 + $0x152] sm:$0xff]
        %v1590 = vld [vmem:[%s1432 + $0x15a] sm:$0xff]
        %v1591 = vld [vmem:[%s1432 + $0x16a] sm:$0xff]
        %v1592 = vld [vmem:[%s1432 + $0x172] sm:$0xff]
        %1593 = vst [vmem:[#allocation3 + $0x40] sm:$0xff] %v1561
        %1594 = vst [vmem:[#allocation3 + $0x88] sm:$0xff] %v1562
        %1595 = vst [vmem:[#allocation3 + $0xd0] sm:$0xff] %v1563
        %1596 = vst [vmem:[#allocation3 + $0x118] sm:$0xff] %v1564
        %1597 = vst [vmem:[#allocation3 + $0x160] sm:$0xff] %v1565
        %1598 = vst [vmem:[#allocation3 + $0x1a8] sm:$0xff] %v1566
        %1599 = vst [vmem:[#allocation3 + $0x1f0] sm:$0xff] %v1567
        %1600 = vst [vmem:[#allocation3 + $0x238] sm:$0xff] %v1568
        %1601 = vst [vmem:[#allocation3 + $0x280] sm:$0xff] %v1569
        %1602 = vst [vmem:[#allocation3 + $0x2c8] sm:$0xff] %v1570
        %1603 = vst [vmem:[#allocation3 + $0x310] sm:$0xff] %v1571
        %1604 = vst [vmem:[#allocation3 + $0x358] sm:$0xff] %v1572
        %1605 = vst [vmem:[#allocation3 + $0x3a0] sm:$0xff] %v1573
        %1606 = vst [vmem:[#allocation3 + $0x3e8] sm:$0xff] %v1574
        %1607 = vst [vmem:[#allocation3 + $0x430] sm:$0xff] %v1575
        %1608 = vst [vmem:[#allocation3 + $0x478] sm:$0xff] %v1576
        %1609 = vst [vmem:[#allocation3 + $0x4c0] sm:$0xff] %v1577
        %1610 = vst [vmem:[#allocation3 + $0x508] sm:$0xff] %v1578
        %1611 = vst [vmem:[#allocation3 + $0x550] sm:$0xff] %v1579
        %1612 = vst [vmem:[#allocation3 + $0x598] sm:$0xff] %v1580
        %1613 = vst [vmem:[#allocation3 + $0x5e0] sm:$0xff] %v1581
        %1614 = vst [vmem:[#allocation3 + $0x628] sm:$0xff] %v1582
        %1615 = vst [vmem:[#allocation3 + $0x670] sm:$0xff] %v1583
        %1616 = vst [vmem:[#allocation3 + $0x6b8] sm:$0xff] %v1584
        %1617 = vst [vmem:[#allocation3 + $0x700] sm:$0xff] %v1585
        %1618 = vst [vmem:[#allocation3 + $0x748] sm:$0xff] %v1586
        %1619 = vst [vmem:[#allocation3 + $0x790] sm:$0xff] %v1587
        %1620 = vst [vmem:[#allocation3 + $0x7d8] sm:$0xff] %v1588
        %1621 = vst [vmem:[#allocation3 + $0x820] sm:$0xff] %v1589
        %1622 = vst [vmem:[#allocation3 + $0x868] sm:$0xff] %v1590
        %1623 = vst [vmem:[#allocation3 + $0x8b0] sm:$0xff] %v1591
        %1624 = vst [vmem:[#allocation3 + $0x8f8] sm:$0xff] %v1592
        %v1625 = vld [vmem:[#allocation3] sm:$0xff]
        %v1626 = vld [vmem:[#allocation3 + $0x8] sm:$0xff]
        %v1627 = vld [vmem:[#allocation3 + $0x10] sm:$0xff]
        %v1628 = vld [vmem:[#allocation3 + $0x18] sm:$0xff]
        %v1629 = vld [vmem:[#allocation3 + $0x20] sm:$0xff]
        %v1630 = vld [vmem:[#allocation3 + $0x28] sm:$0xff]
        %v1631 = vld [vmem:[#allocation3 + $0x30] sm:$0xff]
        %v1632 = vld [vmem:[#allocation3 + $0x38] sm:$0xff]
        %v1633 = vld [vmem:[#allocation3 + $0x40] sm:$0xff]
        %v1634 = vld [vmem:[#allocation3 + $0x48] sm:$0xff]
        %v1635 = vld [vmem:[#allocation3 + $0x50] sm:$0xff]
        %v1636 = vld [vmem:[#allocation3 + $0x58] sm:$0xff]
        %v1637 = vld [vmem:[#allocation3 + $0x60] sm:$0xff]
        %v1638 = vld [vmem:[#allocation3 + $0x68] sm:$0xff]
        %v1639 = vld [vmem:[#allocation3 + $0x70] sm:$0xff]
        %v1640 = vld [vmem:[#allocation3 + $0x78] sm:$0xff]
        %v1641 = vld [vmem:[#allocation3 + $0x80] sm:$0xff]
        %v1642 = vld [vmem:[#allocation3 + $0x88] sm:$0xff]
        %v1643 = vld [vmem:[#allocation3 + $0x90] sm:$0xff]
        %v1644 = vld [vmem:[#allocation3 + $0x98] sm:$0xff]
        %v1645 = vld [vmem:[#allocation3 + $0xa0] sm:$0xff]
        %v1646 = vld [vmem:[#allocation3 + $0xa8] sm:$0xff]
        %v1647 = vld [vmem:[#allocation3 + $0xb0] sm:$0xff]
        %v1648 = vld [vmem:[#allocation3 + $0xb8] sm:$0xff]
        %v1649 = vld [vmem:[#allocation3 + $0xc0] sm:$0xff]
        %v1650 = vld [vmem:[#allocation3 + $0xc8] sm:$0xff]
        %v1651 = vld [vmem:[#allocation3 + $0xd0] sm:$0xff]
        %v1652 = vld [vmem:[#allocation3 + $0xd8] sm:$0xff]
        %v1653 = vld [vmem:[#allocation3 + $0xe0] sm:$0xff]
        %v1654 = vld [vmem:[#allocation3 + $0xe8] sm:$0xff]
        %v1655 = vld [vmem:[#allocation3 + $0xf0] sm:$0xff]
        %v1656 = vld [vmem:[#allocation3 + $0xf8] sm:$0xff]
        %v1657 = vld [vmem:[#allocation3 + $0x100] sm:$0xff]
        %v1658 = vld [vmem:[#allocation3 + $0x108] sm:$0xff]
        %v1659 = vld [vmem:[#allocation3 + $0x110] sm:$0xff]
        %v1660 = vld [vmem:[#allocation3 + $0x118] sm:$0xff]
        %v1661 = vld [vmem:[#allocation3 + $0x120] sm:$0xff]
        %v1662 = vld [vmem:[#allocation3 + $0x128] sm:$0xff]
        %v1663 = vld [vmem:[#allocation3 + $0x130] sm:$0xff]
        %v1664 = vld [vmem:[#allocation3 + $0x138] sm:$0xff]
        %v1665 = vld [vmem:[#allocation3 + $0x140] sm:$0xff]
        %v1666 = vld [vmem:[#allocation3 + $0x148] sm:$0xff]
        %v1667 = vld [vmem:[#allocation3 + $0x150] sm:$0xff]
        %v1668 = vld [vmem:[#allocation3 + $0x158] sm:$0xff]
        %v1669 = vld [vmem:[#allocation3 + $0x160] sm:$0xff]
        %v1670 = vld [vmem:[#allocation3 + $0x168] sm:$0xff]
        %v1671 = vld [vmem:[#allocation3 + $0x170] sm:$0xff]
        %v1672 = vld [vmem:[#allocation3 + $0x178] sm:$0xff]
        %v1673 = vld [vmem:[#allocation3 + $0x180] sm:$0xff]
        %v1674 = vld [vmem:[#allocation3 + $0x188] sm:$0xff]
        %v1675 = vld [vmem:[#allocation3 + $0x190] sm:$0xff]
        %v1676 = vld [vmem:[#allocation3 + $0x198] sm:$0xff]
        %v1677 = vld [vmem:[#allocation3 + $0x1a0] sm:$0xff]
        %v1678 = vld [vmem:[#allocation3 + $0x1a8] sm:$0xff]
        %v1679 = vld [vmem:[#allocation3 + $0x1b0] sm:$0xff]
        %v1680 = vld [vmem:[#allocation3 + $0x1b8] sm:$0xff]
        %v1681 = vld [vmem:[#allocation3 + $0x1c0] sm:$0xff]
        %v1682 = vld [vmem:[#allocation3 + $0x1c8] sm:$0xff]
        %v1683 = vld [vmem:[#allocation3 + $0x1d0] sm:$0xff]
        %v1684 = vld [vmem:[#allocation3 + $0x1d8] sm:$0xff]
        %v1685 = vld [vmem:[#allocation3 + $0x1e0] sm:$0xff]
        %v1686 = vld [vmem:[#allocation3 + $0x1e8] sm:$0xff]
        %v1687 = vld [vmem:[#allocation3 + $0x1f0] sm:$0xff]
        %v1688 = vld [vmem:[#allocation3 + $0x1f8] sm:$0xff]
        %v1689 = vld [vmem:[#allocation3 + $0x200] sm:$0xff]
        %v1690 = vld [vmem:[#allocation3 + $0x208] sm:$0xff]
        %v1691 = vld [vmem:[#allocation3 + $0x210] sm:$0xff]
        %v1692 = vld [vmem:[#allocation3 + $0x218] sm:$0xff]
        %v1693 = vld [vmem:[#allocation3 + $0x220] sm:$0xff]
        %v1694 = vld [vmem:[#allocation3 + $0x228] sm:$0xff]
        %v1695 = vld [vmem:[#allocation3 + $0x230] sm:$0xff]
        %v1696 = vld [vmem:[#allocation3 + $0x238] sm:$0xff]
        %v1697 = vld [vmem:[#allocation3 + $0x240] sm:$0xff]
        %v1698 = vld [vmem:[#allocation3 + $0x248] sm:$0xff]
        %v1699 = vld [vmem:[#allocation3 + $0x250] sm:$0xff]
        %v1700 = vld [vmem:[#allocation3 + $0x258] sm:$0xff]
        %v1701 = vld [vmem:[#allocation3 + $0x260] sm:$0xff]
        %v1702 = vld [vmem:[#allocation3 + $0x268] sm:$0xff]
        %v1703 = vld [vmem:[#allocation3 + $0x270] sm:$0xff]
        %v1704 = vld [vmem:[#allocation3 + $0x278] sm:$0xff]
        %v1705 = vld [vmem:[#allocation3 + $0x280] sm:$0xff]
        %v1706 = vld [vmem:[#allocation3 + $0x288] sm:$0xff]
        %v1707 = vld [vmem:[#allocation3 + $0x290] sm:$0xff]
        %v1708 = vld [vmem:[#allocation3 + $0x298] sm:$0xff]
        %v1709 = vld [vmem:[#allocation3 + $0x2a0] sm:$0xff]
        %v1710 = vld [vmem:[#allocation3 + $0x2a8] sm:$0xff]
        %v1711 = vld [vmem:[#allocation3 + $0x2b0] sm:$0xff]
        %v1712 = vld [vmem:[#allocation3 + $0x2b8] sm:$0xff]
        %v1713 = vld [vmem:[#allocation3 + $0x2c0] sm:$0xff]
        %v1714 = vld [vmem:[#allocation3 + $0x2c8] sm:$0xff]
        %v1715 = vld [vmem:[#allocation3 + $0x2d0] sm:$0xff]
        %v1716 = vld [vmem:[#allocation3 + $0x2d8] sm:$0xff]
        %v1717 = vld [vmem:[#allocation3 + $0x2e0] sm:$0xff]
        %v1718 = vld [vmem:[#allocation3 + $0x2e8] sm:$0xff]
        %v1719 = vld [vmem:[#allocation3 + $0x2f0] sm:$0xff]
        %v1720 = vld [vmem:[#allocation3 + $0x2f8] sm:$0xff]
        %v1721 = vld [vmem:[#allocation3 + $0x300] sm:$0xff]
        %v1722 = vld [vmem:[#allocation3 + $0x308] sm:$0xff]
        %v1723 = vld [vmem:[#allocation3 + $0x310] sm:$0xff]
        %v1724 = vld [vmem:[#allocation3 + $0x318] sm:$0xff]
        %v1725 = vld [vmem:[#allocation3 + $0x320] sm:$0xff]
        %v1726 = vld [vmem:[#allocation3 + $0x328] sm:$0xff]
        %v1727 = vld [vmem:[#allocation3 + $0x330] sm:$0xff]
        %v1728 = vld [vmem:[#allocation3 + $0x338] sm:$0xff]
        %v1729 = vld [vmem:[#allocation3 + $0x340] sm:$0xff]
        %v1730 = vld [vmem:[#allocation3 + $0x348] sm:$0xff]
        %v1731 = vld [vmem:[#allocation3 + $0x350] sm:$0xff]
        %v1732 = vld [vmem:[#allocation3 + $0x358] sm:$0xff]
        %v1733 = vld [vmem:[#allocation3 + $0x360] sm:$0xff]
        %v1734 = vld [vmem:[#allocation3 + $0x368] sm:$0xff]
        %v1735 = vld [vmem:[#allocation3 + $0x370] sm:$0xff]
        %v1736 = vld [vmem:[#allocation3 + $0x378] sm:$0xff]
        %v1737 = vld [vmem:[#allocation3 + $0x380] sm:$0xff]
        %v1738 = vld [vmem:[#allocation3 + $0x388] sm:$0xff]
        %v1739 = vld [vmem:[#allocation3 + $0x390] sm:$0xff]
        %v1740 = vld [vmem:[#allocation3 + $0x398] sm:$0xff]
        %v1741 = vld [vmem:[#allocation3 + $0x3a0] sm:$0xff]
        %v1742 = vld [vmem:[#allocation3 + $0x3a8] sm:$0xff]
        %v1743 = vld [vmem:[#allocation3 + $0x3b0] sm:$0xff]
        %v1744 = vld [vmem:[#allocation3 + $0x3b8] sm:$0xff]
        %v1745 = vld [vmem:[#allocation3 + $0x3c0] sm:$0xff]
        %v1746 = vld [vmem:[#allocation3 + $0x3c8] sm:$0xff]
        %v1747 = vld [vmem:[#allocation3 + $0x3d0] sm:$0xff]
        %v1748 = vld [vmem:[#allocation3 + $0x3d8] sm:$0xff]
        %v1749 = vld [vmem:[#allocation3 + $0x3e0] sm:$0xff]
        %v1750 = vld [vmem:[#allocation3 + $0x3e8] sm:$0xff]
        %v1751 = vld [vmem:[#allocation3 + $0x3f0] sm:$0xff]
        %v1752 = vld [vmem:[#allocation3 + $0x3f8] sm:$0xff]
        %v1753 = vld [vmem:[#allocation3 + $0x400] sm:$0xff]
        %v1754 = vld [vmem:[#allocation3 + $0x408] sm:$0xff]
        %v1755 = vld [vmem:[#allocation3 + $0x410] sm:$0xff]
        %v1756 = vld [vmem:[#allocation3 + $0x418] sm:$0xff]
        %v1757 = vld [vmem:[#allocation3 + $0x420] sm:$0xff]
        %v1758 = vld [vmem:[#allocation3 + $0x428] sm:$0xff]
        %v1759 = vld [vmem:[#allocation3 + $0x430] sm:$0xff]
        %v1760 = vld [vmem:[#allocation3 + $0x438] sm:$0xff]
        %v1761 = vld [vmem:[#allocation3 + $0x440] sm:$0xff]
        %v1762 = vld [vmem:[#allocation3 + $0x448] sm:$0xff]
        %v1763 = vld [vmem:[#allocation3 + $0x450] sm:$0xff]
        %v1764 = vld [vmem:[#allocation3 + $0x458] sm:$0xff]
        %v1765 = vld [vmem:[#allocation3 + $0x460] sm:$0xff]
        %v1766 = vld [vmem:[#allocation3 + $0x468] sm:$0xff]
        %v1767 = vld [vmem:[#allocation3 + $0x470] sm:$0xff]
        %v1768 = vld [vmem:[#allocation3 + $0x478] sm:$0xff]
        %v1769 = vld [vmem:[#allocation3 + $0x480] sm:$0xff]
        %v1770 = vld [vmem:[#allocation3 + $0x488] sm:$0xff]
        %v1771 = vld [vmem:[#allocation3 + $0x490] sm:$0xff]
        %v1772 = vld [vmem:[#allocation3 + $0x498] sm:$0xff]
        %v1773 = vld [vmem:[#allocation3 + $0x4a0] sm:$0xff]
        %v1774 = vld [vmem:[#allocation3 + $0x4a8] sm:$0xff]
        %v1775 = vld [vmem:[#allocation3 + $0x4b0] sm:$0xff]
        %v1776 = vld [vmem:[#allocation3 + $0x4b8] sm:$0xff]
        %v1777 = vld [vmem:[#allocation3 + $0x4c0] sm:$0xff]
        %v1778 = vld [vmem:[#allocation3 + $0x4c8] sm:$0xff]
        %v1779 = vld [vmem:[#allocation3 + $0x4d0] sm:$0xff]
        %v1780 = vld [vmem:[#allocation3 + $0x4d8] sm:$0xff]
        %v1781 = vld [vmem:[#allocation3 + $0x4e0] sm:$0xff]
        %v1782 = vld [vmem:[#allocation3 + $0x4e8] sm:$0xff]
        %v1783 = vld [vmem:[#allocation3 + $0x4f0] sm:$0xff]
        %v1784 = vld [vmem:[#allocation3 + $0x4f8] sm:$0xff]
        %v1785 = vld [vmem:[#allocation3 + $0x500] sm:$0xff]
        %v1786 = vld [vmem:[#allocation3 + $0x508] sm:$0xff]
        %v1787 = vld [vmem:[#allocation3 + $0x510] sm:$0xff]
        %v1788 = vld [vmem:[#allocation3 + $0x518] sm:$0xff]
        %v1789 = vld [vmem:[#allocation3 + $0x520] sm:$0xff]
        %v1790 = vld [vmem:[#allocation3 + $0x528] sm:$0xff]
        %v1791 = vld [vmem:[#allocation3 + $0x530] sm:$0xff]
        %v1792 = vld [vmem:[#allocation3 + $0x538] sm:$0xff]
        %v1793 = vld [vmem:[#allocation3 + $0x540] sm:$0xff]
        %v1794 = vld [vmem:[#allocation3 + $0x548] sm:$0xff]
        %v1795 = vld [vmem:[#allocation3 + $0x550] sm:$0xff]
        %v1796 = vld [vmem:[#allocation3 + $0x558] sm:$0xff]
        %v1797 = vld [vmem:[#allocation3 + $0x560] sm:$0xff]
        %v1798 = vld [vmem:[#allocation3 + $0x568] sm:$0xff]
        %v1799 = vld [vmem:[#allocation3 + $0x570] sm:$0xff]
        %v1800 = vld [vmem:[#allocation3 + $0x578] sm:$0xff]
        %v1801 = vld [vmem:[#allocation3 + $0x580] sm:$0xff]
        %v1802 = vld [vmem:[#allocation3 + $0x588] sm:$0xff]
        %v1803 = vld [vmem:[#allocation3 + $0x590] sm:$0xff]
        %v1804 = vld [vmem:[#allocation3 + $0x598] sm:$0xff]
        %v1805 = vld [vmem:[#allocation3 + $0x5a0] sm:$0xff]
        %v1806 = vld [vmem:[#allocation3 + $0x5a8] sm:$0xff]
        %v1807 = vld [vmem:[#allocation3 + $0x5b0] sm:$0xff]
        %v1808 = vld [vmem:[#allocation3 + $0x5b8] sm:$0xff]
        %v1809 = vld [vmem:[#allocation3 + $0x5c0] sm:$0xff]
        %v1810 = vld [vmem:[#allocation3 + $0x5c8] sm:$0xff]
        %v1811 = vld [vmem:[#allocation3 + $0x5d0] sm:$0xff]
        %v1812 = vld [vmem:[#allocation3 + $0x5d8] sm:$0xff]
        %v1813 = vld [vmem:[#allocation3 + $0x5e0] sm:$0xff]
        %v1814 = vld [vmem:[#allocation3 + $0x5e8] sm:$0xff]
        %v1815 = vld [vmem:[#allocation3 + $0x5f0] sm:$0xff]
        %v1816 = vld [vmem:[#allocation3 + $0x5f8] sm:$0xff]
        %v1817 = vld [vmem:[#allocation3 + $0x600] sm:$0xff]
        %v1818 = vld [vmem:[#allocation3 + $0x608] sm:$0xff]
        %v1819 = vld [vmem:[#allocation3 + $0x610] sm:$0xff]
        %v1820 = vld [vmem:[#allocation3 + $0x618] sm:$0xff]
        %v1821 = vld [vmem:[#allocation3 + $0x620] sm:$0xff]
        %v1822 = vld [vmem:[#allocation3 + $0x628] sm:$0xff]
        %v1823 = vld [vmem:[#allocation3 + $0x630] sm:$0xff]
        %v1824 = vld [vmem:[#allocation3 + $0x638] sm:$0xff]
        %v1825 = vld [vmem:[#allocation3 + $0x640] sm:$0xff]
        %v1826 = vld [vmem:[#allocation3 + $0x648] sm:$0xff]
        %v1827 = vld [vmem:[#allocation3 + $0x650] sm:$0xff]
        %v1828 = vld [vmem:[#allocation3 + $0x658] sm:$0xff]
        %v1829 = vld [vmem:[#allocation3 + $0x660] sm:$0xff]
        %v1830 = vld [vmem:[#allocation3 + $0x668] sm:$0xff]
        %v1831 = vld [vmem:[#allocation3 + $0x670] sm:$0xff]
        %v1832 = vld [vmem:[#allocation3 + $0x678] sm:$0xff]
        %v1833 = vld [vmem:[#allocation3 + $0x680] sm:$0xff]
        %v1834 = vld [vmem:[#allocation3 + $0x688] sm:$0xff]
        %v1835 = vld [vmem:[#allocation3 + $0x690] sm:$0xff]
        %v1836 = vld [vmem:[#allocation3 + $0x698] sm:$0xff]
        %v1837 = vld [vmem:[#allocation3 + $0x6a0] sm:$0xff]
        %v1838 = vld [vmem:[#allocation3 + $0x6a8] sm:$0xff]
        %v1839 = vld [vmem:[#allocation3 + $0x6b0] sm:$0xff]
        %v1840 = vld [vmem:[#allocation3 + $0x6b8] sm:$0xff]
        %v1841 = vld [vmem:[#allocation3 + $0x6c0] sm:$0xff]
        %v1842 = vld [vmem:[#allocation3 + $0x6c8] sm:$0xff]
        %v1843 = vld [vmem:[#allocation3 + $0x6d0] sm:$0xff]
        %v1844 = vld [vmem:[#allocation3 + $0x6d8] sm:$0xff]
        %v1845 = vld [vmem:[#allocation3 + $0x6e0] sm:$0xff]
        %v1846 = vld [vmem:[#allocation3 + $0x6e8] sm:$0xff]
        %v1847 = vld [vmem:[#allocation3 + $0x6f0] sm:$0xff]
        %v1848 = vld [vmem:[#allocation3 + $0x6f8] sm:$0xff]
        %v1849 = vld [vmem:[#allocation3 + $0x700] sm:$0xff]
        %v1850 = vld [vmem:[#allocation3 + $0x708] sm:$0xff]
        %v1851 = vld [vmem:[#allocation3 + $0x710] sm:$0xff]
        %v1852 = vld [vmem:[#allocation3 + $0x718] sm:$0xff]
        %v1853 = vld [vmem:[#allocation3 + $0x720] sm:$0xff]
        %v1854 = vld [vmem:[#allocation3 + $0x728] sm:$0xff]
        %v1855 = vld [vmem:[#allocation3 + $0x730] sm:$0xff]
        %v1856 = vld [vmem:[#allocation3 + $0x738] sm:$0xff]
        %v1857 = vld [vmem:[#allocation3 + $0x740] sm:$0xff]
        %v1858 = vld [vmem:[#allocation3 + $0x748] sm:$0xff]
        %v1859 = vld [vmem:[#allocation3 + $0x750] sm:$0xff]
        %v1860 = vld [vmem:[#allocation3 + $0x758] sm:$0xff]
        %v1861 = vld [vmem:[#allocation3 + $0x760] sm:$0xff]
        %v1862 = vld [vmem:[#allocation3 + $0x768] sm:$0xff]
        %v1863 = vld [vmem:[#allocation3 + $0x770] sm:$0xff]
        %v1864 = vld [vmem:[#allocation3 + $0x778] sm:$0xff]
        %v1865 = vld [vmem:[#allocation3 + $0x780] sm:$0xff]
        %v1866 = vld [vmem:[#allocation3 + $0x788] sm:$0xff]
        %v1867 = vld [vmem:[#allocation3 + $0x790] sm:$0xff]
        %v1868 = vld [vmem:[#allocation3 + $0x798] sm:$0xff]
        %v1869 = vld [vmem:[#allocation3 + $0x7a0] sm:$0xff]
        %v1870 = vld [vmem:[#allocation3 + $0x7a8] sm:$0xff]
        %v1871 = vld [vmem:[#allocation3 + $0x7b0] sm:$0xff]
        %v1872 = vld [vmem:[#allocation3 + $0x7b8] sm:$0xff]
        %v1873 = vld [vmem:[#allocation3 + $0x7c0] sm:$0xff]
        %v1874 = vld [vmem:[#allocation3 + $0x7c8] sm:$0xff]
        %v1875 = vld [vmem:[#allocation3 + $0x7d0] sm:$0xff]
        %v1876 = vld [vmem:[#allocation3 + $0x7d8] sm:$0xff]
        %v1877 = vld [vmem:[#allocation3 + $0x7e0] sm:$0xff]
        %v1878 = vld [vmem:[#allocation3 + $0x7e8] sm:$0xff]
        %v1879 = vld [vmem:[#allocation3 + $0x7f0] sm:$0xff]
        %v1880 = vld [vmem:[#allocation3 + $0x7f8] sm:$0xff]
        %v1881 = vld [vmem:[#allocation3 + $0x800] sm:$0xff]
        %v1882 = vld [vmem:[#allocation3 + $0x808] sm:$0xff]
        %v1883 = vld [vmem:[#allocation3 + $0x810] sm:$0xff]
        %v1884 = vld [vmem:[#allocation3 + $0x818] sm:$0xff]
        %v1885 = vld [vmem:[#allocation3 + $0x820] sm:$0xff]
        %v1886 = vld [vmem:[#allocation3 + $0x828] sm:$0xff]
        %v1887 = vld [vmem:[#allocation3 + $0x830] sm:$0xff]
        %v1888 = vld [vmem:[#allocation3 + $0x838] sm:$0xff]
        %v1889 = vld [vmem:[#allocation3 + $0x840] sm:$0xff]
        %v1890 = vld [vmem:[#allocation3 + $0x848] sm:$0xff]
        %v1891 = vld [vmem:[#allocation3 + $0x850] sm:$0xff]
        %v1892 = vld [vmem:[#allocation3 + $0x858] sm:$0xff]
        %v1893 = vld [vmem:[#allocation3 + $0x860] sm:$0xff]
        %v1894 = vld [vmem:[#allocation3 + $0x868] sm:$0xff]
        %v1895 = vld [vmem:[#allocation3 + $0x870] sm:$0xff]
        %v1896 = vld [vmem:[#allocation3 + $0x878] sm:$0xff]
        %v1897 = vld [vmem:[#allocation3 + $0x880] sm:$0xff]
        %v1898 = vld [vmem:[#allocation3 + $0x888] sm:$0xff]
        %v1899 = vld [vmem:[#allocation3 + $0x890] sm:$0xff]
        %v1900 = vld [vmem:[#allocation3 + $0x898] sm:$0xff]
        %v1901 = vld [vmem:[#allocation3 + $0x8a0] sm:$0xff]
        %v1902 = vld [vmem:[#allocation3 + $0x8a8] sm:$0xff]
        %v1903 = vld [vmem:[#allocation3 + $0x8b0] sm:$0xff]
        %v1904 = vld [vmem:[#allocation3 + $0x8b8] sm:$0xff]
        %v1905 = vld [vmem:[#allocation3 + $0x8c0] sm:$0xff]
        %v1906 = vld [vmem:[#allocation3 + $0x8c8] sm:$0xff]
        %v1907 = vld [vmem:[#allocation3 + $0x8d0] sm:$0xff]
        %v1908 = vld [vmem:[#allocation3 + $0x8d8] sm:$0xff]
        %v1909 = vld [vmem:[#allocation3 + $0x8e0] sm:$0xff]
        %v1910 = vld [vmem:[#allocation3 + $0x8e8] sm:$0xff]
        %v1911 = vld [vmem:[#allocation3 + $0x8f0] sm:$0xff]
        %v1912 = vld [vmem:[#allocation3 + $0x8f8] sm:$0xff]
        %v1913 = vld [vmem:[%s2] sm:$0xff]
        %v1914 = vld [vmem:[%s2 + $0x8] sm:$0xff]
        %v1915 = vld [vmem:[%s2 + $0x10] sm:$0xff]
        %v1916 = vld [vmem:[%s2 + $0x18] sm:$0xff]
        %v1917 = vld [vmem:[%s2 + $0x20] sm:$0xff]
        %v1918 = vld [vmem:[%s2 + $0x28] sm:$0xff]
        %v1919 = vld [vmem:[%s2 + $0x30] sm:$0xff]
        %v1920 = vld [vmem:[%s2 + $0x38] sm:$0xff]
        %v1921 = vld [vmem:[%s2 + $0x40] sm:$0xff]
        %v1922 = vld [vmem:[%s2 + $0x48] sm:$0xff]
        %v1923 = vld [vmem:[%s2 + $0x50] sm:$0xff]
        %v1924 = vld [vmem:[%s2 + $0x58] sm:$0xff]
        %v1925 = vld [vmem:[%s2 + $0x60] sm:$0xff]
        %v1926 = vld [vmem:[%s2 + $0x68] sm:$0xff]
        %v1927 = vld [vmem:[%s2 + $0x70] sm:$0xff]
        %v1928 = vld [vmem:[%s2 + $0x78] sm:$0xff]
        %v1929 = vld [vmem:[%s2 + $0x80] sm:$0xff]
        %v1930 = vld [vmem:[%s2 + $0x88] sm:$0xff]
        %v1931 = vld [vmem:[%s2 + $0x90] sm:$0xff]
        %v1932 = vld [vmem:[%s2 + $0x98] sm:$0xff]
        %v1933 = vld [vmem:[%s2 + $0xa0] sm:$0xff]
        %v1934 = vld [vmem:[%s2 + $0xa8] sm:$0xff]
        %v1935 = vld [vmem:[%s2 + $0xb0] sm:$0xff]
        %v1936 = vld [vmem:[%s2 + $0xb8] sm:$0xff]
        %v1937 = vld [vmem:[%s2 + $0xc0] sm:$0xff]
        %v1938 = vld [vmem:[%s2 + $0xc8] sm:$0xff]
        %v1939 = vld [vmem:[%s2 + $0xd0] sm:$0xff]
        %v1940 = vld [vmem:[%s2 + $0xd8] sm:$0xff]
        %v1941 = vld [vmem:[%s2 + $0xe0] sm:$0xff]
        %v1942 = vld [vmem:[%s2 + $0xe8] sm:$0xff]
        %v1943 = vld [vmem:[%s2 + $0xf0] sm:$0xff]
        %v1944 = vld [vmem:[%s2 + $0xf8] sm:$0xff]
        %v1945 = vld [vmem:[%s2 + $0x100] sm:$0xff]
        %v1946 = vld [vmem:[%s2 + $0x108] sm:$0xff]
        %v1947 = vld [vmem:[%s2 + $0x110] sm:$0xff]
        %v1948 = vld [vmem:[%s2 + $0x118] sm:$0xff]
        %v1949 = vld [vmem:[%s2 + $0x120] sm:$0xff]
        %v1950 = vld [vmem:[%s2 + $0x128] sm:$0xff]
        %v1951 = vld [vmem:[%s2 + $0x130] sm:$0xff]
        %v1952 = vld [vmem:[%s2 + $0x138] sm:$0xff]
        %v1953 = vld [vmem:[%s2 + $0x140] sm:$0xff]
        %v1954 = vld [vmem:[%s2 + $0x148] sm:$0xff]
        %v1955 = vld [vmem:[%s2 + $0x150] sm:$0xff]
        %v1956 = vld [vmem:[%s2 + $0x158] sm:$0xff]
        %v1957 = vld [vmem:[%s2 + $0x160] sm:$0xff]
        %v1958 = vld [vmem:[%s2 + $0x168] sm:$0xff]
        %v1959 = vld [vmem:[%s2 + $0x170] sm:$0xff]
        %v1960 = vld [vmem:[%s2 + $0x178] sm:$0xff]
        %v1961 = vld [vmem:[%s2 + $0x180] sm:$0xff]
        %v1962 = vld [vmem:[%s2 + $0x188] sm:$0xff]
        %v1963 = vld [vmem:[%s2 + $0x190] sm:$0xff]
        %v1964 = vld [vmem:[%s2 + $0x198] sm:$0xff]
        %v1965 = vld [vmem:[%s2 + $0x1a0] sm:$0xff]
        %v1966 = vld [vmem:[%s2 + $0x1a8] sm:$0xff]
        %v1967 = vld [vmem:[%s2 + $0x1b0] sm:$0xff]
        %v1968 = vld [vmem:[%s2 + $0x1b8] sm:$0xff]
        %v1969 = vld [vmem:[%s2 + $0x1c0] sm:$0xff]
        %v1970 = vld [vmem:[%s2 + $0x1c8] sm:$0xff]
        %v1971 = vld [vmem:[%s2 + $0x1d0] sm:$0xff]
        %v1972 = vld [vmem:[%s2 + $0x1d8] sm:$0xff]
        %v1973 = vld [vmem:[%s2 + $0x1e0] sm:$0xff]
        %v1974 = vld [vmem:[%s2 + $0x1e8] sm:$0xff]
        %v1975 = vld [vmem:[%s2 + $0x1f0] sm:$0xff]
        %v1976 = vld [vmem:[%s2 + $0x1f8] sm:$0xff]
        %v1977 = vld [vmem:[%s2 + $0x200] sm:$0xff]
        %v1978 = vld [vmem:[%s2 + $0x208] sm:$0xff]
        %v1979 = vld [vmem:[%s2 + $0x210] sm:$0xff]
        %v1980 = vld [vmem:[%s2 + $0x218] sm:$0xff]
        %v1981 = vld [vmem:[%s2 + $0x220] sm:$0xff]
        %v1982 = vld [vmem:[%s2 + $0x228] sm:$0xff]
        %v1983 = vld [vmem:[%s2 + $0x230] sm:$0xff]
        %v1984 = vld [vmem:[%s2 + $0x238] sm:$0xff]
        %v1985 = vld [vmem:[%s2 + $0x240] sm:$0xff]
        %v1986 = vld [vmem:[%s2 + $0x248] sm:$0xff]
        %v1987 = vld [vmem:[%s2 + $0x250] sm:$0xff]
        %v1988 = vld [vmem:[%s2 + $0x258] sm:$0xff]
        %v1989 = vld [vmem:[%s2 + $0x260] sm:$0xff]
        %v1990 = vld [vmem:[%s2 + $0x268] sm:$0xff]
        %v1991 = vld [vmem:[%s2 + $0x270] sm:$0xff]
        %v1992 = vld [vmem:[%s2 + $0x278] sm:$0xff]
        %v1993 = vld [vmem:[%s2 + $0x280] sm:$0xff]
        %v1994 = vld [vmem:[%s2 + $0x288] sm:$0xff]
        %v1995 = vld [vmem:[%s2 + $0x290] sm:$0xff]
        %v1996 = vld [vmem:[%s2 + $0x298] sm:$0xff]
        %v1997 = vld [vmem:[%s2 + $0x2a0] sm:$0xff]
        %v1998 = vld [vmem:[%s2 + $0x2a8] sm:$0xff]
        %v1999 = vld [vmem:[%s2 + $0x2b0] sm:$0xff]
        %v2000 = vld [vmem:[%s2 + $0x2b8] sm:$0xff]
        %v2001 = vld [vmem:[%s2 + $0x2c0] sm:$0xff]
        %v2002 = vld [vmem:[%s2 + $0x2c8] sm:$0xff]
        %v2003 = vld [vmem:[%s2 + $0x2d0] sm:$0xff]
        %v2004 = vld [vmem:[%s2 + $0x2d8] sm:$0xff]
        %v2005 = vld [vmem:[%s2 + $0x2e0] sm:$0xff]
        %v2006 = vld [vmem:[%s2 + $0x2e8] sm:$0xff]
        %v2007 = vld [vmem:[%s2 + $0x2f0] sm:$0xff]
        %v2008 = vld [vmem:[%s2 + $0x2f8] sm:$0xff]
        %v2009 = vld [vmem:[%s2 + $0x300] sm:$0xff]
        %v2010 = vld [vmem:[%s2 + $0x308] sm:$0xff]
        %v2011 = vld [vmem:[%s2 + $0x310] sm:$0xff]
        %v2012 = vld [vmem:[%s2 + $0x318] sm:$0xff]
        %v2013 = vld [vmem:[%s2 + $0x320] sm:$0xff]
        %v2014 = vld [vmem:[%s2 + $0x328] sm:$0xff]
        %v2015 = vld [vmem:[%s2 + $0x330] sm:$0xff]
        %v2016 = vld [vmem:[%s2 + $0x338] sm:$0xff]
        %v2017 = vld [vmem:[%s2 + $0x340] sm:$0xff]
        %v2018 = vld [vmem:[%s2 + $0x348] sm:$0xff]
        %v2019 = vld [vmem:[%s2 + $0x350] sm:$0xff]
        %v2020 = vld [vmem:[%s2 + $0x358] sm:$0xff]
        %v2021 = vld [vmem:[%s2 + $0x360] sm:$0xff]
        %v2022 = vld [vmem:[%s2 + $0x368] sm:$0xff]
        %v2023 = vld [vmem:[%s2 + $0x370] sm:$0xff]
        %v2024 = vld [vmem:[%s2 + $0x378] sm:$0xff]
        %v2025 = vld [vmem:[%s2 + $0x380] sm:$0xff]
        %v2026 = vld [vmem:[%s2 + $0x388] sm:$0xff]
        %v2027 = vld [vmem:[%s2 + $0x390] sm:$0xff]
        %v2028 = vld [vmem:[%s2 + $0x398] sm:$0xff]
        %v2029 = vld [vmem:[%s2 + $0x3a0] sm:$0xff]
        %v2030 = vld [vmem:[%s2 + $0x3a8] sm:$0xff]
        %v2031 = vld [vmem:[%s2 + $0x3b0] sm:$0xff]
        %v2032 = vld [vmem:[%s2 + $0x3b8] sm:$0xff]
        %v2033 = vld [vmem:[%s2 + $0x3c0] sm:$0xff]
        %v2034 = vld [vmem:[%s2 + $0x3c8] sm:$0xff]
        %v2035 = vld [vmem:[%s2 + $0x3d0] sm:$0xff]
        %v2036 = vld [vmem:[%s2 + $0x3d8] sm:$0xff]
        %v2037 = vld [vmem:[%s2 + $0x3e0] sm:$0xff]
        %v2038 = vld [vmem:[%s2 + $0x3e8] sm:$0xff]
        %v2039 = vld [vmem:[%s2 + $0x3f0] sm:$0xff]
        %v2040 = vld [vmem:[%s2 + $0x3f8] sm:$0xff]
        %v2041 = vld [vmem:[%s2 + $0x400] sm:$0xff]
        %v2042 = vld [vmem:[%s2 + $0x408] sm:$0xff]
        %v2043 = vld [vmem:[%s2 + $0x410] sm:$0xff]
        %v2044 = vld [vmem:[%s2 + $0x418] sm:$0xff]
        %v2045 = vld [vmem:[%s2 + $0x420] sm:$0xff]
        %v2046 = vld [vmem:[%s2 + $0x428] sm:$0xff]
        %v2047 = vld [vmem:[%s2 + $0x430] sm:$0xff]
        %v2048 = vld [vmem:[%s2 + $0x438] sm:$0xff]
        %v2049 = vld [vmem:[%s2 + $0x440] sm:$0xff]
        %v2050 = vld [vmem:[%s2 + $0x448] sm:$0xff]
        %v2051 = vld [vmem:[%s2 + $0x450] sm:$0xff]
        %v2052 = vld [vmem:[%s2 + $0x458] sm:$0xff]
        %v2053 = vld [vmem:[%s2 + $0x460] sm:$0xff]
        %v2054 = vld [vmem:[%s2 + $0x468] sm:$0xff]
        %v2055 = vld [vmem:[%s2 + $0x470] sm:$0xff]
        %v2056 = vld [vmem:[%s2 + $0x478] sm:$0xff]
        %v2057 = vld [vmem:[%s4] sm:$0x1]
        %v2059 = vlaneseq
        %v2060 = vshrl.u32 %v2059, 7
        %v2061 = vsub.s32 0, %v2060
        %v2062 = vrot.slane %v2057, %v2061
        %2064 = vmatprep.subr.mxu0 0.0
        %2065 = vmatpush1.msra.mxu0 %v1928
        %2066 = vmatprep.subr.mxu0 0.0
        %2067 = vmatpush1.msra.mxu0 %v1927
        %2068 = vmatprep.subr.mxu0 0.0
        %2069 = vmatpush1.msra.mxu0 %v1926
        %2070 = vmatprep.subr.mxu0 0.0
        %2071 = vmatpush1.msra.mxu0 %v1925
        %2072 = vmatprep.subr.mxu0 0.0
        %2073 = vmatpush1.msra.mxu0 %v1924
        %2074 = vmatprep.subr.mxu0 0.0
        %2075 = vmatpush1.msra.mxu0 %v1923
        %2076 = vmatprep.subr.mxu0 0.0
        %2077 = vmatpush1.msra.mxu0 %v1922
        %2078 = vmatprep.subr.mxu0 0.0
        %2079 = vmatpush1.msra.mxu0 %v1921
        %2080 = vmatprep.subr.mxu0 0.0
        %2081 = vmatpush1.msra.mxu0 %v1920
        %2082 = vmatprep.subr.mxu0 0.0
        %2083 = vmatpush1.msra.mxu0 %v1919
        %2084 = vmatprep.subr.mxu0 0.0
        %2085 = vmatpush1.msra.mxu0 %v1918
        %2086 = vmatprep.subr.mxu0 0.0
        %2087 = vmatpush1.msra.mxu0 %v1917
        %2088 = vmatprep.subr.mxu0 0.0
        %2089 = vmatpush1.msra.mxu0 %v1916
        %2090 = vmatprep.subr.mxu0 0.0
        %2091 = vmatpush1.msra.mxu0 %v1915
        %2092 = vmatprep.subr.mxu0 0.0
        %2093 = vmatpush1.msra.mxu0 %v1914
        %2094 = vmatprep.subr.mxu0 0.0
        %2095 = vmatpush1.msra.mxu0 %v1913
        %2096 = vmatprep.subr.mxu0 0.0
        %2097 = vmatpush2.msra.mxu0 %v1944
        %2098 = vmatprep.subr.mxu0 0.0
        %2099 = vmatpush2.msra.mxu0 %v1943
        %2100 = vmatprep.subr.mxu0 0.0
        %2101 = vmatpush2.msra.mxu0 %v1942
        %2102 = vmatprep.subr.mxu0 0.0
        %2103 = vmatpush2.msra.mxu0 %v1941
        %2104 = vmatprep.subr.mxu0 0.0
        %2105 = vmatpush2.msra.mxu0 %v1940
        %2106 = vmatprep.subr.mxu0 0.0
        %2107 = vmatpush2.msra.mxu0 %v1939
        %2108 = vmatprep.subr.mxu0 0.0
        %2109 = vmatpush2.msra.mxu0 %v1938
        %2110 = vmatprep.subr.mxu0 0.0
        %2111 = vmatpush2.msra.mxu0 %v1937
        %2112 = vmatprep.subr.mxu0 0.0
        %2113 = vmatpush2.msra.mxu0 %v1936
        %2114 = vmatprep.subr.mxu0 0.0
        %2115 = vmatpush2.msra.mxu0 %v1935
        %2116 = vmatprep.subr.mxu0 0.0
        %2117 = vmatpush2.msra.mxu0 %v1934
        %2118 = vmatprep.subr.mxu0 0.0
        %2119 = vmatpush2.msra.mxu0 %v1933
        %2120 = vmatprep.subr.mxu0 0.0
        %2121 = vmatpush2.msra.mxu0 %v1932
        %2122 = vmatprep.subr.mxu0 0.0
        %2123 = vmatpush2.msra.mxu0 %v1931
        %2124 = vmatprep.subr.mxu0 0.0
        %2125 = vmatpush2.msra.mxu0 %v1930
        %2126 = vmatprep.subr.mxu0 0.0
        %2127 = vmatpush2.msra.mxu0 %v1929
        %2128 = vmatprep.mubr.f32.mxu0 %v1626
        %2129 = vmatmul.mubr.f32.gmra.mxu0 %v1625
        %v2130 = vpop.f32.mrf.mxu0
        %v2131 = vadd.f32 %v2062, %v2130
        %v2132 = vpop.f32.mrf.mxu0
        %2133 = vmatprep.mubr.f32.mxu0 %v1635
        %2134 = vmatmul.mubr.f32.gmra.mxu0 %v1634
        %v2135 = vpop.f32.mrf.mxu0
        %v2136 = vadd.f32 %v2062, %v2135
        %v2137 = vpop.f32.mrf.mxu0
        %2138 = vmatprep.mubr.f32.mxu0 %v1644
        %2139 = vmatmul.mubr.f32.gmra.mxu0 %v1643
        %v2140 = vpop.f32.mrf.mxu0
        %v2141 = vadd.f32 %v2062, %v2140
        %v2142 = vpop.f32.mrf.mxu0
        %2143 = vmatprep.mubr.f32.mxu0 %v1653
        %2144 = vmatmul.mubr.f32.gmra.mxu0 %v1652
        %v2145 = vpop.f32.mrf.mxu0
        %v2146 = vadd.f32 %v2062, %v2145
        %v2147 = vpop.f32.mrf.mxu0
        %2148 = vmatprep.mubr.f32.mxu0 %v1662
        %2149 = vmatmul.mubr.f32.gmra.mxu0 %v1661
        %v2150 = vpop.f32.mrf.mxu0
        %v2151 = vadd.f32 %v2062, %v2150
        %v2152 = vpop.f32.mrf.mxu0
        %2153 = vmatprep.mubr.f32.mxu0 %v1671
        %2154 = vmatmul.mubr.f32.gmra.mxu0 %v1670
        %v2155 = vpop.f32.mrf.mxu0
        %v2156 = vadd.f32 %v2062, %v2155
        %v2157 = vpop.f32.mrf.mxu0
        %2158 = vmatprep.mubr.f32.mxu0 %v1680
        %2159 = vmatmul.mubr.f32.gmra.mxu0 %v1679
        %v2160 = vpop.f32.mrf.mxu0
        %v2161 = vadd.f32 %v2062, %v2160
        %v2162 = vpop.f32.mrf.mxu0
        %2163 = vmatprep.mubr.f32.mxu0 %v1689
        %2164 = vmatmul.mubr.f32.gmra.mxu0 %v1688
        %v2165 = vpop.f32.mrf.mxu0
        %v2166 = vadd.f32 %v2062, %v2165
        %v2167 = vpop.f32.mrf.mxu0
        %2168 = vmatprep.mubr.f32.mxu0 %v1698
        %2169 = vmatmul.mubr.f32.gmra.mxu0 %v1697
        %v2170 = vpop.f32.mrf.mxu0
        %v2171 = vadd.f32 %v2062, %v2170
        %v2172 = vpop.f32.mrf.mxu0
        %2173 = vmatprep.mubr.f32.mxu0 %v1707
        %2174 = vmatmul.mubr.f32.gmra.mxu0 %v1706
        %v2175 = vpop.f32.mrf.mxu0
        %v2176 = vadd.f32 %v2062, %v2175
        %v2177 = vpop.f32.mrf.mxu0
        %2178 = vmatprep.mubr.f32.mxu0 %v1716
        %2179 = vmatmul.mubr.f32.gmra.mxu0 %v1715
        %v2180 = vpop.f32.mrf.mxu0
        %v2181 = vadd.f32 %v2062, %v2180
        %v2182 = vpop.f32.mrf.mxu0
        %2183 = vmatprep.mubr.f32.mxu0 %v1725
        %2184 = vmatmul.mubr.f32.gmra.mxu0 %v1724
        %v2185 = vpop.f32.mrf.mxu0
        %v2186 = vadd.f32 %v2062, %v2185
        %v2187 = vpop.f32.mrf.mxu0
        %2188 = vmatprep.mubr.f32.mxu0 %v1734
        %2189 = vmatmul.mubr.f32.gmra.mxu0 %v1733
        %v2190 = vpop.f32.mrf.mxu0
        %v2191 = vadd.f32 %v2062, %v2190
        %v2192 = vpop.f32.mrf.mxu0
        %2193 = vmatprep.mubr.f32.mxu0 %v1743
        %2194 = vmatmul.mubr.f32.gmra.mxu0 %v1742
        %v2195 = vpop.f32.mrf.mxu0
        %v2196 = vadd.f32 %v2062, %v2195
        %v2197 = vpop.f32.mrf.mxu0
        %2198 = vmatprep.mubr.f32.mxu0 %v1752
        %2199 = vmatmul.mubr.f32.gmra.mxu0 %v1751
        %v2200 = vpop.f32.mrf.mxu0
        %v2201 = vadd.f32 %v2062, %v2200
        %v2202 = vpop.f32.mrf.mxu0
        %2203 = vmatprep.mubr.f32.mxu0 %v1761
        %2204 = vmatmul.mubr.f32.gmra.mxu0 %v1760
        %v2205 = vpop.f32.mrf.mxu0
        %v2206 = vadd.f32 %v2062, %v2205
        %v2207 = vpop.f32.mrf.mxu0
        %2208 = vmatprep.mubr.f32.mxu0 %v1770
        %2209 = vmatmul.mubr.f32.gmra.mxu0 %v1769
        %v2210 = vpop.f32.mrf.mxu0
        %v2211 = vadd.f32 %v2062, %v2210
        %v2212 = vpop.f32.mrf.mxu0
        %2213 = vmatprep.mubr.f32.mxu0 %v1779
        %2214 = vmatmul.mubr.f32.gmra.mxu0 %v1778
        %v2215 = vpop.f32.mrf.mxu0
        %v2216 = vadd.f32 %v2062, %v2215
        %v2217 = vpop.f32.mrf.mxu0
        %2218 = vmatprep.mubr.f32.mxu0 %v1788
        %2219 = vmatmul.mubr.f32.gmra.mxu0 %v1787
        %v2220 = vpop.f32.mrf.mxu0
        %v2221 = vadd.f32 %v2062, %v2220
        %v2222 = vpop.f32.mrf.mxu0
        %2223 = vmatprep.mubr.f32.mxu0 %v1797
        %2224 = vmatmul.mubr.f32.gmra.mxu0 %v1796
        %v2225 = vpop.f32.mrf.mxu0
        %v2226 = vadd.f32 %v2062, %v2225
        %v2227 = vpop.f32.mrf.mxu0
        %2228 = vmatprep.mubr.f32.mxu0 %v1806
        %2229 = vmatmul.mubr.f32.gmra.mxu0 %v1805
        %v2230 = vpop.f32.mrf.mxu0
        %v2231 = vadd.f32 %v2062, %v2230
        %v2232 = vpop.f32.mrf.mxu0
        %2233 = vmatprep.mubr.f32.mxu0 %v1815
        %2234 = vmatmul.mubr.f32.gmra.mxu0 %v1814
        %v2235 = vpop.f32.mrf.mxu0
        %v2236 = vadd.f32 %v2062, %v2235
        %v2237 = vpop.f32.mrf.mxu0
        %2238 = vmatprep.mubr.f32.mxu0 %v1824
        %2239 = vmatmul.mubr.f32.gmra.mxu0 %v1823
        %v2240 = vpop.f32.mrf.mxu0
        %v2241 = vadd.f32 %v2062, %v2240
        %v2242 = vpop.f32.mrf.mxu0
        %2243 = vmatprep.mubr.f32.mxu0 %v1833
        %2244 = vmatmul.mubr.f32.gmra.mxu0 %v1832
        %v2245 = vpop.f32.mrf.mxu0
        %v2246 = vadd.f32 %v2062, %v2245
        %v2247 = vpop.f32.mrf.mxu0
        %2248 = vmatprep.mubr.f32.mxu0 %v1842
        %2249 = vmatmul.mubr.f32.gmra.mxu0 %v1841
        %v2250 = vpop.f32.mrf.mxu0
        %v2251 = vadd.f32 %v2062, %v2250
        %v2252 = vpop.f32.mrf.mxu0
        %2253 = vmatprep.mubr.f32.mxu0 %v1851
        %2254 = vmatmul.mubr.f32.gmra.mxu0 %v1850
        %v2255 = vpop.f32.mrf.mxu0
        %v2256 = vadd.f32 %v2062, %v2255
        %v2257 = vpop.f32.mrf.mxu0
        %2258 = vmatprep.mubr.f32.mxu0 %v1860
        %2259 = vmatmul.mubr.f32.gmra.mxu0 %v1859
        %v2260 = vpop.f32.mrf.mxu0
        %v2261 = vadd.f32 %v2062, %v2260
        %v2262 = vpop.f32.mrf.mxu0
        %2263 = vmatprep.mubr.f32.mxu0 %v1869
        %2264 = vmatmul.mubr.f32.gmra.mxu0 %v1868
        %v2265 = vpop.f32.mrf.mxu0
        %v2266 = vadd.f32 %v2062, %v2265
        %v2267 = vpop.f32.mrf.mxu0
        %2268 = vmatprep.mubr.f32.mxu0 %v1878
        %2269 = vmatmul.mubr.f32.gmra.mxu0 %v1877
        %v2270 = vpop.f32.mrf.mxu0
        %v2271 = vadd.f32 %v2062, %v2270
        %v2272 = vpop.f32.mrf.mxu0
        %2273 = vmatprep.mubr.f32.mxu0 %v1887
        %2274 = vmatmul.mubr.f32.gmra.mxu0 %v1886
        %v2275 = vpop.f32.mrf.mxu0
        %v2276 = vadd.f32 %v2062, %v2275
        %v2277 = vpop.f32.mrf.mxu0
        %2278 = vmatprep.mubr.f32.mxu0 %v1896
        %2279 = vmatmul.mubr.f32.gmra.mxu0 %v1895
        %v2280 = vpop.f32.mrf.mxu0
        %v2281 = vadd.f32 %v2062, %v2280
        %v2282 = vpop.f32.mrf.mxu0
        %2283 = vmatprep.mubr.f32.mxu0 %v1905
        %2284 = vmatmul.mubr.f32.gmra.mxu0 %v1904
        %v2285 = vpop.f32.mrf.mxu0
        %v2286 = vadd.f32 %v2062, %v2285
        %v2287 = vpop.f32.mrf.mxu0
        %2288 = vdwg.mxu0
        %2289 = vmatprep.subr.mxu0 0.0
        %2290 = vmatpush1.msra.mxu0 %v1960
        %2291 = vmatprep.subr.mxu0 0.0
        %2292 = vmatpush1.msra.mxu0 %v1959
        %2293 = vmatprep.subr.mxu0 0.0
        %2294 = vmatpush1.msra.mxu0 %v1958
        %2295 = vmatprep.subr.mxu0 0.0
        %2296 = vmatpush1.msra.mxu0 %v1957
        %2297 = vmatprep.subr.mxu0 0.0
        %2298 = vmatpush1.msra.mxu0 %v1956
        %2299 = vmatprep.subr.mxu0 0.0
        %2300 = vmatpush1.msra.mxu0 %v1955
        %2301 = vmatprep.subr.mxu0 0.0
        %2302 = vmatpush1.msra.mxu0 %v1954
        %2303 = vmatprep.subr.mxu0 0.0
        %2304 = vmatpush1.msra.mxu0 %v1953
        %2305 = vmatprep.subr.mxu0 0.0
        %2306 = vmatpush1.msra.mxu0 %v1952
        %2307 = vmatprep.subr.mxu0 0.0
        %2308 = vmatpush1.msra.mxu0 %v1951
        %2309 = vmatprep.subr.mxu0 0.0
        %2310 = vmatpush1.msra.mxu0 %v1950
        %2311 = vmatprep.subr.mxu0 0.0
        %2312 = vmatpush1.msra.mxu0 %v1949
        %2313 = vmatprep.subr.mxu0 0.0
        %2314 = vmatpush1.msra.mxu0 %v1948
        %2315 = vmatprep.subr.mxu0 0.0
        %2316 = vmatpush1.msra.mxu0 %v1947
        %2317 = vmatprep.subr.mxu0 0.0
        %2318 = vmatpush1.msra.mxu0 %v1946
        %2319 = vmatprep.subr.mxu0 0.0
        %2320 = vmatpush1.msra.mxu0 %v1945
        %2321 = vmatprep.subr.mxu0 0.0
        %2322 = vmatpush2.msra.mxu0 %v1976
        %2323 = vmatprep.subr.mxu0 0.0
        %2324 = vmatpush2.msra.mxu0 %v1975
        %2325 = vmatprep.subr.mxu0 0.0
        %2326 = vmatpush2.msra.mxu0 %v1974
        %2327 = vmatprep.subr.mxu0 0.0
        %2328 = vmatpush2.msra.mxu0 %v1973
        %2329 = vmatprep.subr.mxu0 0.0
        %2330 = vmatpush2.msra.mxu0 %v1972
        %2331 = vmatprep.subr.mxu0 0.0
        %2332 = vmatpush2.msra.mxu0 %v1971
        %2333 = vmatprep.subr.mxu0 0.0
        %2334 = vmatpush2.msra.mxu0 %v1970
        %2335 = vmatprep.subr.mxu0 0.0
        %2336 = vmatpush2.msra.mxu0 %v1969
        %2337 = vmatprep.subr.mxu0 0.0
        %2338 = vmatpush2.msra.mxu0 %v1968
        %2339 = vmatprep.subr.mxu0 0.0
        %2340 = vmatpush2.msra.mxu0 %v1967
        %2341 = vmatprep.subr.mxu0 0.0
        %2342 = vmatpush2.msra.mxu0 %v1966
        %2343 = vmatprep.subr.mxu0 0.0
        %2344 = vmatpush2.msra.mxu0 %v1965
        %2345 = vmatprep.subr.mxu0 0.0
        %2346 = vmatpush2.msra.mxu0 %v1964
        %2347 = vmatprep.subr.mxu0 0.0
        %2348 = vmatpush2.msra.mxu0 %v1963
        %2349 = vmatprep.subr.mxu0 0.0
        %2350 = vmatpush2.msra.mxu0 %v1962
        %2351 = vmatprep.subr.mxu0 0.0
        %2352 = vmatpush2.msra.mxu0 %v1961
        %2353 = vmatprep.mubr.f32.mxu0 %v1628
        %2354 = vmatmul.mubr.f32.gmra.mxu0 %v1627
        %v2355 = vpop.f32.mrf.mxu0
        %v2356 = vadd.f32 %v2131, %v2355
        %v2357 = vpop.f32.mrf.mxu0
        %2358 = vmatprep.mubr.f32.mxu0 %v1637
        %2359 = vmatmul.mubr.f32.gmra.mxu0 %v1636
        %v2360 = vpop.f32.mrf.mxu0
        %v2361 = vadd.f32 %v2136, %v2360
        %v2362 = vpop.f32.mrf.mxu0
        %2363 = vmatprep.mubr.f32.mxu0 %v1646
        %2364 = vmatmul.mubr.f32.gmra.mxu0 %v1645
        %v2365 = vpop.f32.mrf.mxu0
        %v2366 = vadd.f32 %v2141, %v2365
        %v2367 = vpop.f32.mrf.mxu0
        %2368 = vmatprep.mubr.f32.mxu0 %v1655
        %2369 = vmatmul.mubr.f32.gmra.mxu0 %v1654
        %v2370 = vpop.f32.mrf.mxu0
        %v2371 = vadd.f32 %v2146, %v2370
        %v2372 = vpop.f32.mrf.mxu0
        %2373 = vmatprep.mubr.f32.mxu0 %v1664
        %2374 = vmatmul.mubr.f32.gmra.mxu0 %v1663
        %v2375 = vpop.f32.mrf.mxu0
        %v2376 = vadd.f32 %v2151, %v2375
        %v2377 = vpop.f32.mrf.mxu0
        %2378 = vmatprep.mubr.f32.mxu0 %v1673
        %2379 = vmatmul.mubr.f32.gmra.mxu0 %v1672
        %v2380 = vpop.f32.mrf.mxu0
        %v2381 = vadd.f32 %v2156, %v2380
        %v2382 = vpop.f32.mrf.mxu0
        %2383 = vmatprep.mubr.f32.mxu0 %v1682
        %2384 = vmatmul.mubr.f32.gmra.mxu0 %v1681
        %v2385 = vpop.f32.mrf.mxu0
        %v2386 = vadd.f32 %v2161, %v2385
        %v2387 = vpop.f32.mrf.mxu0
        %2388 = vmatprep.mubr.f32.mxu0 %v1691
        %2389 = vmatmul.mubr.f32.gmra.mxu0 %v1690
        %v2390 = vpop.f32.mrf.mxu0
        %v2391 = vadd.f32 %v2166, %v2390
        %v2392 = vpop.f32.mrf.mxu0
        %2393 = vmatprep.mubr.f32.mxu0 %v1700
        %2394 = vmatmul.mubr.f32.gmra.mxu0 %v1699
        %v2395 = vpop.f32.mrf.mxu0
        %v2396 = vadd.f32 %v2171, %v2395
        %v2397 = vpop.f32.mrf.mxu0
        %2398 = vmatprep.mubr.f32.mxu0 %v1709
        %2399 = vmatmul.mubr.f32.gmra.mxu0 %v1708
        %v2400 = vpop.f32.mrf.mxu0
        %v2401 = vadd.f32 %v2176, %v2400
        %v2402 = vpop.f32.mrf.mxu0
        %2403 = vmatprep.mubr.f32.mxu0 %v1718
        %2404 = vmatmul.mubr.f32.gmra.mxu0 %v1717
        %v2405 = vpop.f32.mrf.mxu0
        %v2406 = vadd.f32 %v2181, %v2405
        %v2407 = vpop.f32.mrf.mxu0
        %2408 = vmatprep.mubr.f32.mxu0 %v1727
        %2409 = vmatmul.mubr.f32.gmra.mxu0 %v1726
        %v2410 = vpop.f32.mrf.mxu0
        %v2411 = vadd.f32 %v2186, %v2410
        %v2412 = vpop.f32.mrf.mxu0
        %2413 = vmatprep.mubr.f32.mxu0 %v1736
        %2414 = vmatmul.mubr.f32.gmra.mxu0 %v1735
        %v2415 = vpop.f32.mrf.mxu0
        %v2416 = vadd.f32 %v2191, %v2415
        %v2417 = vpop.f32.mrf.mxu0
        %2418 = vmatprep.mubr.f32.mxu0 %v1745
        %2419 = vmatmul.mubr.f32.gmra.mxu0 %v1744
        %v2420 = vpop.f32.mrf.mxu0
        %v2421 = vadd.f32 %v2196, %v2420
        %v2422 = vpop.f32.mrf.mxu0
        %2423 = vmatprep.mubr.f32.mxu0 %v1754
        %2424 = vmatmul.mubr.f32.gmra.mxu0 %v1753
        %v2425 = vpop.f32.mrf.mxu0
        %v2426 = vadd.f32 %v2201, %v2425
        %v2427 = vpop.f32.mrf.mxu0
        %2428 = vmatprep.mubr.f32.mxu0 %v1763
        %2429 = vmatmul.mubr.f32.gmra.mxu0 %v1762
        %v2430 = vpop.f32.mrf.mxu0
        %v2431 = vadd.f32 %v2206, %v2430
        %v2432 = vpop.f32.mrf.mxu0
        %2433 = vmatprep.mubr.f32.mxu0 %v1772
        %2434 = vmatmul.mubr.f32.gmra.mxu0 %v1771
        %v2435 = vpop.f32.mrf.mxu0
        %v2436 = vadd.f32 %v2211, %v2435
        %v2437 = vpop.f32.mrf.mxu0
        %2438 = vmatprep.mubr.f32.mxu0 %v1781
        %2439 = vmatmul.mubr.f32.gmra.mxu0 %v1780
        %v2440 = vpop.f32.mrf.mxu0
        %v2441 = vadd.f32 %v2216, %v2440
        %v2442 = vpop.f32.mrf.mxu0
        %2443 = vmatprep.mubr.f32.mxu0 %v1790
        %2444 = vmatmul.mubr.f32.gmra.mxu0 %v1789
        %v2445 = vpop.f32.mrf.mxu0
        %v2446 = vadd.f32 %v2221, %v2445
        %v2447 = vpop.f32.mrf.mxu0
        %2448 = vmatprep.mubr.f32.mxu0 %v1799
        %2449 = vmatmul.mubr.f32.gmra.mxu0 %v1798
        %v2450 = vpop.f32.mrf.mxu0
        %v2451 = vadd.f32 %v2226, %v2450
        %v2452 = vpop.f32.mrf.mxu0
        %2453 = vmatprep.mubr.f32.mxu0 %v1808
        %2454 = vmatmul.mubr.f32.gmra.mxu0 %v1807
        %v2455 = vpop.f32.mrf.mxu0
        %v2456 = vadd.f32 %v2231, %v2455
        %v2457 = vpop.f32.mrf.mxu0
        %2458 = vmatprep.mubr.f32.mxu0 %v1817
        %2459 = vmatmul.mubr.f32.gmra.mxu0 %v1816
        %v2460 = vpop.f32.mrf.mxu0
        %v2461 = vadd.f32 %v2236, %v2460
        %v2462 = vpop.f32.mrf.mxu0
        %2463 = vmatprep.mubr.f32.mxu0 %v1826
        %2464 = vmatmul.mubr.f32.gmra.mxu0 %v1825
        %v2465 = vpop.f32.mrf.mxu0
        %v2466 = vadd.f32 %v2241, %v2465
        %v2467 = vpop.f32.mrf.mxu0
        %2468 = vmatprep.mubr.f32.mxu0 %v1835
        %2469 = vmatmul.mubr.f32.gmra.mxu0 %v1834
        %v2470 = vpop.f32.mrf.mxu0
        %v2471 = vadd.f32 %v2246, %v2470
        %v2472 = vpop.f32.mrf.mxu0
        %2473 = vmatprep.mubr.f32.mxu0 %v1844
        %2474 = vmatmul.mubr.f32.gmra.mxu0 %v1843
        %v2475 = vpop.f32.mrf.mxu0
        %v2476 = vadd.f32 %v2251, %v2475
        %v2477 = vpop.f32.mrf.mxu0
        %2478 = vmatprep.mubr.f32.mxu0 %v1853
        %2479 = vmatmul.mubr.f32.gmra.mxu0 %v1852
        %v2480 = vpop.f32.mrf.mxu0
        %v2481 = vadd.f32 %v2256, %v2480
        %v2482 = vpop.f32.mrf.mxu0
        %2483 = vmatprep.mubr.f32.mxu0 %v1862
        %2484 = vmatmul.mubr.f32.gmra.mxu0 %v1861
        %v2485 = vpop.f32.mrf.mxu0
        %v2486 = vadd.f32 %v2261, %v2485
        %v2487 = vpop.f32.mrf.mxu0
        %2488 = vmatprep.mubr.f32.mxu0 %v1871
        %2489 = vmatmul.mubr.f32.gmra.mxu0 %v1870
        %v2490 = vpop.f32.mrf.mxu0
        %v2491 = vadd.f32 %v2266, %v2490
        %v2492 = vpop.f32.mrf.mxu0
        %2493 = vmatprep.mubr.f32.mxu0 %v1880
        %2494 = vmatmul.mubr.f32.gmra.mxu0 %v1879
        %v2495 = vpop.f32.mrf.mxu0
        %v2496 = vadd.f32 %v2271, %v2495
        %v2497 = vpop.f32.mrf.mxu0
        %2498 = vmatprep.mubr.f32.mxu0 %v1889
        %2499 = vmatmul.mubr.f32.gmra.mxu0 %v1888
        %v2500 = vpop.f32.mrf.mxu0
        %v2501 = vadd.f32 %v2276, %v2500
        %v2502 = vpop.f32.mrf.mxu0
        %2503 = vmatprep.mubr.f32.mxu0 %v1898
        %2504 = vmatmul.mubr.f32.gmra.mxu0 %v1897
        %v2505 = vpop.f32.mrf.mxu0
        %v2506 = vadd.f32 %v2281, %v2505
        %v2507 = vpop.f32.mrf.mxu0
        %2508 = vmatprep.mubr.f32.mxu0 %v1907
        %2509 = vmatmul.mubr.f32.gmra.mxu0 %v1906
        %v2510 = vpop.f32.mrf.mxu0
        %v2511 = vadd.f32 %v2286, %v2510
        %v2512 = vpop.f32.mrf.mxu0
        %2513 = vdwg.mxu0
        %2514 = vmatprep.subr.mxu0 0.0
        %2515 = vmatpush1.msra.mxu0 %v1992
        %2516 = vmatprep.subr.mxu0 0.0
        %2517 = vmatpush1.msra.mxu0 %v1991
        %2518 = vmatprep.subr.mxu0 0.0
        %2519 = vmatpush1.msra.mxu0 %v1990
        %2520 = vmatprep.subr.mxu0 0.0
        %2521 = vmatpush1.msra.mxu0 %v1989
        %2522 = vmatprep.subr.mxu0 0.0
        %2523 = vmatpush1.msra.mxu0 %v1988
        %2524 = vmatprep.subr.mxu0 0.0
        %2525 = vmatpush1.msra.mxu0 %v1987
        %2526 = vmatprep.subr.mxu0 0.0
        %2527 = vmatpush1.msra.mxu0 %v1986
        %2528 = vmatprep.subr.mxu0 0.0
        %2529 = vmatpush1.msra.mxu0 %v1985
        %2530 = vmatprep.subr.mxu0 0.0
        %2531 = vmatpush1.msra.mxu0 %v1984
        %2532 = vmatprep.subr.mxu0 0.0
        %2533 = vmatpush1.msra.mxu0 %v1983
        %2534 = vmatprep.subr.mxu0 0.0
        %2535 = vmatpush1.msra.mxu0 %v1982
        %2536 = vmatprep.subr.mxu0 0.0
        %2537 = vmatpush1.msra.mxu0 %v1981
        %2538 = vmatprep.subr.mxu0 0.0
        %2539 = vmatpush1.msra.mxu0 %v1980
        %2540 = vmatprep.subr.mxu0 0.0
        %2541 = vmatpush1.msra.mxu0 %v1979
        %2542 = vmatprep.subr.mxu0 0.0
        %2543 = vmatpush1.msra.mxu0 %v1978
        %2544 = vmatprep.subr.mxu0 0.0
        %2545 = vmatpush1.msra.mxu0 %v1977
        %2546 = vmatprep.subr.mxu0 0.0
        %2547 = vmatpush2.msra.mxu0 %v2008
        %2548 = vmatprep.subr.mxu0 0.0
        %2549 = vmatpush2.msra.mxu0 %v2007
        %2550 = vmatprep.subr.mxu0 0.0
        %2551 = vmatpush2.msra.mxu0 %v2006
        %2552 = vmatprep.subr.mxu0 0.0
        %2553 = vmatpush2.msra.mxu0 %v2005
        %2554 = vmatprep.subr.mxu0 0.0
        %2555 = vmatpush2.msra.mxu0 %v2004
        %2556 = vmatprep.subr.mxu0 0.0
        %2557 = vmatpush2.msra.mxu0 %v2003
        %2558 = vmatprep.subr.mxu0 0.0
        %2559 = vmatpush2.msra.mxu0 %v2002
        %2560 = vmatprep.subr.mxu0 0.0
        %2561 = vmatpush2.msra.mxu0 %v2001
        %2562 = vmatprep.subr.mxu0 0.0
        %2563 = vmatpush2.msra.mxu0 %v2000
        %2564 = vmatprep.subr.mxu0 0.0
        %2565 = vmatpush2.msra.mxu0 %v1999
        %2566 = vmatprep.subr.mxu0 0.0
        %2567 = vmatpush2.msra.mxu0 %v1998
        %2568 = vmatprep.subr.mxu0 0.0
        %2569 = vmatpush2.msra.mxu0 %v1997
        %2570 = vmatprep.subr.mxu0 0.0
        %2571 = vmatpush2.msra.mxu0 %v1996
        %2572 = vmatprep.subr.mxu0 0.0
        %2573 = vmatpush2.msra.mxu0 %v1995
        %2574 = vmatprep.subr.mxu0 0.0
        %2575 = vmatpush2.msra.mxu0 %v1994
        %2576 = vmatprep.subr.mxu0 0.0
        %2577 = vmatpush2.msra.mxu0 %v1993
        %2578 = vmatprep.mubr.f32.mxu0 %v1630
        %2579 = vmatmul.mubr.f32.gmra.mxu0 %v1629
        %v2580 = vpop.f32.mrf.mxu0
        %v2581 = vadd.f32 %v2356, %v2580
        %v2582 = vpop.f32.mrf.mxu0
        %2583 = vmatprep.mubr.f32.mxu0 %v1639
        %2584 = vmatmul.mubr.f32.gmra.mxu0 %v1638
        %v2585 = vpop.f32.mrf.mxu0
        %v2586 = vadd.f32 %v2361, %v2585
        %v2587 = vpop.f32.mrf.mxu0
        %2588 = vmatprep.mubr.f32.mxu0 %v1648
        %2589 = vmatmul.mubr.f32.gmra.mxu0 %v1647
        %v2590 = vpop.f32.mrf.mxu0
        %v2591 = vadd.f32 %v2366, %v2590
        %v2592 = vpop.f32.mrf.mxu0
        %2593 = vmatprep.mubr.f32.mxu0 %v1657
        %2594 = vmatmul.mubr.f32.gmra.mxu0 %v1656
        %v2595 = vpop.f32.mrf.mxu0
        %v2596 = vadd.f32 %v2371, %v2595
        %v2597 = vpop.f32.mrf.mxu0
        %2598 = vmatprep.mubr.f32.mxu0 %v1666
        %2599 = vmatmul.mubr.f32.gmra.mxu0 %v1665
        %v2600 = vpop.f32.mrf.mxu0
        %v2601 = vadd.f32 %v2376, %v2600
        %v2602 = vpop.f32.mrf.mxu0
        %2603 = vmatprep.mubr.f32.mxu0 %v1675
        %2604 = vmatmul.mubr.f32.gmra.mxu0 %v1674
        %v2605 = vpop.f32.mrf.mxu0
        %v2606 = vadd.f32 %v2381, %v2605
        %v2607 = vpop.f32.mrf.mxu0
        %2608 = vmatprep.mubr.f32.mxu0 %v1684
        %2609 = vmatmul.mubr.f32.gmra.mxu0 %v1683
        %v2610 = vpop.f32.mrf.mxu0
        %v2611 = vadd.f32 %v2386, %v2610
        %v2612 = vpop.f32.mrf.mxu0
        %2613 = vmatprep.mubr.f32.mxu0 %v1693
        %2614 = vmatmul.mubr.f32.gmra.mxu0 %v1692
        %v2615 = vpop.f32.mrf.mxu0
        %v2616 = vadd.f32 %v2391, %v2615
        %v2617 = vpop.f32.mrf.mxu0
        %2618 = vmatprep.mubr.f32.mxu0 %v1702
        %2619 = vmatmul.mubr.f32.gmra.mxu0 %v1701
        %v2620 = vpop.f32.mrf.mxu0
        %v2621 = vadd.f32 %v2396, %v2620
        %v2622 = vpop.f32.mrf.mxu0
        %2623 = vmatprep.mubr.f32.mxu0 %v1711
        %2624 = vmatmul.mubr.f32.gmra.mxu0 %v1710
        %v2625 = vpop.f32.mrf.mxu0
        %v2626 = vadd.f32 %v2401, %v2625
        %v2627 = vpop.f32.mrf.mxu0
        %2628 = vmatprep.mubr.f32.mxu0 %v1720
        %2629 = vmatmul.mubr.f32.gmra.mxu0 %v1719
        %v2630 = vpop.f32.mrf.mxu0
        %v2631 = vadd.f32 %v2406, %v2630
        %v2632 = vpop.f32.mrf.mxu0
        %2633 = vmatprep.mubr.f32.mxu0 %v1729
        %2634 = vmatmul.mubr.f32.gmra.mxu0 %v1728
        %v2635 = vpop.f32.mrf.mxu0
        %v2636 = vadd.f32 %v2411, %v2635
        %v2637 = vpop.f32.mrf.mxu0
        %2638 = vmatprep.mubr.f32.mxu0 %v1738
        %2639 = vmatmul.mubr.f32.gmra.mxu0 %v1737
        %v2640 = vpop.f32.mrf.mxu0
        %v2641 = vadd.f32 %v2416, %v2640
        %v2642 = vpop.f32.mrf.mxu0
        %2643 = vmatprep.mubr.f32.mxu0 %v1747
        %2644 = vmatmul.mubr.f32.gmra.mxu0 %v1746
        %v2645 = vpop.f32.mrf.mxu0
        %v2646 = vadd.f32 %v2421, %v2645
        %v2647 = vpop.f32.mrf.mxu0
        %2648 = vmatprep.mubr.f32.mxu0 %v1756
        %2649 = vmatmul.mubr.f32.gmra.mxu0 %v1755
        %v2650 = vpop.f32.mrf.mxu0
        %v2651 = vadd.f32 %v2426, %v2650
        %v2652 = vpop.f32.mrf.mxu0
        %2653 = vmatprep.mubr.f32.mxu0 %v1765
        %2654 = vmatmul.mubr.f32.gmra.mxu0 %v1764
        %v2655 = vpop.f32.mrf.mxu0
        %v2656 = vadd.f32 %v2431, %v2655
        %v2657 = vpop.f32.mrf.mxu0
        %2658 = vmatprep.mubr.f32.mxu0 %v1774
        %2659 = vmatmul.mubr.f32.gmra.mxu0 %v1773
        %v2660 = vpop.f32.mrf.mxu0
        %v2661 = vadd.f32 %v2436, %v2660
        %v2662 = vpop.f32.mrf.mxu0
        %2663 = vmatprep.mubr.f32.mxu0 %v1783
        %2664 = vmatmul.mubr.f32.gmra.mxu0 %v1782
        %v2665 = vpop.f32.mrf.mxu0
        %v2666 = vadd.f32 %v2441, %v2665
        %v2667 = vpop.f32.mrf.mxu0
        %2668 = vmatprep.mubr.f32.mxu0 %v1792
        %2669 = vmatmul.mubr.f32.gmra.mxu0 %v1791
        %v2670 = vpop.f32.mrf.mxu0
        %v2671 = vadd.f32 %v2446, %v2670
        %v2672 = vpop.f32.mrf.mxu0
        %2673 = vmatprep.mubr.f32.mxu0 %v1801
        %2674 = vmatmul.mubr.f32.gmra.mxu0 %v1800
        %v2675 = vpop.f32.mrf.mxu0
        %v2676 = vadd.f32 %v2451, %v2675
        %v2677 = vpop.f32.mrf.mxu0
        %2678 = vmatprep.mubr.f32.mxu0 %v1810
        %2679 = vmatmul.mubr.f32.gmra.mxu0 %v1809
        %v2680 = vpop.f32.mrf.mxu0
        %v2681 = vadd.f32 %v2456, %v2680
        %v2682 = vpop.f32.mrf.mxu0
        %2683 = vmatprep.mubr.f32.mxu0 %v1819
        %2684 = vmatmul.mubr.f32.gmra.mxu0 %v1818
        %v2685 = vpop.f32.mrf.mxu0
        %v2686 = vadd.f32 %v2461, %v2685
        %v2687 = vpop.f32.mrf.mxu0
        %2688 = vmatprep.mubr.f32.mxu0 %v1828
        %2689 = vmatmul.mubr.f32.gmra.mxu0 %v1827
        %v2690 = vpop.f32.mrf.mxu0
        %v2691 = vadd.f32 %v2466, %v2690
        %v2692 = vpop.f32.mrf.mxu0
        %2693 = vmatprep.mubr.f32.mxu0 %v1837
        %2694 = vmatmul.mubr.f32.gmra.mxu0 %v1836
        %v2695 = vpop.f32.mrf.mxu0
        %v2696 = vadd.f32 %v2471, %v2695
        %v2697 = vpop.f32.mrf.mxu0
        %2698 = vmatprep.mubr.f32.mxu0 %v1846
        %2699 = vmatmul.mubr.f32.gmra.mxu0 %v1845
        %v2700 = vpop.f32.mrf.mxu0
        %v2701 = vadd.f32 %v2476, %v2700
        %v2702 = vpop.f32.mrf.mxu0
        %2703 = vmatprep.mubr.f32.mxu0 %v1855
        %2704 = vmatmul.mubr.f32.gmra.mxu0 %v1854
        %v2705 = vpop.f32.mrf.mxu0
        %v2706 = vadd.f32 %v2481, %v2705
        %v2707 = vpop.f32.mrf.mxu0
        %2708 = vmatprep.mubr.f32.mxu0 %v1864
        %2709 = vmatmul.mubr.f32.gmra.mxu0 %v1863
        %v2710 = vpop.f32.mrf.mxu0
        %v2711 = vadd.f32 %v2486, %v2710
        %v2712 = vpop.f32.mrf.mxu0
        %2713 = vmatprep.mubr.f32.mxu0 %v1873
        %2714 = vmatmul.mubr.f32.gmra.mxu0 %v1872
        %v2715 = vpop.f32.mrf.mxu0
        %v2716 = vadd.f32 %v2491, %v2715
        %v2717 = vpop.f32.mrf.mxu0
        %2718 = vmatprep.mubr.f32.mxu0 %v1882
        %2719 = vmatmul.mubr.f32.gmra.mxu0 %v1881
        %v2720 = vpop.f32.mrf.mxu0
        %v2721 = vadd.f32 %v2496, %v2720
        %v2722 = vpop.f32.mrf.mxu0
        %2723 = vmatprep.mubr.f32.mxu0 %v1891
        %2724 = vmatmul.mubr.f32.gmra.mxu0 %v1890
        %v2725 = vpop.f32.mrf.mxu0
        %v2726 = vadd.f32 %v2501, %v2725
        %v2727 = vpop.f32.mrf.mxu0
        %2728 = vmatprep.mubr.f32.mxu0 %v1900
        %2729 = vmatmul.mubr.f32.gmra.mxu0 %v1899
        %v2730 = vpop.f32.mrf.mxu0
        %v2731 = vadd.f32 %v2506, %v2730
        %v2732 = vpop.f32.mrf.mxu0
        %2733 = vmatprep.mubr.f32.mxu0 %v1909
        %2734 = vmatmul.mubr.f32.gmra.mxu0 %v1908
        %v2735 = vpop.f32.mrf.mxu0
        %v2736 = vadd.f32 %v2511, %v2735
        %v2737 = vpop.f32.mrf.mxu0
        %2738 = vdwg.mxu0
        %2739 = vmatprep.subr.mxu0 0.0
        %2740 = vmatpush1.msra.mxu0 %v2024
        %2741 = vmatprep.subr.mxu0 0.0
        %2742 = vmatpush1.msra.mxu0 %v2023
        %2743 = vmatprep.subr.mxu0 0.0
        %2744 = vmatpush1.msra.mxu0 %v2022
        %2745 = vmatprep.subr.mxu0 0.0
        %2746 = vmatpush1.msra.mxu0 %v2021
        %2747 = vmatprep.subr.mxu0 0.0
        %2748 = vmatpush1.msra.mxu0 %v2020
        %2749 = vmatprep.subr.mxu0 0.0
        %2750 = vmatpush1.msra.mxu0 %v2019
        %2751 = vmatprep.subr.mxu0 0.0
        %2752 = vmatpush1.msra.mxu0 %v2018
        %2753 = vmatprep.subr.mxu0 0.0
        %2754 = vmatpush1.msra.mxu0 %v2017
        %2755 = vmatprep.subr.mxu0 0.0
        %2756 = vmatpush1.msra.mxu0 %v2016
        %2757 = vmatprep.subr.mxu0 0.0
        %2758 = vmatpush1.msra.mxu0 %v2015
        %2759 = vmatprep.subr.mxu0 0.0
        %2760 = vmatpush1.msra.mxu0 %v2014
        %2761 = vmatprep.subr.mxu0 0.0
        %2762 = vmatpush1.msra.mxu0 %v2013
        %2763 = vmatprep.subr.mxu0 0.0
        %2764 = vmatpush1.msra.mxu0 %v2012
        %2765 = vmatprep.subr.mxu0 0.0
        %2766 = vmatpush1.msra.mxu0 %v2011
        %2767 = vmatprep.subr.mxu0 0.0
        %2768 = vmatpush1.msra.mxu0 %v2010
        %2769 = vmatprep.subr.mxu0 0.0
        %2770 = vmatpush1.msra.mxu0 %v2009
        %2771 = vmatprep.subr.mxu0 0.0
        %2772 = vmatpush2.msra.mxu0 %v2040
        %2773 = vmatprep.subr.mxu0 0.0
        %2774 = vmatpush2.msra.mxu0 %v2039
        %2775 = vmatprep.subr.mxu0 0.0
        %2776 = vmatpush2.msra.mxu0 %v2038
        %2777 = vmatprep.subr.mxu0 0.0
        %2778 = vmatpush2.msra.mxu0 %v2037
        %2779 = vmatprep.subr.mxu0 0.0
        %2780 = vmatpush2.msra.mxu0 %v2036
        %2781 = vmatprep.subr.mxu0 0.0
        %2782 = vmatpush2.msra.mxu0 %v2035
        %2783 = vmatprep.subr.mxu0 0.0
        %2784 = vmatpush2.msra.mxu0 %v2034
        %2785 = vmatprep.subr.mxu0 0.0
        %2786 = vmatpush2.msra.mxu0 %v2033
        %2787 = vmatprep.subr.mxu0 0.0
        %2788 = vmatpush2.msra.mxu0 %v2032
        %2789 = vmatprep.subr.mxu0 0.0
        %2790 = vmatpush2.msra.mxu0 %v2031
        %2791 = vmatprep.subr.mxu0 0.0
        %2792 = vmatpush2.msra.mxu0 %v2030
        %2793 = vmatprep.subr.mxu0 0.0
        %2794 = vmatpush2.msra.mxu0 %v2029
        %2795 = vmatprep.subr.mxu0 0.0
        %2796 = vmatpush2.msra.mxu0 %v2028
        %2797 = vmatprep.subr.mxu0 0.0
        %2798 = vmatpush2.msra.mxu0 %v2027
        %2799 = vmatprep.subr.mxu0 0.0
        %2800 = vmatpush2.msra.mxu0 %v2026
        %2801 = vmatprep.subr.mxu0 0.0
        %2802 = vmatpush2.msra.mxu0 %v2025
        %2803 = vmatprep.mubr.f32.mxu0 %v1632
        %2804 = vmatmul.mubr.f32.gmra.mxu0 %v1631
        %v2805 = vpop.f32.mrf.mxu0
        %v2806 = vadd.f32 %v2581, %v2805
        %v2807 = vpop.f32.mrf.mxu0
        %2808 = vmatprep.mubr.f32.mxu0 %v1641
        %2809 = vmatmul.mubr.f32.gmra.mxu0 %v1640
        %v2810 = vpop.f32.mrf.mxu0
        %v2811 = vadd.f32 %v2586, %v2810
        %v2812 = vpop.f32.mrf.mxu0
        %2813 = vmatprep.mubr.f32.mxu0 %v1650
        %2814 = vmatmul.mubr.f32.gmra.mxu0 %v1649
        %v2815 = vpop.f32.mrf.mxu0
        %v2816 = vadd.f32 %v2591, %v2815
        %v2817 = vpop.f32.mrf.mxu0
        %2818 = vmatprep.mubr.f32.mxu0 %v1659
        %2819 = vmatmul.mubr.f32.gmra.mxu0 %v1658
        %v2820 = vpop.f32.mrf.mxu0
        %v2821 = vadd.f32 %v2596, %v2820
        %v2822 = vpop.f32.mrf.mxu0
        %2823 = vmatprep.mubr.f32.mxu0 %v1668
        %2824 = vmatmul.mubr.f32.gmra.mxu0 %v1667
        %v2825 = vpop.f32.mrf.mxu0
        %v2826 = vadd.f32 %v2601, %v2825
        %v2827 = vpop.f32.mrf.mxu0
        %2828 = vmatprep.mubr.f32.mxu0 %v1677
        %2829 = vmatmul.mubr.f32.gmra.mxu0 %v1676
        %v2830 = vpop.f32.mrf.mxu0
        %v2831 = vadd.f32 %v2606, %v2830
        %v2832 = vpop.f32.mrf.mxu0
        %2833 = vmatprep.mubr.f32.mxu0 %v1686
        %2834 = vmatmul.mubr.f32.gmra.mxu0 %v1685
        %v2835 = vpop.f32.mrf.mxu0
        %v2836 = vadd.f32 %v2611, %v2835
        %v2837 = vpop.f32.mrf.mxu0
        %2838 = vmatprep.mubr.f32.mxu0 %v1695
        %2839 = vmatmul.mubr.f32.gmra.mxu0 %v1694
        %v2840 = vpop.f32.mrf.mxu0
        %v2841 = vadd.f32 %v2616, %v2840
        %v2842 = vpop.f32.mrf.mxu0
        %2843 = vmatprep.mubr.f32.mxu0 %v1704
        %2844 = vmatmul.mubr.f32.gmra.mxu0 %v1703
        %v2845 = vpop.f32.mrf.mxu0
        %v2846 = vadd.f32 %v2621, %v2845
        %v2847 = vpop.f32.mrf.mxu0
        %2848 = vmatprep.mubr.f32.mxu0 %v1713
        %2849 = vmatmul.mubr.f32.gmra.mxu0 %v1712
        %v2850 = vpop.f32.mrf.mxu0
        %v2851 = vadd.f32 %v2626, %v2850
        %v2852 = vpop.f32.mrf.mxu0
        %2853 = vmatprep.mubr.f32.mxu0 %v1722
        %2854 = vmatmul.mubr.f32.gmra.mxu0 %v1721
        %v2855 = vpop.f32.mrf.mxu0
        %v2856 = vadd.f32 %v2631, %v2855
        %v2857 = vpop.f32.mrf.mxu0
        %2858 = vmatprep.mubr.f32.mxu0 %v1731
        %2859 = vmatmul.mubr.f32.gmra.mxu0 %v1730
        %v2860 = vpop.f32.mrf.mxu0
        %v2861 = vadd.f32 %v2636, %v2860
        %v2862 = vpop.f32.mrf.mxu0
        %2863 = vmatprep.mubr.f32.mxu0 %v1740
        %2864 = vmatmul.mubr.f32.gmra.mxu0 %v1739
        %v2865 = vpop.f32.mrf.mxu0
        %v2866 = vadd.f32 %v2641, %v2865
        %v2867 = vpop.f32.mrf.mxu0
        %2868 = vmatprep.mubr.f32.mxu0 %v1749
        %2869 = vmatmul.mubr.f32.gmra.mxu0 %v1748
        %v2870 = vpop.f32.mrf.mxu0
        %v2871 = vadd.f32 %v2646, %v2870
        %v2872 = vpop.f32.mrf.mxu0
        %2873 = vmatprep.mubr.f32.mxu0 %v1758
        %2874 = vmatmul.mubr.f32.gmra.mxu0 %v1757
        %v2875 = vpop.f32.mrf.mxu0
        %v2876 = vadd.f32 %v2651, %v2875
        %v2877 = vpop.f32.mrf.mxu0
        %2878 = vmatprep.mubr.f32.mxu0 %v1767
        %2879 = vmatmul.mubr.f32.gmra.mxu0 %v1766
        %v2880 = vpop.f32.mrf.mxu0
        %v2881 = vadd.f32 %v2656, %v2880
        %v2882 = vpop.f32.mrf.mxu0
        %2883 = vmatprep.mubr.f32.mxu0 %v1776
        %2884 = vmatmul.mubr.f32.gmra.mxu0 %v1775
        %v2885 = vpop.f32.mrf.mxu0
        %v2886 = vadd.f32 %v2661, %v2885
        %v2887 = vpop.f32.mrf.mxu0
        %2888 = vmatprep.mubr.f32.mxu0 %v1785
        %2889 = vmatmul.mubr.f32.gmra.mxu0 %v1784
        %v2890 = vpop.f32.mrf.mxu0
        %v2891 = vadd.f32 %v2666, %v2890
        %v2892 = vpop.f32.mrf.mxu0
        %2893 = vmatprep.mubr.f32.mxu0 %v1794
        %2894 = vmatmul.mubr.f32.gmra.mxu0 %v1793
        %v2895 = vpop.f32.mrf.mxu0
        %v2896 = vadd.f32 %v2671, %v2895
        %v2897 = vpop.f32.mrf.mxu0
        %2898 = vmatprep.mubr.f32.mxu0 %v1803
        %2899 = vmatmul.mubr.f32.gmra.mxu0 %v1802
        %v2900 = vpop.f32.mrf.mxu0
        %v2901 = vadd.f32 %v2676, %v2900
        %v2902 = vpop.f32.mrf.mxu0
        %2903 = vmatprep.mubr.f32.mxu0 %v1812
        %2904 = vmatmul.mubr.f32.gmra.mxu0 %v1811
        %v2905 = vpop.f32.mrf.mxu0
        %v2906 = vadd.f32 %v2681, %v2905
        %v2907 = vpop.f32.mrf.mxu0
        %2908 = vmatprep.mubr.f32.mxu0 %v1821
        %2909 = vmatmul.mubr.f32.gmra.mxu0 %v1820
        %v2910 = vpop.f32.mrf.mxu0
        %v2911 = vadd.f32 %v2686, %v2910
        %v2912 = vpop.f32.mrf.mxu0
        %2913 = vmatprep.mubr.f32.mxu0 %v1830
        %2914 = vmatmul.mubr.f32.gmra.mxu0 %v1829
        %v2915 = vpop.f32.mrf.mxu0
        %v2916 = vadd.f32 %v2691, %v2915
        %v2917 = vpop.f32.mrf.mxu0
        %2918 = vmatprep.mubr.f32.mxu0 %v1839
        %2919 = vmatmul.mubr.f32.gmra.mxu0 %v1838
        %v2920 = vpop.f32.mrf.mxu0
        %v2921 = vadd.f32 %v2696, %v2920
        %v2922 = vpop.f32.mrf.mxu0
        %2923 = vmatprep.mubr.f32.mxu0 %v1848
        %2924 = vmatmul.mubr.f32.gmra.mxu0 %v1847
        %v2925 = vpop.f32.mrf.mxu0
        %v2926 = vadd.f32 %v2701, %v2925
        %v2927 = vpop.f32.mrf.mxu0
        %2928 = vmatprep.mubr.f32.mxu0 %v1857
        %2929 = vmatmul.mubr.f32.gmra.mxu0 %v1856
        %v2930 = vpop.f32.mrf.mxu0
        %v2931 = vadd.f32 %v2706, %v2930
        %v2932 = vpop.f32.mrf.mxu0
        %2933 = vmatprep.mubr.f32.mxu0 %v1866
        %2934 = vmatmul.mubr.f32.gmra.mxu0 %v1865
        %v2935 = vpop.f32.mrf.mxu0
        %v2936 = vadd.f32 %v2711, %v2935
        %v2937 = vpop.f32.mrf.mxu0
        %2938 = vmatprep.mubr.f32.mxu0 %v1875
        %2939 = vmatmul.mubr.f32.gmra.mxu0 %v1874
        %v2940 = vpop.f32.mrf.mxu0
        %v2941 = vadd.f32 %v2716, %v2940
        %v2942 = vpop.f32.mrf.mxu0
        %2943 = vmatprep.mubr.f32.mxu0 %v1884
        %2944 = vmatmul.mubr.f32.gmra.mxu0 %v1883
        %v2945 = vpop.f32.mrf.mxu0
        %v2946 = vadd.f32 %v2721, %v2945
        %v2947 = vpop.f32.mrf.mxu0
        %2948 = vmatprep.mubr.f32.mxu0 %v1893
        %2949 = vmatmul.mubr.f32.gmra.mxu0 %v1892
        %v2950 = vpop.f32.mrf.mxu0
        %v2951 = vadd.f32 %v2726, %v2950
        %v2952 = vpop.f32.mrf.mxu0
        %2953 = vmatprep.mubr.f32.mxu0 %v1902
        %2954 = vmatmul.mubr.f32.gmra.mxu0 %v1901
        %v2955 = vpop.f32.mrf.mxu0
        %v2956 = vadd.f32 %v2731, %v2955
        %v2957 = vpop.f32.mrf.mxu0
        %2958 = vmatprep.mubr.f32.mxu0 %v1911
        %2959 = vmatmul.mubr.f32.gmra.mxu0 %v1910
        %v2960 = vpop.f32.mrf.mxu0
        %v2961 = vadd.f32 %v2736, %v2960
        %v2962 = vpop.f32.mrf.mxu0
        %2963 = vdwg.mxu0
        %2964 = vmatprep.subr.mxu0 0.0
        %2965 = vmatpush1.msra.mxu0 %v2056
        %2966 = vmatprep.subr.mxu0 0.0
        %2967 = vmatpush1.msra.mxu0 %v2055
        %2968 = vmatprep.subr.mxu0 0.0
        %2969 = vmatpush1.msra.mxu0 %v2054
        %2970 = vmatprep.subr.mxu0 0.0
        %2971 = vmatpush1.msra.mxu0 %v2053
        %2972 = vmatprep.subr.mxu0 0.0
        %2973 = vmatpush1.msra.mxu0 %v2052
        %2974 = vmatprep.subr.mxu0 0.0
        %2975 = vmatpush1.msra.mxu0 %v2051
        %2976 = vmatprep.subr.mxu0 0.0
        %2977 = vmatpush1.msra.mxu0 %v2050
        %2978 = vmatprep.subr.mxu0 0.0
        %2979 = vmatpush1.msra.mxu0 %v2049
        %2980 = vmatprep.subr.mxu0 0.0
        %2981 = vmatpush1.msra.mxu0 %v2048
        %2982 = vmatprep.subr.mxu0 0.0
        %2983 = vmatpush1.msra.mxu0 %v2047
        %2984 = vmatprep.subr.mxu0 0.0
        %2985 = vmatpush1.msra.mxu0 %v2046
        %2986 = vmatprep.subr.mxu0 0.0
        %2987 = vmatpush1.msra.mxu0 %v2045
        %2988 = vmatprep.subr.mxu0 0.0
        %2989 = vmatpush1.msra.mxu0 %v2044
        %2990 = vmatprep.subr.mxu0 0.0
        %2991 = vmatpush1.msra.mxu0 %v2043
        %2992 = vmatprep.subr.mxu0 0.0
        %2993 = vmatpush1.msra.mxu0 %v2042
        %2994 = vmatprep.subr.mxu0 0.0
        %2995 = vmatpush1.msra.mxu0 %v2041
        %2996 = vmatprep.subr.mxu0 0.0
        %2997 = vmatpush2.msra.mxu0 0.0
        %2998 = vmatprep.subr.mxu0 0.0
        %2999 = vmatpush2.msra.mxu0 0.0
        %3000 = vmatprep.subr.mxu0 0.0
        %3001 = vmatpush2.msra.mxu0 0.0
        %3002 = vmatprep.subr.mxu0 0.0
        %3003 = vmatpush2.msra.mxu0 0.0
        %3004 = vmatprep.subr.mxu0 0.0
        %3005 = vmatpush2.msra.mxu0 0.0
        %3006 = vmatprep.subr.mxu0 0.0
        %3007 = vmatpush2.msra.mxu0 0.0
        %3008 = vmatprep.subr.mxu0 0.0
        %3009 = vmatpush2.msra.mxu0 0.0
        %3010 = vmatprep.subr.mxu0 0.0
        %3011 = vmatpush2.msra.mxu0 0.0
        %3012 = vmatprep.subr.mxu0 0.0
        %3013 = vmatpush2.msra.mxu0 0.0
        %3014 = vmatprep.subr.mxu0 0.0
        %3015 = vmatpush2.msra.mxu0 0.0
        %3016 = vmatprep.subr.mxu0 0.0
        %3017 = vmatpush2.msra.mxu0 0.0
        %3018 = vmatprep.subr.mxu0 0.0
        %3019 = vmatpush2.msra.mxu0 0.0
        %3020 = vmatprep.subr.mxu0 0.0
        %3021 = vmatpush2.msra.mxu0 0.0
        %3022 = vmatprep.subr.mxu0 0.0
        %3023 = vmatpush2.msra.mxu0 0.0
        %3024 = vmatprep.subr.mxu0 0.0
        %3025 = vmatpush2.msra.mxu0 0.0
        %3026 = vmatprep.subr.mxu0 0.0
        %3027 = vmatpush2.msra.mxu0 0.0
        %3028 = vmatprep.mubr.f32.mxu0 0.0
        %3029 = vmatmul.mubr.f32.gmra.mxu0 %v1633
        %v3030 = vpop.f32.mrf.mxu0
        %v3031 = vadd.f32 %v2806, %v3030
        %v3032 = vpop.f32.mrf.mxu0
        %3033 = vmatprep.mubr.f32.mxu0 0.0
        %3034 = vmatmul.mubr.f32.gmra.mxu0 %v1642
        %v3035 = vpop.f32.mrf.mxu0
        %v3036 = vadd.f32 %v2811, %v3035
        %v3037 = vpop.f32.mrf.mxu0
        %3038 = vmatprep.mubr.f32.mxu0 0.0
        %3039 = vmatmul.mubr.f32.gmra.mxu0 %v1651
        %v3040 = vpop.f32.mrf.mxu0
        %v3041 = vadd.f32 %v2816, %v3040
        %v3042 = vpop.f32.mrf.mxu0
        %3043 = vmatprep.mubr.f32.mxu0 0.0
        %3044 = vmatmul.mubr.f32.gmra.mxu0 %v1660
        %v3045 = vpop.f32.mrf.mxu0
        %v3046 = vadd.f32 %v2821, %v3045
        %v3047 = vpop.f32.mrf.mxu0
        %3048 = vmatprep.mubr.f32.mxu0 0.0
        %3049 = vmatmul.mubr.f32.gmra.mxu0 %v1669
        %v3050 = vpop.f32.mrf.mxu0
        %v3051 = vadd.f32 %v2826, %v3050
        %v3052 = vpop.f32.mrf.mxu0
        %3053 = vmatprep.mubr.f32.mxu0 0.0
        %3054 = vmatmul.mubr.f32.gmra.mxu0 %v1678
        %v3055 = vpop.f32.mrf.mxu0
        %v3056 = vadd.f32 %v2831, %v3055
        %v3057 = vpop.f32.mrf.mxu0
        %3058 = vmatprep.mubr.f32.mxu0 0.0
        %3059 = vmatmul.mubr.f32.gmra.mxu0 %v1687
        %v3060 = vpop.f32.mrf.mxu0
        %v3061 = vadd.f32 %v2836, %v3060
        %v3062 = vpop.f32.mrf.mxu0
        %3063 = vmatprep.mubr.f32.mxu0 0.0
        %3064 = vmatmul.mubr.f32.gmra.mxu0 %v1696
        %v3065 = vpop.f32.mrf.mxu0
        %v3066 = vadd.f32 %v2841, %v3065
        %v3067 = vpop.f32.mrf.mxu0
        %3068 = vmatprep.mubr.f32.mxu0 0.0
        %3069 = vmatmul.mubr.f32.gmra.mxu0 %v1705
        %v3070 = vpop.f32.mrf.mxu0
        %v3071 = vadd.f32 %v2846, %v3070
        %v3072 = vpop.f32.mrf.mxu0
        %3073 = vmatprep.mubr.f32.mxu0 0.0
        %3074 = vmatmul.mubr.f32.gmra.mxu0 %v1714
        %v3075 = vpop.f32.mrf.mxu0
        %v3076 = vadd.f32 %v2851, %v3075
        %v3077 = vpop.f32.mrf.mxu0
        %3078 = vmatprep.mubr.f32.mxu0 0.0
        %3079 = vmatmul.mubr.f32.gmra.mxu0 %v1723
        %v3080 = vpop.f32.mrf.mxu0
        %v3081 = vadd.f32 %v2856, %v3080
        %v3082 = vpop.f32.mrf.mxu0
        %3083 = vmatprep.mubr.f32.mxu0 0.0
        %3084 = vmatmul.mubr.f32.gmra.mxu0 %v1732
        %v3085 = vpop.f32.mrf.mxu0
        %v3086 = vadd.f32 %v2861, %v3085
        %v3087 = vpop.f32.mrf.mxu0
        %3088 = vmatprep.mubr.f32.mxu0 0.0
        %3089 = vmatmul.mubr.f32.gmra.mxu0 %v1741
        %v3090 = vpop.f32.mrf.mxu0
        %v3091 = vadd.f32 %v2866, %v3090
        %v3092 = vpop.f32.mrf.mxu0
        %3093 = vmatprep.mubr.f32.mxu0 0.0
        %3094 = vmatmul.mubr.f32.gmra.mxu0 %v1750
        %v3095 = vpop.f32.mrf.mxu0
        %v3096 = vadd.f32 %v2871, %v3095
        %v3097 = vpop.f32.mrf.mxu0
        %3098 = vmatprep.mubr.f32.mxu0 0.0
        %3099 = vmatmul.mubr.f32.gmra.mxu0 %v1759
        %v3100 = vpop.f32.mrf.mxu0
        %v3101 = vadd.f32 %v2876, %v3100
        %v3102 = vpop.f32.mrf.mxu0
        %3103 = vmatprep.mubr.f32.mxu0 0.0
        %3104 = vmatmul.mubr.f32.gmra.mxu0 %v1768
        %v3105 = vpop.f32.mrf.mxu0
        %v3106 = vadd.f32 %v2881, %v3105
        %v3107 = vpop.f32.mrf.mxu0
        %3108 = vmatprep.mubr.f32.mxu0 0.0
        %3109 = vmatmul.mubr.f32.gmra.mxu0 %v1777
        %v3110 = vpop.f32.mrf.mxu0
        %v3111 = vadd.f32 %v2886, %v3110
        %v3112 = vpop.f32.mrf.mxu0
        %3113 = vmatprep.mubr.f32.mxu0 0.0
        %3114 = vmatmul.mubr.f32.gmra.mxu0 %v1786
        %v3115 = vpop.f32.mrf.mxu0
        %v3116 = vadd.f32 %v2891, %v3115
        %v3117 = vpop.f32.mrf.mxu0
        %3118 = vmatprep.mubr.f32.mxu0 0.0
        %3119 = vmatmul.mubr.f32.gmra.mxu0 %v1795
        %v3120 = vpop.f32.mrf.mxu0
        %v3121 = vadd.f32 %v2896, %v3120
        %v3122 = vpop.f32.mrf.mxu0
        %3123 = vmatprep.mubr.f32.mxu0 0.0
        %3124 = vmatmul.mubr.f32.gmra.mxu0 %v1804
        %v3125 = vpop.f32.mrf.mxu0
        %v3126 = vadd.f32 %v2901, %v3125
        %v3127 = vpop.f32.mrf.mxu0
        %3128 = vmatprep.mubr.f32.mxu0 0.0
        %3129 = vmatmul.mubr.f32.gmra.mxu0 %v1813
        %v3130 = vpop.f32.mrf.mxu0
        %v3131 = vadd.f32 %v2906, %v3130
        %v3132 = vpop.f32.mrf.mxu0
        %3133 = vmatprep.mubr.f32.mxu0 0.0
        %3134 = vmatmul.mubr.f32.gmra.mxu0 %v1822
        %v3135 = vpop.f32.mrf.mxu0
        %v3136 = vadd.f32 %v2911, %v3135
        %v3137 = vpop.f32.mrf.mxu0
        %3138 = vmatprep.mubr.f32.mxu0 0.0
        %3139 = vmatmul.mubr.f32.gmra.mxu0 %v1831
        %v3140 = vpop.f32.mrf.mxu0
        %v3141 = vadd.f32 %v2916, %v3140
        %v3142 = vpop.f32.mrf.mxu0
        %3143 = vmatprep.mubr.f32.mxu0 0.0
        %3144 = vmatmul.mubr.f32.gmra.mxu0 %v1840
        %v3145 = vpop.f32.mrf.mxu0
        %v3146 = vadd.f32 %v2921, %v3145
        %v3147 = vpop.f32.mrf.mxu0
        %3148 = vmatprep.mubr.f32.mxu0 0.0
        %3149 = vmatmul.mubr.f32.gmra.mxu0 %v1849
        %v3150 = vpop.f32.mrf.mxu0
        %v3151 = vadd.f32 %v2926, %v3150
        %v3152 = vpop.f32.mrf.mxu0
        %3153 = vmatprep.mubr.f32.mxu0 0.0
        %3154 = vmatmul.mubr.f32.gmra.mxu0 %v1858
        %v3155 = vpop.f32.mrf.mxu0
        %v3156 = vadd.f32 %v2931, %v3155
        %v3157 = vpop.f32.mrf.mxu0
        %3158 = vmatprep.mubr.f32.mxu0 0.0
        %3159 = vmatmul.mubr.f32.gmra.mxu0 %v1867
        %v3160 = vpop.f32.mrf.mxu0
        %v3161 = vadd.f32 %v2936, %v3160
        %v3162 = vpop.f32.mrf.mxu0
        %3163 = vmatprep.mubr.f32.mxu0 0.0
        %3164 = vmatmul.mubr.f32.gmra.mxu0 %v1876
        %v3165 = vpop.f32.mrf.mxu0
        %v3166 = vadd.f32 %v2941, %v3165
        %v3167 = vpop.f32.mrf.mxu0
        %3168 = vmatprep.mubr.f32.mxu0 0.0
        %3169 = vmatmul.mubr.f32.gmra.mxu0 %v1885
        %v3170 = vpop.f32.mrf.mxu0
        %v3171 = vadd.f32 %v2946, %v3170
        %v3172 = vpop.f32.mrf.mxu0
        %3173 = vmatprep.mubr.f32.mxu0 0.0
        %3174 = vmatmul.mubr.f32.gmra.mxu0 %v1894
        %v3175 = vpop.f32.mrf.mxu0
        %v3176 = vadd.f32 %v2951, %v3175
        %v3177 = vpop.f32.mrf.mxu0
        %3178 = vmatprep.mubr.f32.mxu0 0.0
        %3179 = vmatmul.mubr.f32.gmra.mxu0 %v1903
        %v3180 = vpop.f32.mrf.mxu0
        %v3181 = vadd.f32 %v2956, %v3180
        %v3182 = vpop.f32.mrf.mxu0
        %3183 = vmatprep.mubr.f32.mxu0 0.0
        %3184 = vmatmul.mubr.f32.gmra.mxu0 %v1912
        %v3185 = vpop.f32.mrf.mxu0
        %v3186 = vadd.f32 %v2961, %v3185
        %v3187 = vpop.f32.mrf.mxu0
        %3188 = vdwg.mxu0
        %v3189 = vmin.f32 %v3031, 20.0
        %v3190 = vmin.f32 %v3036, 20.0
        %v3191 = vmin.f32 %v3041, 20.0
        %v3192 = vmin.f32 %v3046, 20.0
        %v3193 = vmin.f32 %v3051, 20.0
        %v3194 = vmin.f32 %v3056, 20.0
        %v3195 = vmin.f32 %v3061, 20.0
        %v3196 = vmin.f32 %v3066, 20.0
        %v3197 = vmin.f32 %v3071, 20.0
        %v3198 = vmin.f32 %v3076, 20.0
        %v3199 = vmin.f32 %v3081, 20.0
        %v3200 = vmin.f32 %v3086, 20.0
        %v3201 = vmin.f32 %v3091, 20.0
        %v3202 = vmin.f32 %v3096, 20.0
        %v3203 = vmin.f32 %v3101, 20.0
        %v3204 = vmin.f32 %v3106, 20.0
        %v3205 = vmin.f32 %v3111, 20.0
        %v3206 = vmin.f32 %v3116, 20.0
        %v3207 = vmin.f32 %v3121, 20.0
        %v3208 = vmin.f32 %v3126, 20.0
        %v3209 = vmin.f32 %v3131, 20.0
        %v3210 = vmin.f32 %v3136, 20.0
        %v3211 = vmin.f32 %v3141, 20.0
        %v3212 = vmin.f32 %v3146, 20.0
        %v3213 = vmin.f32 %v3151, 20.0
        %v3214 = vmin.f32 %v3156, 20.0
        %v3215 = vmin.f32 %v3161, 20.0
        %v3216 = vmin.f32 %v3166, 20.0
        %v3217 = vmin.f32 %v3171, 20.0
        %v3218 = vmin.f32 %v3176, 20.0
        %v3219 = vmin.f32 %v3181, 20.0
        %v3220 = vmin.f32 %v3186, 20.0
        %v3221 = vmul.f32 %v3189, 1.442695
        %v3222 = vpow.pop %v3221
        %v3223 = vmul.f32 %v3190, 1.442695
        %v3224 = vpow.pop %v3223
        %v3225 = vmul.f32 %v3191, 1.442695
        %v3226 = vpow.pop %v3225
        %v3227 = vmul.f32 %v3192, 1.442695
        %v3228 = vpow.pop %v3227
        %v3229 = vmul.f32 %v3193, 1.442695
        %v3230 = vpow.pop %v3229
        %v3231 = vmul.f32 %v3194, 1.442695
        %v3232 = vpow.pop %v3231
        %v3233 = vmul.f32 %v3195, 1.442695
        %v3234 = vpow.pop %v3233
        %v3235 = vmul.f32 %v3196, 1.442695
        %v3236 = vpow.pop %v3235
        %v3237 = vmul.f32 %v3197, 1.442695
        %v3238 = vpow.pop %v3237
        %v3239 = vmul.f32 %v3198, 1.442695
        %v3240 = vpow.pop %v3239
        %v3241 = vmul.f32 %v3199, 1.442695
        %v3242 = vpow.pop %v3241
        %v3243 = vmul.f32 %v3200, 1.442695
        %v3244 = vpow.pop %v3243
        %v3245 = vmul.f32 %v3201, 1.442695
        %v3246 = vpow.pop %v3245
        %v3247 = vmul.f32 %v3202, 1.442695
        %v3248 = vpow.pop %v3247
        %v3249 = vmul.f32 %v3203, 1.442695
        %v3250 = vpow.pop %v3249
        %v3251 = vmul.f32 %v3204, 1.442695
        %v3252 = vpow.pop %v3251
        %v3253 = vmul.f32 %v3205, 1.442695
        %v3254 = vpow.pop %v3253
        %v3255 = vmul.f32 %v3206, 1.442695
        %v3256 = vpow.pop %v3255
        %v3257 = vmul.f32 %v3207, 1.442695
        %v3258 = vpow.pop %v3257
        %v3259 = vmul.f32 %v3208, 1.442695
        %v3260 = vpow.pop %v3259
        %v3261 = vmul.f32 %v3209, 1.442695
        %v3262 = vpow.pop %v3261
        %v3263 = vmul.f32 %v3210, 1.442695
        %v3264 = vpow.pop %v3263
        %v3265 = vmul.f32 %v3211, 1.442695
        %v3266 = vpow.pop %v3265
        %v3267 = vmul.f32 %v3212, 1.442695
        %v3268 = vpow.pop %v3267
        %v3269 = vmul.f32 %v3213, 1.442695
        %v3270 = vpow.pop %v3269
        %v3271 = vmul.f32 %v3214, 1.442695
        %v3272 = vpow.pop %v3271
        %v3273 = vmul.f32 %v3215, 1.442695
        %v3274 = vpow.pop %v3273
        %v3275 = vmul.f32 %v3216, 1.442695
        %v3276 = vpow.pop %v3275
        %v3277 = vmul.f32 %v3217, 1.442695
        %v3278 = vpow.pop %v3277
        %v3279 = vmul.f32 %v3218, 1.442695
        %v3280 = vpow.pop %v3279
        %v3281 = vmul.f32 %v3219, 1.442695
        %v3282 = vpow.pop %v3281
        %v3283 = vmul.f32 %v3220, 1.442695
        %v3284 = vpow.pop %v3283
        %v3285 = vadd.f32 %v3222, 1.0
        %v3286 = vadd.f32 %v3224, 1.0
        %v3287 = vadd.f32 %v3226, 1.0
        %v3288 = vadd.f32 %v3228, 1.0
        %v3289 = vadd.f32 %v3230, 1.0
        %v3290 = vadd.f32 %v3232, 1.0
        %v3291 = vadd.f32 %v3234, 1.0
        %v3292 = vadd.f32 %v3236, 1.0
        %v3293 = vadd.f32 %v3238, 1.0
        %v3294 = vadd.f32 %v3240, 1.0
        %v3295 = vadd.f32 %v3242, 1.0
        %v3296 = vadd.f32 %v3244, 1.0
        %v3297 = vadd.f32 %v3246, 1.0
        %v3298 = vadd.f32 %v3248, 1.0
        %v3299 = vadd.f32 %v3250, 1.0
        %v3300 = vadd.f32 %v3252, 1.0
        %v3301 = vadd.f32 %v3254, 1.0
        %v3302 = vadd.f32 %v3256, 1.0
        %v3303 = vadd.f32 %v3258, 1.0
        %v3304 = vadd.f32 %v3260, 1.0
        %v3305 = vadd.f32 %v3262, 1.0
        %v3306 = vadd.f32 %v3264, 1.0
        %v3307 = vadd.f32 %v3266, 1.0
        %v3308 = vadd.f32 %v3268, 1.0
        %v3309 = vadd.f32 %v3270, 1.0
        %v3310 = vadd.f32 %v3272, 1.0
        %v3311 = vadd.f32 %v3274, 1.0
        %v3312 = vadd.f32 %v3276, 1.0
        %v3313 = vadd.f32 %v3278, 1.0
        %v3314 = vadd.f32 %v3280, 1.0
        %v3315 = vadd.f32 %v3282, 1.0
        %v3316 = vadd.f32 %v3284, 1.0
        %v3317 = vmul.f32 %v3285, %v3285
        %v3318 = vmul.f32 %v3286, %v3286
        %v3319 = vmul.f32 %v3287, %v3287
        %v3320 = vmul.f32 %v3288, %v3288
        %v3321 = vmul.f32 %v3289, %v3289
        %v3322 = vmul.f32 %v3290, %v3290
        %v3323 = vmul.f32 %v3291, %v3291
        %v3324 = vmul.f32 %v3292, %v3292
        %v3325 = vmul.f32 %v3293, %v3293
        %v3326 = vmul.f32 %v3294, %v3294
        %v3327 = vmul.f32 %v3295, %v3295
        %v3328 = vmul.f32 %v3296, %v3296
        %v3329 = vmul.f32 %v3297, %v3297
        %v3330 = vmul.f32 %v3298, %v3298
        %v3331 = vmul.f32 %v3299, %v3299
        %v3332 = vmul.f32 %v3300, %v3300
        %v3333 = vmul.f32 %v3301, %v3301
        %v3334 = vmul.f32 %v3302, %v3302
        %v3335 = vmul.f32 %v3303, %v3303
        %v3336 = vmul.f32 %v3304, %v3304
        %v3337 = vmul.f32 %v3305, %v3305
        %v3338 = vmul.f32 %v3306, %v3306
        %v3339 = vmul.f32 %v3307, %v3307
        %v3340 = vmul.f32 %v3308, %v3308
        %v3341 = vmul.f32 %v3309, %v3309
        %v3342 = vmul.f32 %v3310, %v3310
        %v3343 = vmul.f32 %v3311, %v3311
        %v3344 = vmul.f32 %v3312, %v3312
        %v3345 = vmul.f32 %v3313, %v3313
        %v3346 = vmul.f32 %v3314, %v3314
        %v3347 = vmul.f32 %v3315, %v3315
        %v3348 = vmul.f32 %v3316, %v3316
        %v3349 = vsub.f32 %v3317, 1.0
        %v3350 = vsub.f32 %v3318, 1.0
        %v3351 = vsub.f32 %v3319, 1.0
        %v3352 = vsub.f32 %v3320, 1.0
        %v3353 = vsub.f32 %v3321, 1.0
        %v3354 = vsub.f32 %v3322, 1.0
        %v3355 = vsub.f32 %v3323, 1.0
        %v3356 = vsub.f32 %v3324, 1.0
        %v3357 = vsub.f32 %v3325, 1.0
        %v3358 = vsub.f32 %v3326, 1.0
        %v3359 = vsub.f32 %v3327, 1.0
        %v3360 = vsub.f32 %v3328, 1.0
        %v3361 = vsub.f32 %v3329, 1.0
        %v3362 = vsub.f32 %v3330, 1.0
        %v3363 = vsub.f32 %v3331, 1.0
        %v3364 = vsub.f32 %v3332, 1.0
        %v3365 = vsub.f32 %v3333, 1.0
        %v3366 = vsub.f32 %v3334, 1.0
        %v3367 = vsub.f32 %v3335, 1.0
        %v3368 = vsub.f32 %v3336, 1.0
        %v3369 = vsub.f32 %v3337, 1.0
        %v3370 = vsub.f32 %v3338, 1.0
        %v3371 = vsub.f32 %v3339, 1.0
        %v3372 = vsub.f32 %v3340, 1.0
        %v3373 = vsub.f32 %v3341, 1.0
        %v3374 = vsub.f32 %v3342, 1.0
        %v3375 = vsub.f32 %v3343, 1.0
        %v3376 = vsub.f32 %v3344, 1.0
        %v3377 = vsub.f32 %v3345, 1.0
        %v3378 = vsub.f32 %v3346, 1.0
        %v3379 = vsub.f32 %v3347, 1.0
        %v3380 = vsub.f32 %v3348, 1.0
        %v3381 = vmul.f32 %v3031, %v3349
        %v3382 = vmul.f32 %v3036, %v3350
        %v3383 = vmul.f32 %v3041, %v3351
        %v3384 = vmul.f32 %v3046, %v3352
        %v3385 = vmul.f32 %v3051, %v3353
        %v3386 = vmul.f32 %v3056, %v3354
        %v3387 = vmul.f32 %v3061, %v3355
        %v3388 = vmul.f32 %v3066, %v3356
        %v3389 = vmul.f32 %v3071, %v3357
        %v3390 = vmul.f32 %v3076, %v3358
        %v3391 = vmul.f32 %v3081, %v3359
        %v3392 = vmul.f32 %v3086, %v3360
        %v3393 = vmul.f32 %v3091, %v3361
        %v3394 = vmul.f32 %v3096, %v3362
        %v3395 = vmul.f32 %v3101, %v3363
        %v3396 = vmul.f32 %v3106, %v3364
        %v3397 = vmul.f32 %v3111, %v3365
        %v3398 = vmul.f32 %v3116, %v3366
        %v3399 = vmul.f32 %v3121, %v3367
        %v3400 = vmul.f32 %v3126, %v3368
        %v3401 = vmul.f32 %v3131, %v3369
        %v3402 = vmul.f32 %v3136, %v3370
        %v3403 = vmul.f32 %v3141, %v3371
        %v3404 = vmul.f32 %v3146, %v3372
        %v3405 = vmul.f32 %v3151, %v3373
        %v3406 = vmul.f32 %v3156, %v3374
        %v3407 = vmul.f32 %v3161, %v3375
        %v3408 = vmul.f32 %v3166, %v3376
        %v3409 = vmul.f32 %v3171, %v3377
        %v3410 = vmul.f32 %v3176, %v3378
        %v3411 = vmul.f32 %v3181, %v3379
        %v3412 = vmul.f32 %v3186, %v3380
        %v3413 = vadd.f32 %v3317, 1.0
        %v3414 = vadd.f32 %v3318, 1.0
        %v3415 = vadd.f32 %v3319, 1.0
        %v3416 = vadd.f32 %v3320, 1.0
        %v3417 = vadd.f32 %v3321, 1.0
        %v3418 = vadd.f32 %v3322, 1.0
        %v3419 = vadd.f32 %v3323, 1.0
        %v3420 = vadd.f32 %v3324, 1.0
        %v3421 = vadd.f32 %v3325, 1.0
        %v3422 = vadd.f32 %v3326, 1.0
        %v3423 = vadd.f32 %v3327, 1.0
        %v3424 = vadd.f32 %v3328, 1.0
        %v3425 = vadd.f32 %v3329, 1.0
        %v3426 = vadd.f32 %v3330, 1.0
        %v3427 = vadd.f32 %v3331, 1.0
        %v3428 = vadd.f32 %v3332, 1.0
        %v3429 = vadd.f32 %v3333, 1.0
        %v3430 = vadd.f32 %v3334, 1.0
        %v3431 = vadd.f32 %v3335, 1.0
        %v3432 = vadd.f32 %v3336, 1.0
        %v3433 = vadd.f32 %v3337, 1.0
        %v3434 = vadd.f32 %v3338, 1.0
        %v3435 = vadd.f32 %v3339, 1.0
        %v3436 = vadd.f32 %v3340, 1.0
        %v3437 = vadd.f32 %v3341, 1.0
        %v3438 = vadd.f32 %v3342, 1.0
        %v3439 = vadd.f32 %v3343, 1.0
        %v3440 = vadd.f32 %v3344, 1.0
        %v3441 = vadd.f32 %v3345, 1.0
        %v3442 = vadd.f32 %v3346, 1.0
        %v3443 = vadd.f32 %v3347, 1.0
        %v3444 = vadd.f32 %v3348, 1.0
        %v3445 = vrcp.pop %v3413
        %v3446 = vrcp.pop %v3414
        %v3447 = vrcp.pop %v3415
        %v3448 = vrcp.pop %v3416
        %v3449 = vrcp.pop %v3417
        %v3450 = vrcp.pop %v3418
        %v3451 = vrcp.pop %v3419
        %v3452 = vrcp.pop %v3420
        %v3453 = vrcp.pop %v3421
        %v3454 = vrcp.pop %v3422
        %v3455 = vrcp.pop %v3423
        %v3456 = vrcp.pop %v3424
        %v3457 = vrcp.pop %v3425
        %v3458 = vrcp.pop %v3426
        %v3459 = vrcp.pop %v3427
        %v3460 = vrcp.pop %v3428
        %v3461 = vrcp.pop %v3429
        %v3462 = vrcp.pop %v3430
        %v3463 = vrcp.pop %v3431
        %v3464 = vrcp.pop %v3432
        %v3465 = vrcp.pop %v3433
        %v3466 = vrcp.pop %v3434
        %v3467 = vrcp.pop %v3435
        %v3468 = vrcp.pop %v3436
        %v3469 = vrcp.pop %v3437
        %v3470 = vrcp.pop %v3438
        %v3471 = vrcp.pop %v3439
        %v3472 = vrcp.pop %v3440
        %v3473 = vrcp.pop %v3441
        %v3474 = vrcp.pop %v3442
        %v3475 = vrcp.pop %v3443
        %v3476 = vrcp.pop %v3444
        %v3477 = vmul.f32 %v3381, %v3445
        %v3478 = vmul.f32 %v3382, %v3446
        %v3479 = vmul.f32 %v3383, %v3447
        %v3480 = vmul.f32 %v3384, %v3448
        %v3481 = vmul.f32 %v3385, %v3449
        %v3482 = vmul.f32 %v3386, %v3450
        %v3483 = vmul.f32 %v3387, %v3451
        %v3484 = vmul.f32 %v3388, %v3452
        %v3485 = vmul.f32 %v3389, %v3453
        %v3486 = vmul.f32 %v3390, %v3454
        %v3487 = vmul.f32 %v3391, %v3455
        %v3488 = vmul.f32 %v3392, %v3456
        %v3489 = vmul.f32 %v3393, %v3457
        %v3490 = vmul.f32 %v3394, %v3458
        %v3491 = vmul.f32 %v3395, %v3459
        %v3492 = vmul.f32 %v3396, %v3460
        %v3493 = vmul.f32 %v3397, %v3461
        %v3494 = vmul.f32 %v3398, %v3462
        %v3495 = vmul.f32 %v3399, %v3463
        %v3496 = vmul.f32 %v3400, %v3464
        %v3497 = vmul.f32 %v3401, %v3465
        %v3498 = vmul.f32 %v3402, %v3466
        %v3499 = vmul.f32 %v3403, %v3467
        %v3500 = vmul.f32 %v3404, %v3468
        %v3501 = vmul.f32 %v3405, %v3469
        %v3502 = vmul.f32 %v3406, %v3470
        %v3503 = vmul.f32 %v3407, %v3471
        %v3504 = vmul.f32 %v3408, %v3472
        %v3505 = vmul.f32 %v3409, %v3473
        %v3506 = vmul.f32 %v3410, %v3474
        %v3507 = vmul.f32 %v3411, %v3475
        %v3508 = vmul.f32 %v3412, %v3476
        %vm3509 = vcmp.gt.f32.partialorder %v3031, 20.0
        %vm3510 = vcmp.gt.f32.partialorder %v3036, 20.0
        %vm3511 = vcmp.gt.f32.partialorder %v3041, 20.0
        %vm3512 = vcmp.gt.f32.partialorder %v3046, 20.0
        %vm3513 = vcmp.gt.f32.partialorder %v3051, 20.0
        %vm3514 = vcmp.gt.f32.partialorder %v3056, 20.0
        %vm3515 = vcmp.gt.f32.partialorder %v3061, 20.0
        %vm3516 = vcmp.gt.f32.partialorder %v3066, 20.0
        %vm3517 = vcmp.gt.f32.partialorder %v3071, 20.0
        %vm3518 = vcmp.gt.f32.partialorder %v3076, 20.0
        %vm3519 = vcmp.gt.f32.partialorder %v3081, 20.0
        %vm3520 = vcmp.gt.f32.partialorder %v3086, 20.0
        %vm3521 = vcmp.gt.f32.partialorder %v3091, 20.0
        %vm3522 = vcmp.gt.f32.partialorder %v3096, 20.0
        %vm3523 = vcmp.gt.f32.partialorder %v3101, 20.0
        %vm3524 = vcmp.gt.f32.partialorder %v3106, 20.0
        %vm3525 = vcmp.gt.f32.partialorder %v3111, 20.0
        %vm3526 = vcmp.gt.f32.partialorder %v3116, 20.0
        %vm3527 = vcmp.gt.f32.partialorder %v3121, 20.0
        %vm3528 = vcmp.gt.f32.partialorder %v3126, 20.0
        %vm3529 = vcmp.gt.f32.partialorder %v3131, 20.0
        %vm3530 = vcmp.gt.f32.partialorder %v3136, 20.0
        %vm3531 = vcmp.gt.f32.partialorder %v3141, 20.0
        %vm3532 = vcmp.gt.f32.partialorder %v3146, 20.0
        %vm3533 = vcmp.gt.f32.partialorder %v3151, 20.0
        %vm3534 = vcmp.gt.f32.partialorder %v3156, 20.0
        %vm3535 = vcmp.gt.f32.partialorder %v3161, 20.0
        %vm3536 = vcmp.gt.f32.partialorder %v3166, 20.0
        %vm3537 = vcmp.gt.f32.partialorder %v3171, 20.0
        %vm3538 = vcmp.gt.f32.partialorder %v3176, 20.0
        %vm3539 = vcmp.gt.f32.partialorder %v3181, 20.0
        %vm3540 = vcmp.gt.f32.partialorder %v3186, 20.0
        %v3541 = vsel %vm3509, %v3031, %v3477
        %v3542 = vsel %vm3510, %v3036, %v3478
        %v3543 = vsel %vm3511, %v3041, %v3479
        %v3544 = vsel %vm3512, %v3046, %v3480
        %v3545 = vsel %vm3513, %v3051, %v3481
        %v3546 = vsel %vm3514, %v3056, %v3482
        %v3547 = vsel %vm3515, %v3061, %v3483
        %v3548 = vsel %vm3516, %v3066, %v3484
        %v3549 = vsel %vm3517, %v3071, %v3485
        %v3550 = vsel %vm3518, %v3076, %v3486
        %v3551 = vsel %vm3519, %v3081, %v3487
        %v3552 = vsel %vm3520, %v3086, %v3488
        %v3553 = vsel %vm3521, %v3091, %v3489
        %v3554 = vsel %vm3522, %v3096, %v3490
        %v3555 = vsel %vm3523, %v3101, %v3491
        %v3556 = vsel %vm3524, %v3106, %v3492
        %v3557 = vsel %vm3525, %v3111, %v3493
        %v3558 = vsel %vm3526, %v3116, %v3494
        %v3559 = vsel %vm3527, %v3121, %v3495
        %v3560 = vsel %vm3528, %v3126, %v3496
        %v3561 = vsel %vm3529, %v3131, %v3497
        %v3562 = vsel %vm3530, %v3136, %v3498
        %v3563 = vsel %vm3531, %v3141, %v3499
        %v3564 = vsel %vm3532, %v3146, %v3500
        %v3565 = vsel %vm3533, %v3151, %v3501
        %v3566 = vsel %vm3534, %v3156, %v3502
        %v3567 = vsel %vm3535, %v3161, %v3503
        %v3568 = vsel %vm3536, %v3166, %v3504
        %v3569 = vsel %vm3537, %v3171, %v3505
        %v3570 = vsel %vm3538, %v3176, %v3506
        %v3571 = vsel %vm3539, %v3181, %v3507
        %v3572 = vsel %vm3540, %v3186, %v3508
        %v3573 = vadd.f32 %v3541, %v223
        %v3574 = vadd.f32 %v3542, %v224
        %v3575 = vadd.f32 %v3543, %v225
        %v3576 = vadd.f32 %v3544, %v226
        %v3577 = vadd.f32 %v3545, %v227
        %v3578 = vadd.f32 %v3546, %v228
        %v3579 = vadd.f32 %v3547, %v229
        %v3580 = vadd.f32 %v3548, %v230
        %v3581 = vadd.f32 %v3549, %v231
        %v3582 = vadd.f32 %v3550, %v232
        %v3583 = vadd.f32 %v3551, %v233
        %v3584 = vadd.f32 %v3552, %v234
        %v3585 = vadd.f32 %v3553, %v235
        %v3586 = vadd.f32 %v3554, %v236
        %v3587 = vadd.f32 %v3555, %v237
        %v3588 = vadd.f32 %v3556, %v238
        %v3589 = vadd.f32 %v3557, %v239
        %v3590 = vadd.f32 %v3558, %v240
        %v3591 = vadd.f32 %v3559, %v241
        %v3592 = vadd.f32 %v3560, %v242
        %v3593 = vadd.f32 %v3561, %v243
        %v3594 = vadd.f32 %v3562, %v244
        %v3595 = vadd.f32 %v3563, %v245
        %v3596 = vadd.f32 %v3564, %v246
        %v3597 = vadd.f32 %v3565, %v247
        %v3598 = vadd.f32 %v3566, %v248
        %v3599 = vadd.f32 %v3567, %v249
        %v3600 = vadd.f32 %v3568, %v250
        %v3601 = vadd.f32 %v3569, %v251
        %v3602 = vadd.f32 %v3570, %v252
        %v3603 = vadd.f32 %v3571, %v253
        %v3604 = vadd.f32 %v3572, %v254
        %3605 = vst.msk [vmem:[%s217] sm:$0xff] %vm270, %v3573
        %3606 = vst.msk [vmem:[%s217 + $0x8] sm:$0xff] %vm270, %v3574
        %3607 = vst.msk [vmem:[%s217 + $0x10] sm:$0xff] %vm270, %v3575
        %3608 = vst.msk [vmem:[%s217 + $0x18] sm:$0xff] %vm270, %v3576
        %3609 = vst.msk [vmem:[%s217 + $0x20] sm:$0xff] %vm270, %v3577
        %3610 = vst.msk [vmem:[%s217 + $0x28] sm:$0xff] %vm270, %v3578
        %3611 = vst.msk [vmem:[%s217 + $0x30] sm:$0xff] %vm270, %v3579
        %3612 = vst.msk [vmem:[%s217 + $0x38] sm:$0xff] %vm270, %v3580
        %3613 = vst.msk [vmem:[%s217 + $0x40] sm:$0xff] %vm270, %v3581
        %3614 = vst.msk [vmem:[%s217 + $0x48] sm:$0xff] %vm270, %v3582
        %3615 = vst.msk [vmem:[%s217 + $0x50] sm:$0xff] %vm270, %v3583
        %3616 = vst.msk [vmem:[%s217 + $0x58] sm:$0xff] %vm270, %v3584
        %3617 = vst.msk [vmem:[%s217 + $0x60] sm:$0xff] %vm270, %v3585
        %3618 = vst.msk [vmem:[%s217 + $0x68] sm:$0xff] %vm270, %v3586
        %3619 = vst.msk [vmem:[%s217 + $0x70] sm:$0xff] %vm270, %v3587
        %3620 = vst.msk [vmem:[%s217 + $0x78] sm:$0xff] %vm270, %v3588
        %3621 = vst.msk [vmem:[%s217 + $0x80] sm:$0xff] %vm270, %v3589
        %3622 = vst.msk [vmem:[%s217 + $0x88] sm:$0xff] %vm270, %v3590
        %3623 = vst.msk [vmem:[%s217 + $0x90] sm:$0xff] %vm270, %v3591
        %3624 = vst.msk [vmem:[%s217 + $0x98] sm:$0xff] %vm270, %v3592
        %3625 = vst.msk [vmem:[%s217 + $0xa0] sm:$0xff] %vm270, %v3593
        %3626 = vst.msk [vmem:[%s217 + $0xa8] sm:$0xff] %vm270, %v3594
        %3627 = vst.msk [vmem:[%s217 + $0xb0] sm:$0xff] %vm270, %v3595
        %3628 = vst.msk [vmem:[%s217 + $0xb8] sm:$0xff] %vm270, %v3596
        %3629 = vst.msk [vmem:[%s217 + $0xc0] sm:$0xff] %vm270, %v3597
        %3630 = vst.msk [vmem:[%s217 + $0xc8] sm:$0xff] %vm270, %v3598
        %3631 = vst.msk [vmem:[%s217 + $0xd0] sm:$0xff] %vm270, %v3599
        %3632 = vst.msk [vmem:[%s217 + $0xd8] sm:$0xff] %vm270, %v3600
        %3633 = vst.msk [vmem:[%s217 + $0xe0] sm:$0xff] %vm270, %v3601
        %3634 = vst.msk [vmem:[%s217 + $0xe8] sm:$0xff] %vm270, %v3602
        %3635 = vst.msk [vmem:[%s217 + $0xf0] sm:$0xff] %vm270, %v3603
        %3636 = vst.msk [vmem:[%s217 + $0xf8] sm:$0xff] %vm270, %v3604
        %s3637 = sand.u32 %s137, 1
        %s3638 = scalar_lea.sflag [#allocation5], %s3637
        %s3639 = sand.u32 %s137, 1
        %s3640 = smul.addr %s3639, 256
        %s3641 = scalar_lea.vmem [#allocation4], %s3640
        // Predicated region
        $region41: #{tpu_custom_call.1} parent=39 // pred_check
          %p3642 = pneg %p147
        $region42: #{tpu_custom_call.1} parent=39 // pred_check_branch
          %3644 = sbr.rel (%p3642) target = $region44
        $region43: #{tpu_custom_call.1} parent=39 // pred_region
          %s3646 = ssub.s32 4096, 4096
          %3647 = vsyncadd %s3638, %s3646
          %s3648 = smul.addr %s19, 32
          %s3649 = smul.addr %s3648, 128
          %s3650 = scalar_lea.hbm %s5, %s3649
          %s3651 = sshll.u32 %s3641, 4
          %s3652 = int_to_ptr.vmem [resolvable:$true] %s3651
          %3657 = dma.vmem_to_hbm [thread:$0]  %s3652, 4096, %s3650, %s3638, 128, 128, 8
        $region44: #{tpu_custom_call.1} parent=39 // pred_fallthru
          _
      $region40: #{tpu_custom_call.1} parent=5 // pred_fallthru
        _
      %p3658 = scmp.le.s32.totalorder 2, %s14
      // Predicated region
      $region45: #{tpu_custom_call.1} parent=5 // pred_check
        %p3659 = pneg %p3658
      $region46: #{tpu_custom_call.1} parent=5 // pred_check_branch
        %3661 = sbr.rel (%p3659) target = $region48
      $region47: #{tpu_custom_call.1} parent=5 // pred_region
        %s3662 = ssub.s32 %s14, 2
        // Predicated region
        $region49: #{tpu_custom_call.1} parent=47 // pred_check
          %p3663 = pneg %p153
        $region50: #{tpu_custom_call.1} parent=47 // pred_check_branch
          %3665 = sbr.rel (%p3663) target = $region52
        $region51: #{tpu_custom_call.1} parent=47 // pred_region
          %s3666 = sand.u32 %s138, 1
          %s3667 = scalar_lea.sflag [#allocation5], %s3666
          %s3668 = sand.u32 %s138, 1
          %s3669 = smul.addr %s3668, 256
          %s3670 = scalar_lea.vmem [#allocation4], %s3669
          %3671 = dma.done %s3667, 4096
        $region52: #{tpu_custom_call.1} parent=47 // pred_fallthru
          _
      $region48: #{tpu_custom_call.1} parent=5 // pred_fallthru
        _
    $region6: #{tpu_custom_call.1} parent=1 // loop_footer
      %s18 = sadd.s32 1, %s14
    $region7: #{tpu_custom_call.1} parent=1 // loop_footer_branch
      %13 = sbr.rel target = $region3
    $region8: #{tpu_custom_call.1} parent=1 // loop_exit
      _
    %3672 = vsyncpa [#allocation5], 1
    %s3673 = scalar_lea.sflag [#allocation5], 1
    %3674 = vsyncpa %s3673, 1

</llo_original>
